<compile_context>
chip_gen: v6e
topology: v6e:2x2x1
jax: 0.10.0
libtpu: 0.0.40
codegen_flags: <defaults>
</compile_context>

<pallas_src>
import functools

import jax
import jax.numpy as jnp
from jax.experimental import pallas as pl
from jax.experimental.pallas import tpu as pltpu

EPS = 1e-6          # LayerNormEPS6
_NEG_INF = -1e30    # additive softmax mask for padded key columns


# ----------------------------------------------------------------------------- kernel helpers


def _layernorm(x, w, b):
    """LayerNorm over last axis, eps=1e-6 (matches LayerNormEPS6). Stats in f32."""
    mu = jnp.mean(x, axis=-1, keepdims=True)
    var = jnp.mean(jnp.square(x - mu), axis=-1, keepdims=True)
    return (x - mu) * jax.lax.rsqrt(var + EPS) * w + b


# ----------------------------------------------------------------------------- fused block kernel


def transformer_block_kernel(
        tok_tile_ref, tok_full_ref,
        ln1_w_ref, ln1_b_ref,
        qw_ref, qb_ref, kw_ref, kb_ref, vw_ref, vb_ref,
        pw_ref, pb_ref, g1_ref,
        ln2_w_ref, ln2_b_ref,
        f1w_ref, f1b_ref, f2w_ref, f2b_ref, g2_ref,
        *rest, num_heads, n_true, fuse_outnorm):
    """One pre-norm ViT block (DINOv2 style, LayerScale) for one (batch, query-tile) grid cell.

    Grid = (B, T).  K/V of *all* tokens are projected into bf16 VMEM scratch at t == 0 and
    reused for every query tile of that batch element.  If fuse_outnorm, the stage-output
    LayerNorm is emitted as a second output (no separate memory-bound pallas_call).
    """
    if fuse_outnorm:
        on_w_ref, on_b_ref, out_ref, stage_ref, k_scr, v_scr = rest
    else:
        out_ref, k_scr, v_scr = rest
        on_w_ref = on_b_ref = stage_ref = None

    t = pl.program_id(1)
    n_pad = tok_full_ref.shape[1]
    head_dim = qw_ref.shape[2]
    scale = float(head_dim) ** -0.5
    bf16 = jnp.bfloat16

    ln1_w = ln1_w_ref[...]
    ln1_b = ln1_b_ref[...]

    # ---- K / V projection for all (padded) tokens: once per batch element ---------------
    @pl.when(t == 0)
    def _():
        x_full = tok_full_ref[0]                                     # (N_pad, F) f32
        xn_full = _layernorm(x_full, ln1_w, ln1_b).astype(bf16)
        for h in range(num_heads):
            k_h = jnp.dot(xn_full, kw_ref[h],
                          preferred_element_type=jnp.float32) + kb_ref[h]
            v_h = jnp.dot(xn_full, vw_ref[h],
                          preferred_element_type=jnp.float32) + vb_ref[h]
            k_scr[h] = k_h.astype(bf16)
            v_scr[h] = v_h.astype(bf16)

    # ---- attention for this query tile ---------------------------------------------------
    x_tile = tok_tile_ref[0]                                         # (tile, F) f32
    xn_tile = _layernorm(x_tile, ln1_w, ln1_b).astype(bf16)

    key_bias = None
    if n_true < n_pad:  # mask padded key columns so padding never leaks into real tokens
        col = jax.lax.broadcasted_iota(jnp.int32, (1, n_pad), 1)
        key_bias = jnp.where(col < n_true, 0.0, _NEG_INF).astype(jnp.float32)

    acc = jnp.zeros(x_tile.shape, jnp.float32)                       # (tile, F)
    for h in range(num_heads):
        q_h = (jnp.dot(xn_tile, qw_ref[h], preferred_element_type=jnp.float32)
               + qb_ref[h]) * scale                                  # (tile, D) f32
        s = jax.lax.dot_general(q_h.astype(bf16), k_scr[h],
                                (((1,), (1,)), ((), ())),
                                preferred_element_type=jnp.float32)  # (tile, N_pad)
        if key_bias is not None:
            s = s + key_bias
        s = s - jnp.max(s, axis=-1, keepdims=True)
        p = jnp.exp(s)
        p = p * pl.reciprocal(jnp.sum(p, axis=-1, keepdims=True), approx=True)
        o_h = jnp.dot(p.astype(bf16), v_scr[h],
                      preferred_element_type=jnp.float32)            # (tile, D)
        # accumulate directly into the output projection -- no head concat, no (N,F) buffer
        acc = acc + jnp.dot(o_h.astype(bf16), pw_ref[h],
                            preferred_element_type=jnp.float32)      # (tile, F)
    x1 = x_tile + g1_ref[...] * (acc + pb_ref[...])

    # ---- MLP ------------------------------------------------------------------------------
    xn2 = _layernorm(x1, ln2_w_ref[...], ln2_b_ref[...]).astype(bf16)
    h1 = jnp.dot(xn2, f1w_ref[...], preferred_element_type=jnp.float32) + f1b_ref[...]
    # TODO(synk): PyTorch nn.GELU is exact (erf); tanh approximation kept for safe Mosaic lowering.
    h1 = jax.nn.gelu(h1, approximate=True)
    h2 = jnp.dot(h1.astype(bf16), f2w_ref[...],
                 preferred_element_type=jnp.float32) + f2b_ref[...]
    x2 = x1 + g2_ref[...] * h2

    out_ref[0] = x2
    if fuse_outnorm:
        stage_ref[0] = _layernorm(x2, on_w_ref[...], on_b_ref[...])


# ----------------------------------------------------------------------------- wrappers


def _vmem_limit_bytes():
    """Generation-aware scoped-VMEM budget (~85% of capacity, capped at 100 MiB)."""
    try:
        cap = int(pltpu.get_tpu_info().vmem_capacity_bytes)
    except Exception:
        cap = 64 * 1024 * 1024
    return min(int(cap * 0.85), 100 * 1024 * 1024)


def _replicated_spec(shape):
    """Full-array block, replicated across the (b, t) grid."""
    nd = len(shape)
    return pl.BlockSpec(shape, lambda *_, _nd=nd: (0,) * _nd)


@functools.lru_cache(maxsize=None)
def _build_block_call(batch, n_pad, feat, num_heads, head_dim, tile, n_true, hidden,
                      fuse_outnorm):
    kernel = functools.partial(transformer_block_kernel, num_heads=num_heads,
                               n_true=n_true, fuse_outnorm=fuse_outnorm)
    w_shapes = [
        (1, feat), (1, feat),                                         # ln1 w/b
        (num_heads, feat, head_dim), (num_heads, 1, head_dim),        # q_w, q_b
        (num_heads, feat, head_dim), (num_heads, 1, head_dim),        # k_w, k_b
        (num_heads, feat, head_dim), (num_heads, 1, head_dim),        # v_w, v_b
        (num_heads, head_dim, feat), (1, feat), (1, feat),            # proj_w, proj_b, gamma1
        (1, feat), (1, feat),                                         # ln2 w/b
        (feat, hidden), (1, hidden), (hidden, feat), (1, feat),       # fc1 w/b, fc2 w/b
        (1, feat),                                                    # gamma2
    ]
    if fuse_outnorm:
        w_shapes += [(1, feat), (1, feat)]                            # outnorm w/b

    in_specs = ([pl.BlockSpec((1, tile, feat), lambda b, t: (b, t, 0)),   # query tile
                 pl.BlockSpec((1, n_pad, feat), lambda b, t: (b, 0, 0))]  # full tokens (for K/V)
                + [_replicated_spec(s) for s in w_shapes])

    tok_out = jax.ShapeDtypeStruct((batch, n_pad, feat), jnp.float32)
    out_spec = pl.BlockSpec((1, tile, feat), lambda b, t: (b, t, 0))
    if fuse_outnorm:
        out_shape = (tok_out, tok_out)
        out_specs = (out_spec, pl.BlockSpec((1, tile, feat), lambda b, t: (b, t, 0)))
    else:
        out_shape = tok_out
        out_specs = out_spec

    return pl.pallas_call(
        kernel,
        grid=(batch, n_pad // tile),
        in_specs=in_specs,
        out_specs=out_specs,
        out_shape=out_shape,
        scratch_shapes=[pltpu.VMEM((num_heads, n_pad, head_dim), jnp.bfloat16),   # K scratch
                        pltpu.VMEM((num_heads, n_pad, head_dim), jnp.bfloat16)],  # V scratch
        compiler_params=pltpu.CompilerParams(
            dimension_semantics=("parallel", "arbitrary"),
            vmem_limit_bytes=_vmem_limit_bytes()),
    )


def run_block(tokens, p, *, num_heads, n_true, tile, outnorm=None):
    batch, n_pad, feat = tokens.shape
    head_dim = feat // num_heads
    hidden = p["fc1_w"].shape[-1]
    fuse = outnorm is not None
    call = _build_block_call(batch, n_pad, feat, num_heads, head_dim, tile, n_true,
                             hidden, fuse)
    args = [tokens, tokens,
            p["ln1_w"], p["ln1_b"],
            p["q_w"], p["q_b"], p["k_w"], p["k_b"], p["v_w"], p["v_b"],
            p["proj_w"], p["proj_b"], p["gamma1"],
            p["ln2_w"], p["ln2_b"],
            p["fc1_w"], p["fc1_b"], p["fc2_w"], p["fc2_b"], p["gamma2"]]
    if fuse:
        args += [outnorm[0], outnorm[1]]
    return call(*args)


# ----------------------------------------------------------------------------- model


def init_params(key, *, features_per_token, num_heads, num_blocks, base_patch_grid_hw):
    feat = features_per_token
    head_dim = feat // num_heads
    hidden = 4 * feat
    gh, gw = base_patch_grid_hw
    num_stages = 4
    layers_per_stage = int(round(num_blocks / num_stages))

    def normal(k, shape, scale=0.02, dtype=jnp.float32):
        return (scale * jax.random.normal(k, shape)).astype(dtype)

    keys = iter(jax.random.split(key, 1 + num_stages * layers_per_stage * 6))
    bf16 = jnp.bfloat16

    params = {
        "cls_token": jnp.zeros((1, 1, feat), jnp.float32),            # nn.Parameter(zeros)
        "pos_embed": normal(next(keys), (1, 1 + gh * gw, feat)),      # learned position enc.
        "outnorm_w": jnp.ones((1, feat), jnp.float32),
        "outnorm_b": jnp.zeros((1, feat), jnp.float32),
        "stages": [],
    }
    for _ in range(num_stages):
        blocks = []
        for _ in range(layers_per_stage):
            blocks.append({
                "ln1_w": jnp.ones((1, feat), jnp.float32),
                "ln1_b": jnp.zeros((1, feat), jnp.float32),
                # Attention weights pre-split per head (bf16): q/k/v (H, F, D), proj (H, D, F).
                # (Loading PyTorch qkv/proj weights just requires a reshape/transpose here.)
                "q_w": normal(next(keys), (num_heads, feat, head_dim), dtype=bf16),
                "q_b": jnp.zeros((num_heads, 1, head_dim), jnp.float32),
                "k_w": normal(next(keys), (num_heads, feat, head_dim), dtype=bf16),
                "k_b": jnp.zeros((num_heads, 1, head_dim), jnp.float32),
                "v_w": normal(next(keys), (num_heads, feat, head_dim), dtype=bf16),
                "v_b": jnp.zeros((num_heads, 1, head_dim), jnp.float32),
                "proj_w": normal(next(keys), (num_heads, head_dim, feat), dtype=bf16),
                "proj_b": jnp.zeros((1, feat), jnp.float32),
                "gamma1": jnp.full((1, feat), 1e-5, jnp.float32),     # LayerScale init
                "ln2_w": jnp.ones((1, feat), jnp.float32),
                "ln2_b": jnp.zeros((1, feat), jnp.float32),
                "fc1_w": normal(next(keys), (feat, hidden), dtype=bf16),
                "fc1_b": jnp.zeros((1, hidden), jnp.float32),
                "fc2_w": normal(next(keys), (hidden, feat), dtype=bf16),
                "fc2_b": jnp.zeros((1, feat), jnp.float32),
                "gamma2": jnp.full((1, feat), 1e-5, jnp.float32),
            })
        params["stages"].append(blocks)
    return params


def dinov2_4stages_forward(params, patch_tokens, patch_grid_hw, *, num_heads, q_tile=None):
    """Mirrors DinoV2Model4Stages.forward: returns (stage_1, stage_2, stage_3, stage_4)."""
    batch, n_patches, feat = patch_tokens.shape
    gh, gw = patch_grid_hw
    assert n_patches == gh * gw
    # TODO(synk): PositionEncoder bicubic interpolation for grids != base grid is omitted;
    #             base_patch_grid_hw must equal the runtime grid (no interpolation needed).
    pos = params["pos_embed"]
    clstok = params["cls_token"] + pos[:, :1]                         # (1, 1, F)
    patches = patch_tokens + pos[:, 1:]                               # (B, Np, F)
    tokens = jnp.concatenate(
        [jnp.broadcast_to(clstok, (batch, 1, feat)), patches], axis=1)  # (B, 1+Np, F)

    n_true = 1 + n_patches
    if q_tile is None:
        q_tile = min(256, 8 * pl.cdiv(n_true, 8))                     # sublane-aligned tile
    n_pad = q_tile * pl.cdiv(n_true, q_tile)
    tokens = jnp.pad(tokens, ((0, 0), (0, n_pad - n_true), (0, 0)))   # pad key/query axis

    outnorm = (params["outnorm_w"], params["outnorm_b"])
    stage_results = []
    for stage_blocks in params["stages"]:
        for bi, blk in enumerate(stage_blocks):
            if bi == len(stage_blocks) - 1:        # last block of stage: fused output LayerNorm
                tokens, stage_out = run_block(tokens, blk, num_heads=num_heads,
                                              n_true=n_true, tile=q_tile, outnorm=outnorm)
                stage_results.append(stage_out[:, :n_true, :])
            else:
                tokens = run_block(tokens, blk, num_heads=num_heads,
                                   n_true=n_true, tile=q_tile)
    return tuple(stage_results)


# ----------------------------------------------------------------------------- pure-JAX reference


def _ref_block(x, p, num_heads):
    feat = x.shape[-1]
    head_dim = feat // num_heads
    scale = float(head_dim) ** -0.5
    bf16 = jnp.bfloat16

    xn = _layernorm(x, p["ln1_w"], p["ln1_b"]).astype(bf16)
    q = (jnp.einsum("bnf,hfd->bhnd", xn, p["q_w"],
                    preferred_element_type=jnp.float32) + p["q_b"][None]) * scale
    k = (jnp.einsum("bnf,hfd->bhnd", xn, p["k_w"],
                    preferred_element_type=jnp.float32) + p["k_b"][None]).astype(bf16)
    v = (jnp.einsum("bnf,hfd->bhnd", xn, p["v_w"],
                    preferred_element_type=jnp.float32) + p["v_b"][None]).astype(bf16)
    s = jnp.einsum("bhnd,bhmd->bhnm", q.astype(bf16), k,
                   preferred_element_type=jnp.float32)
    pa = jax.nn.softmax(s, axis=-1)
    o = jnp.einsum("bhnm,bhmd->bhnd", pa.astype(bf16), v,
                   preferred_element_type=jnp.float32)
    attn = jnp.einsum("bhnd,hdf->bnf", o.astype(bf16), p["proj_w"],
                      preferred_element_type=jnp.float32) + p["proj_b"]
    x = x + p["gamma1"] * attn

    xn2 = _layernorm(x, p["ln2_w"], p["ln2_b"]).astype(bf16)
    h1 = jnp.einsum("bnf,fh->bnh", xn2, p["fc1_w"],
                    preferred_element_type=jnp.float32) + p["fc1_b"]
    h1 = jax.nn.gelu(h1, approximate=True)
    h2 = jnp.einsum("bnh,hf->bnf", h1.astype(bf16), p["fc2_w"],
                    preferred_element_type=jnp.float32) + p["fc2_b"]
    return x + p["gamma2"] * h2


def _ref_forward(params, patch_tokens, patch_grid_hw, *, num_heads):
    batch, _, feat = patch_tokens.shape
    pos = params["pos_embed"]
    clstok = params["cls_token"] + pos[:, :1]
    tokens = jnp.concatenate(
        [jnp.broadcast_to(clstok, (batch, 1, feat)), patch_tokens + pos[:, 1:]], axis=1)
    outs = []
    for stage_blocks in params["stages"]:
        for blk in stage_blocks:
            tokens = _ref_block(tokens, blk, num_heads)
        outs.append(tokens)
    return tuple(_layernorm(r, params["outnorm_w"], params["outnorm_b"]) for r in outs)


# ----------------------------------------------------------------------------- main


if __name__ == "__main__":
    B = 2
    F = 32                # features_per_token
    NUM_HEADS = 4
    NUM_BLOCKS = 4        # -> 4 stages x 1 block each
    GRID_HW = (4, 4)      # 16 patch tokens (+1 cls = 17 -> padded to 24 with q_tile=8)

    key = jax.random.PRNGKey(0)
    k_params, k_tokens = jax.random.split(key)
    params = init_params(k_params, features_per_token=F, num_heads=NUM_HEADS,
                         num_blocks=NUM_BLOCKS, base_patch_grid_hw=GRID_HW)

    patch_tokens = (0.02 * jax.random.normal(
        k_tokens, (B, GRID_HW[0] * GRID_HW[1], F))).astype(jnp.float32)

    # q_tile=8 exercises the multi-tile (flash-style K/V reuse + key masking) path at toy size.
    outs = dinov2_4stages_forward(params, patch_tokens, GRID_HW,
                                  num_heads=NUM_HEADS, q_tile=8)
    outs = jax.block_until_ready(outs)

    refs = _ref_forward(params, patch_tokens, GRID_HW, num_heads=NUM_HEADS)
    for o, r in zip(outs, refs):
        assert o.shape == (B, 1 + GRID_HW[0] * GRID_HW[1], F)
        err = float(jnp.max(jnp.abs(o - r)))
        assert jnp.allclose(o, r, atol=1e-2, rtol=1e-2), f"max abs err {err}"

    print("KERNEL_OK")
</pallas_src>

<mosaic_0001>
module attributes {stable_mosaic.version = 11 : i64} {
  func.func @transformer_block_kernel(%arg0: i32, %arg1: i32, %arg2: memref<1x8x32xf32, #tpu.memory_space<vmem>>, %arg3: memref<1x24x32xf32, #tpu.memory_space<vmem>>, %arg4: memref<1x32xf32, #tpu.memory_space<vmem>>, %arg5: memref<1x32xf32, #tpu.memory_space<vmem>>, %arg6: memref<4x32x8xbf16, #tpu.memory_space<vmem>>, %arg7: memref<4x1x8xf32, #tpu.memory_space<vmem>>, %arg8: memref<4x32x8xbf16, #tpu.memory_space<vmem>>, %arg9: memref<4x1x8xf32, #tpu.memory_space<vmem>>, %arg10: memref<4x32x8xbf16, #tpu.memory_space<vmem>>, %arg11: memref<4x1x8xf32, #tpu.memory_space<vmem>>, %arg12: memref<4x8x32xbf16, #tpu.memory_space<vmem>>, %arg13: memref<1x32xf32, #tpu.memory_space<vmem>>, %arg14: memref<1x32xf32, #tpu.memory_space<vmem>>, %arg15: memref<1x32xf32, #tpu.memory_space<vmem>>, %arg16: memref<1x32xf32, #tpu.memory_space<vmem>>, %arg17: memref<32x128xbf16, #tpu.memory_space<vmem>>, %arg18: memref<1x128xf32, #tpu.memory_space<vmem>>, %arg19: memref<128x32xbf16, #tpu.memory_space<vmem>>, %arg20: memref<1x32xf32, #tpu.memory_space<vmem>>, %arg21: memref<1x32xf32, #tpu.memory_space<vmem>>, %arg22: memref<1x32xf32, #tpu.memory_space<vmem>>, %arg23: memref<1x32xf32, #tpu.memory_space<vmem>>, %arg24: memref<1x8x32xf32, #tpu.memory_space<vmem>>, %arg25: memref<1x8x32xf32, #tpu.memory_space<vmem>>, %arg26: memref<4x24x8xbf16, #tpu.memory_space<vmem>>, %arg27: memref<4x24x8xbf16, #tpu.memory_space<vmem>>) attributes {dimension_semantics = [#tpu.dimension_semantics<parallel>, #tpu.dimension_semantics<arbitrary>], iteration_bounds = array<i64: 2, 3>, scalar_prefetch = 0 : i64, scratch_operands = 2 : i64, tpu.core_type = #tpu.core_type<tc>, window_params = [{transform_indices = @transform_0, window_bounds = array<i64: 1, 8, 32>}, {transform_indices = @transform_1, window_bounds = array<i64: 1, 24, 32>}, {pipeline_mode = #tpu.pipeline_mode<synchronous>, transform_indices = @transform_2, window_bounds = array<i64: 1, 32>}, {pipeline_mode = #tpu.pipeline_mode<synchronous>, transform_indices = @transform_3, window_bounds = array<i64: 1, 32>}, {pipeline_mode = #tpu.pipeline_mode<synchronous>, transform_indices = @transform_4, window_bounds = array<i64: 4, 32, 8>}, {pipeline_mode = #tpu.pipeline_mode<synchronous>, transform_indices = @transform_5, window_bounds = array<i64: 4, 1, 8>}, {pipeline_mode = #tpu.pipeline_mode<synchronous>, transform_indices = @transform_6, window_bounds = array<i64: 4, 32, 8>}, {pipeline_mode = #tpu.pipeline_mode<synchronous>, transform_indices = @transform_7, window_bounds = array<i64: 4, 1, 8>}, {pipeline_mode = #tpu.pipeline_mode<synchronous>, transform_indices = @transform_8, window_bounds = array<i64: 4, 32, 8>}, {pipeline_mode = #tpu.pipeline_mode<synchronous>, transform_indices = @transform_9, window_bounds = array<i64: 4, 1, 8>}, {pipeline_mode = #tpu.pipeline_mode<synchronous>, transform_indices = @transform_10, window_bounds = array<i64: 4, 8, 32>}, {pipeline_mode = #tpu.pipeline_mode<synchronous>, transform_indices = @transform_11, window_bounds = array<i64: 1, 32>}, {pipeline_mode = #tpu.pipeline_mode<synchronous>, transform_indices = @transform_12, window_bounds = array<i64: 1, 32>}, {pipeline_mode = #tpu.pipeline_mode<synchronous>, transform_indices = @transform_13, window_bounds = array<i64: 1, 32>}, {pipeline_mode = #tpu.pipeline_mode<synchronous>, transform_indices = @transform_14, window_bounds = array<i64: 1, 32>}, {pipeline_mode = #tpu.pipeline_mode<synchronous>, transform_indices = @transform_15, window_bounds = array<i64: 32, 128>}, {pipeline_mode = #tpu.pipeline_mode<synchronous>, transform_indices = @transform_16, window_bounds = array<i64: 1, 128>}, {pipeline_mode = #tpu.pipeline_mode<synchronous>, transform_indices = @transform_17, window_bounds = array<i64: 128, 32>}, {pipeline_mode = #tpu.pipeline_mode<synchronous>, transform_indices = @transform_18, window_bounds = array<i64: 1, 32>}, {pipeline_mode = #tpu.pipeline_mode<synchronous>, transform_indices = @transform_19, window_bounds = array<i64: 1, 32>}, {pipeline_mode = #tpu.pipeline_mode<synchronous>, transform_indices = @transform_20, window_bounds = array<i64: 1, 32>}, {pipeline_mode = #tpu.pipeline_mode<synchronous>, transform_indices = @transform_21, window_bounds = array<i64: 1, 32>}, {transform_indices = @transform_22, window_bounds = array<i64: 1, 8, 32>}, {transform_indices = @transform_23, window_bounds = array<i64: 1, 8, 32>}]} {
    %c0 = arith.constant 0 : index
    %c0_0 = arith.constant 0 : index
    %0 = vector.load %arg4[%c0, %c0_0] : memref<1x32xf32, #tpu.memory_space<vmem>>, vector<1x32xf32>
    %c0_1 = arith.constant 0 : index
    %c0_2 = arith.constant 0 : index
    %1 = vector.load %arg5[%c0_1, %c0_2] : memref<1x32xf32, #tpu.memory_space<vmem>>, vector<1x32xf32>
    %c0_i32 = arith.constant 0 : i32
    %2 = arith.cmpi eq, %arg1, %c0_i32 : i32
    %3 = arith.extui %2 : i1 to i32
    %c0_i32_3 = arith.constant 0 : i32
    %4 = arith.cmpi ne, %3, %c0_i32_3 : i32
    scf.if %4 {
      %c0_143 = arith.constant 0 : index
      %c0_144 = arith.constant 0 : index
      %c0_145 = arith.constant 0 : index
      %263 = vector.load %arg3[%c0_143, %c0_144, %c0_145] : memref<1x24x32xf32, #tpu.memory_space<vmem>>, vector<1x24x32xf32>
      %264 = vector.shape_cast %263 : vector<1x24x32xf32> to vector<24x32xf32>
      %cst_146 = arith.constant dense<0.000000e+00> : vector<24xf32>
      %265 = vector.multi_reduction <add>, %264, %cst_146 [1] : vector<24x32xf32> to vector<24xf32>
      %266 = vector.shape_cast %265 : vector<24xf32> to vector<24x1xf32>
      %cst_147 = arith.constant 3.200000e+01 : f32
      %267 = vector.broadcast %cst_147 : f32 to vector<24x1xf32>
      %268 = arith.divf %266, %267 : vector<24x1xf32>
      %269 = vector.broadcast %268 : vector<24x1xf32> to vector<24x32xf32>
      %270 = arith.subf %264, %269 : vector<24x32xf32>
      %271 = arith.mulf %270, %270 : vector<24x32xf32>
      %cst_148 = arith.constant dense<0.000000e+00> : vector<24xf32>
      %272 = vector.multi_reduction <add>, %271, %cst_148 [1] : vector<24x32xf32> to vector<24xf32>
      %273 = vector.shape_cast %272 : vector<24xf32> to vector<24x1xf32>
      %cst_149 = arith.constant 3.200000e+01 : f32
      %274 = vector.broadcast %cst_149 : f32 to vector<24x1xf32>
      %275 = arith.divf %273, %274 : vector<24x1xf32>
      %276 = vector.broadcast %268 : vector<24x1xf32> to vector<24x32xf32>
      %277 = arith.subf %264, %276 : vector<24x32xf32>
      %cst_150 = arith.constant 9.99999997E-7 : f32
      %278 = vector.broadcast %cst_150 : f32 to vector<24x1xf32>
      %279 = arith.addf %275, %278 : vector<24x1xf32>
      %280 = math.rsqrt %279 : vector<24x1xf32>
      %281 = vector.broadcast %280 : vector<24x1xf32> to vector<24x32xf32>
      %282 = arith.mulf %277, %281 : vector<24x32xf32>
      %283 = vector.broadcast %0 : vector<1x32xf32> to vector<24x32xf32>
      %284 = arith.mulf %282, %283 : vector<24x32xf32>
      %285 = vector.broadcast %1 : vector<1x32xf32> to vector<24x32xf32>
      %286 = arith.addf %284, %285 : vector<24x32xf32>
      %287 = arith.truncf %286 : vector<24x32xf32> to vector<24x32xbf16>
      %c0_151 = arith.constant 0 : index
      %c0_152 = arith.constant 0 : index
      %c0_153 = arith.constant 0 : index
      %288 = vector.load %arg8[%c0_151, %c0_152, %c0_153] : memref<4x32x8xbf16, #tpu.memory_space<vmem>>, vector<1x32x8xbf16>
      %289 = vector.shape_cast %288 : vector<1x32x8xbf16> to vector<32x8xbf16>
      %cst_154 = arith.constant dense<0.000000e+00> : vector<24x8xf32>
      %290 = tpu.matmul %287, %289, %cst_154 {dimension_numbers = #tpu.dot_dimension_numbers<[1], [0], [0], [1], [0, 0, 1, 1], [], []>} : vector<24x32xbf16>, vector<32x8xbf16>, vector<24x8xf32> -> vector<24x8xf32>
      %c0_155 = arith.constant 0 : index
      %c0_156 = arith.constant 0 : index
      %c0_157 = arith.constant 0 : index
      %291 = vector.load %arg9[%c0_155, %c0_156, %c0_157] : memref<4x1x8xf32, #tpu.memory_space<vmem>>, vector<1x1x8xf32>
      %292 = vector.shape_cast %291 : vector<1x1x8xf32> to vector<1x8xf32>
      %293 = vector.broadcast %292 : vector<1x8xf32> to vector<24x8xf32>
      %294 = arith.addf %290, %293 : vector<24x8xf32>
      %c0_158 = arith.constant 0 : index
      %c0_159 = arith.constant 0 : index
      %c0_160 = arith.constant 0 : index
      %295 = vector.load %arg10[%c0_158, %c0_159, %c0_160] : memref<4x32x8xbf16, #tpu.memory_space<vmem>>, vector<1x32x8xbf16>
      %296 = vector.shape_cast %295 : vector<1x32x8xbf16> to vector<32x8xbf16>
      %cst_161 = arith.constant dense<0.000000e+00> : vector<24x8xf32>
      %297 = tpu.matmul %287, %296, %cst_161 {dimension_numbers = #tpu.dot_dimension_numbers<[1], [0], [0], [1], [0, 0, 1, 1], [], []>} : vector<24x32xbf16>, vector<32x8xbf16>, vector<24x8xf32> -> vector<24x8xf32>
      %c0_162 = arith.constant 0 : index
      %c0_163 = arith.constant 0 : index
      %c0_164 = arith.constant 0 : index
      %298 = vector.load %arg11[%c0_162, %c0_163, %c0_164] : memref<4x1x8xf32, #tpu.memory_space<vmem>>, vector<1x1x8xf32>
      %299 = vector.shape_cast %298 : vector<1x1x8xf32> to vector<1x8xf32>
      %300 = vector.broadcast %299 : vector<1x8xf32> to vector<24x8xf32>
      %301 = arith.addf %297, %300 : vector<24x8xf32>
      %302 = arith.truncf %294 : vector<24x8xf32> to vector<24x8xbf16>
      %c0_165 = arith.constant 0 : index
      %c0_166 = arith.constant 0 : index
      %c0_167 = arith.constant 0 : index
      %303 = vector.load %arg26[%c0_165, %c0_166, %c0_167] : memref<4x24x8xbf16, #tpu.memory_space<vmem>>, vector<1x24x8xbf16>
      %304 = vector.shape_cast %303 : vector<1x24x8xbf16> to vector<24x8xbf16>
      %305 = vector.shape_cast %302 : vector<24x8xbf16> to vector<1x24x8xbf16>
      tpu.vector_store %arg26[%c0_165, %c0_166, %c0_167], %305 {strides = array<i32>} : memref<4x24x8xbf16, #tpu.memory_space<vmem>>, vector<1x24x8xbf16>,
      %306 = arith.truncf %301 : vector<24x8xf32> to vector<24x8xbf16>
      %c0_168 = arith.constant 0 : index
      %c0_169 = arith.constant 0 : index
      %c0_170 = arith.constant 0 : index
      %307 = vector.load %arg27[%c0_168, %c0_169, %c0_170] : memref<4x24x8xbf16, #tpu.memory_space<vmem>>, vector<1x24x8xbf16>
      %308 = vector.shape_cast %307 : vector<1x24x8xbf16> to vector<24x8xbf16>
      %309 = vector.shape_cast %306 : vector<24x8xbf16> to vector<1x24x8xbf16>
      tpu.vector_store %arg27[%c0_168, %c0_169, %c0_170], %309 {strides = array<i32>} : memref<4x24x8xbf16, #tpu.memory_space<vmem>>, vector<1x24x8xbf16>,
      %c1_171 = arith.constant 1 : index
      %c0_172 = arith.constant 0 : index
      %c0_173 = arith.constant 0 : index
      %310 = vector.load %arg8[%c1_171, %c0_172, %c0_173] : memref<4x32x8xbf16, #tpu.memory_space<vmem>>, vector<1x32x8xbf16>
      %311 = vector.shape_cast %310 : vector<1x32x8xbf16> to vector<32x8xbf16>
      %cst_174 = arith.constant dense<0.000000e+00> : vector<24x8xf32>
      %312 = tpu.matmul %287, %311, %cst_174 {dimension_numbers = #tpu.dot_dimension_numbers<[1], [0], [0], [1], [0, 0, 1, 1], [], []>} : vector<24x32xbf16>, vector<32x8xbf16>, vector<24x8xf32> -> vector<24x8xf32>
      %c1_175 = arith.constant 1 : index
      %c0_176 = arith.constant 0 : index
      %c0_177 = arith.constant 0 : index
      %313 = vector.load %arg9[%c1_175, %c0_176, %c0_177] : memref<4x1x8xf32, #tpu.memory_space<vmem>>, vector<1x1x8xf32>
      %314 = vector.shape_cast %313 : vector<1x1x8xf32> to vector<1x8xf32>
      %315 = vector.broadcast %314 : vector<1x8xf32> to vector<24x8xf32>
      %316 = arith.addf %312, %315 : vector<24x8xf32>
      %c1_178 = arith.constant 1 : index
      %c0_179 = arith.constant 0 : index
      %c0_180 = arith.constant 0 : index
      %317 = vector.load %arg10[%c1_178, %c0_179, %c0_180] : memref<4x32x8xbf16, #tpu.memory_space<vmem>>, vector<1x32x8xbf16>
      %318 = vector.shape_cast %317 : vector<1x32x8xbf16> to vector<32x8xbf16>
      %cst_181 = arith.constant dense<0.000000e+00> : vector<24x8xf32>
      %319 = tpu.matmul %287, %318, %cst_181 {dimension_numbers = #tpu.dot_dimension_numbers<[1], [0], [0], [1], [0, 0, 1, 1], [], []>} : vector<24x32xbf16>, vector<32x8xbf16>, vector<24x8xf32> -> vector<24x8xf32>
      %c1_182 = arith.constant 1 : index
      %c0_183 = arith.constant 0 : index
      %c0_184 = arith.constant 0 : index
      %320 = vector.load %arg11[%c1_182, %c0_183, %c0_184] : memref<4x1x8xf32, #tpu.memory_space<vmem>>, vector<1x1x8xf32>
      %321 = vector.shape_cast %320 : vector<1x1x8xf32> to vector<1x8xf32>
      %322 = vector.broadcast %321 : vector<1x8xf32> to vector<24x8xf32>
      %323 = arith.addf %319, %322 : vector<24x8xf32>
      %324 = arith.truncf %316 : vector<24x8xf32> to vector<24x8xbf16>
      %c1_185 = arith.constant 1 : index
      %c0_186 = arith.constant 0 : index
      %c0_187 = arith.constant 0 : index
      %325 = vector.load %arg26[%c1_185, %c0_186, %c0_187] : memref<4x24x8xbf16, #tpu.memory_space<vmem>>, vector<1x24x8xbf16>
      %326 = vector.shape_cast %325 : vector<1x24x8xbf16> to vector<24x8xbf16>
      %327 = vector.shape_cast %324 : vector<24x8xbf16> to vector<1x24x8xbf16>
      tpu.vector_store %arg26[%c1_185, %c0_186, %c0_187], %327 {strides = array<i32>} : memref<4x24x8xbf16, #tpu.memory_space<vmem>>, vector<1x24x8xbf16>,
      %328 = arith.truncf %323 : vector<24x8xf32> to vector<24x8xbf16>
      %c1_188 = arith.constant 1 : index
      %c0_189 = arith.constant 0 : index
      %c0_190 = arith.constant 0 : index
      %329 = vector.load %arg27[%c1_188, %c0_189, %c0_190] : memref<4x24x8xbf16, #tpu.memory_space<vmem>>, vector<1x24x8xbf16>
      %330 = vector.shape_cast %329 : vector<1x24x8xbf16> to vector<24x8xbf16>
      %331 = vector.shape_cast %328 : vector<24x8xbf16> to vector<1x24x8xbf16>
      tpu.vector_store %arg27[%c1_188, %c0_189, %c0_190], %331 {strides = array<i32>} : memref<4x24x8xbf16, #tpu.memory_space<vmem>>, vector<1x24x8xbf16>,
      %c2_191 = arith.constant 2 : index
      %c0_192 = arith.constant 0 : index
      %c0_193 = arith.constant 0 : index
      %332 = vector.load %arg8[%c2_191, %c0_192, %c0_193] : memref<4x32x8xbf16, #tpu.memory_space<vmem>>, vector<1x32x8xbf16>
      %333 = vector.shape_cast %332 : vector<1x32x8xbf16> to vector<32x8xbf16>
      %cst_194 = arith.constant dense<0.000000e+00> : vector<24x8xf32>
      %334 = tpu.matmul %287, %333, %cst_194 {dimension_numbers = #tpu.dot_dimension_numbers<[1], [0], [0], [1], [0, 0, 1, 1], [], []>} : vector<24x32xbf16>, vector<32x8xbf16>, vector<24x8xf32> -> vector<24x8xf32>
      %c2_195 = arith.constant 2 : index
      %c0_196 = arith.constant 0 : index
      %c0_197 = arith.constant 0 : index
      %335 = vector.load %arg9[%c2_195, %c0_196, %c0_197] : memref<4x1x8xf32, #tpu.memory_space<vmem>>, vector<1x1x8xf32>
      %336 = vector.shape_cast %335 : vector<1x1x8xf32> to vector<1x8xf32>
      %337 = vector.broadcast %336 : vector<1x8xf32> to vector<24x8xf32>
      %338 = arith.addf %334, %337 : vector<24x8xf32>
      %c2_198 = arith.constant 2 : index
      %c0_199 = arith.constant 0 : index
      %c0_200 = arith.constant 0 : index
      %339 = vector.load %arg10[%c2_198, %c0_199, %c0_200] : memref<4x32x8xbf16, #tpu.memory_space<vmem>>, vector<1x32x8xbf16>
      %340 = vector.shape_cast %339 : vector<1x32x8xbf16> to vector<32x8xbf16>
      %cst_201 = arith.constant dense<0.000000e+00> : vector<24x8xf32>
      %341 = tpu.matmul %287, %340, %cst_201 {dimension_numbers = #tpu.dot_dimension_numbers<[1], [0], [0], [1], [0, 0, 1, 1], [], []>} : vector<24x32xbf16>, vector<32x8xbf16>, vector<24x8xf32> -> vector<24x8xf32>
      %c2_202 = arith.constant 2 : index
      %c0_203 = arith.constant 0 : index
      %c0_204 = arith.constant 0 : index
      %342 = vector.load %arg11[%c2_202, %c0_203, %c0_204] : memref<4x1x8xf32, #tpu.memory_space<vmem>>, vector<1x1x8xf32>
      %343 = vector.shape_cast %342 : vector<1x1x8xf32> to vector<1x8xf32>
      %344 = vector.broadcast %343 : vector<1x8xf32> to vector<24x8xf32>
      %345 = arith.addf %341, %344 : vector<24x8xf32>
      %346 = arith.truncf %338 : vector<24x8xf32> to vector<24x8xbf16>
      %c2_205 = arith.constant 2 : index
      %c0_206 = arith.constant 0 : index
      %c0_207 = arith.constant 0 : index
      %347 = vector.load %arg26[%c2_205, %c0_206, %c0_207] : memref<4x24x8xbf16, #tpu.memory_space<vmem>>, vector<1x24x8xbf16>
      %348 = vector.shape_cast %347 : vector<1x24x8xbf16> to vector<24x8xbf16>
      %349 = vector.shape_cast %346 : vector<24x8xbf16> to vector<1x24x8xbf16>
      tpu.vector_store %arg26[%c2_205, %c0_206, %c0_207], %349 {strides = array<i32>} : memref<4x24x8xbf16, #tpu.memory_space<vmem>>, vector<1x24x8xbf16>,
      %350 = arith.truncf %345 : vector<24x8xf32> to vector<24x8xbf16>
      %c2_208 = arith.constant 2 : index
      %c0_209 = arith.constant 0 : index
      %c0_210 = arith.constant 0 : index
      %351 = vector.load %arg27[%c2_208, %c0_209, %c0_210] : memref<4x24x8xbf16, #tpu.memory_space<vmem>>, vector<1x24x8xbf16>
      %352 = vector.shape_cast %351 : vector<1x24x8xbf16> to vector<24x8xbf16>
      %353 = vector.shape_cast %350 : vector<24x8xbf16> to vector<1x24x8xbf16>
      tpu.vector_store %arg27[%c2_208, %c0_209, %c0_210], %353 {strides = array<i32>} : memref<4x24x8xbf16, #tpu.memory_space<vmem>>, vector<1x24x8xbf16>,
      %c3_211 = arith.constant 3 : index
      %c0_212 = arith.constant 0 : index
      %c0_213 = arith.constant 0 : index
      %354 = vector.load %arg8[%c3_211, %c0_212, %c0_213] : memref<4x32x8xbf16, #tpu.memory_space<vmem>>, vector<1x32x8xbf16>
      %355 = vector.shape_cast %354 : vector<1x32x8xbf16> to vector<32x8xbf16>
      %cst_214 = arith.constant dense<0.000000e+00> : vector<24x8xf32>
      %356 = tpu.matmul %287, %355, %cst_214 {dimension_numbers = #tpu.dot_dimension_numbers<[1], [0], [0], [1], [0, 0, 1, 1], [], []>} : vector<24x32xbf16>, vector<32x8xbf16>, vector<24x8xf32> -> vector<24x8xf32>
      %c3_215 = arith.constant 3 : index
      %c0_216 = arith.constant 0 : index
      %c0_217 = arith.constant 0 : index
      %357 = vector.load %arg9[%c3_215, %c0_216, %c0_217] : memref<4x1x8xf32, #tpu.memory_space<vmem>>, vector<1x1x8xf32>
      %358 = vector.shape_cast %357 : vector<1x1x8xf32> to vector<1x8xf32>
      %359 = vector.broadcast %358 : vector<1x8xf32> to vector<24x8xf32>
      %360 = arith.addf %356, %359 : vector<24x8xf32>
      %c3_218 = arith.constant 3 : index
      %c0_219 = arith.constant 0 : index
      %c0_220 = arith.constant 0 : index
      %361 = vector.load %arg10[%c3_218, %c0_219, %c0_220] : memref<4x32x8xbf16, #tpu.memory_space<vmem>>, vector<1x32x8xbf16>
      %362 = vector.shape_cast %361 : vector<1x32x8xbf16> to vector<32x8xbf16>
      %cst_221 = arith.constant dense<0.000000e+00> : vector<24x8xf32>
      %363 = tpu.matmul %287, %362, %cst_221 {dimension_numbers = #tpu.dot_dimension_numbers<[1], [0], [0], [1], [0, 0, 1, 1], [], []>} : vector<24x32xbf16>, vector<32x8xbf16>, vector<24x8xf32> -> vector<24x8xf32>
      %c3_222 = arith.constant 3 : index
      %c0_223 = arith.constant 0 : index
      %c0_224 = arith.constant 0 : index
      %364 = vector.load %arg11[%c3_222, %c0_223, %c0_224] : memref<4x1x8xf32, #tpu.memory_space<vmem>>, vector<1x1x8xf32>
      %365 = vector.shape_cast %364 : vector<1x1x8xf32> to vector<1x8xf32>
      %366 = vector.broadcast %365 : vector<1x8xf32> to vector<24x8xf32>
      %367 = arith.addf %363, %366 : vector<24x8xf32>
      %368 = arith.truncf %360 : vector<24x8xf32> to vector<24x8xbf16>
      %c3_225 = arith.constant 3 : index
      %c0_226 = arith.constant 0 : index
      %c0_227 = arith.constant 0 : index
      %369 = vector.load %arg26[%c3_225, %c0_226, %c0_227] : memref<4x24x8xbf16, #tpu.memory_space<vmem>>, vector<1x24x8xbf16>
      %370 = vector.shape_cast %369 : vector<1x24x8xbf16> to vector<24x8xbf16>
      %371 = vector.shape_cast %368 : vector<24x8xbf16> to vector<1x24x8xbf16>
      tpu.vector_store %arg26[%c3_225, %c0_226, %c0_227], %371 {strides = array<i32>} : memref<4x24x8xbf16, #tpu.memory_space<vmem>>, vector<1x24x8xbf16>,
      %372 = arith.truncf %367 : vector<24x8xf32> to vector<24x8xbf16>
      %c3_228 = arith.constant 3 : index
      %c0_229 = arith.constant 0 : index
      %c0_230 = arith.constant 0 : index
      %373 = vector.load %arg27[%c3_228, %c0_229, %c0_230] : memref<4x24x8xbf16, #tpu.memory_space<vmem>>, vector<1x24x8xbf16>
      %374 = vector.shape_cast %373 : vector<1x24x8xbf16> to vector<24x8xbf16>
      %375 = vector.shape_cast %372 : vector<24x8xbf16> to vector<1x24x8xbf16>
      tpu.vector_store %arg27[%c3_228, %c0_229, %c0_230], %375 {strides = array<i32>} : memref<4x24x8xbf16, #tpu.memory_space<vmem>>, vector<1x24x8xbf16>,
    } else {
    }
    %c0_4 = arith.constant 0 : index
    %c0_5 = arith.constant 0 : index
    %c0_6 = arith.constant 0 : index
    %5 = vector.load %arg2[%c0_4, %c0_5, %c0_6] : memref<1x8x32xf32, #tpu.memory_space<vmem>>, vector<1x8x32xf32>
    %6 = vector.shape_cast %5 : vector<1x8x32xf32> to vector<8x32xf32>
    %cst = arith.constant dense<0.000000e+00> : vector<8xf32>
    %7 = vector.multi_reduction <add>, %6, %cst [1] : vector<8x32xf32> to vector<8xf32>
    %8 = vector.shape_cast %7 : vector<8xf32> to vector<8x1xf32>
    %cst_7 = arith.constant 3.200000e+01 : f32
    %9 = vector.broadcast %cst_7 : f32 to vector<8x1xf32>
    %10 = arith.divf %8, %9 : vector<8x1xf32>
    %11 = vector.broadcast %10 : vector<8x1xf32> to vector<8x32xf32>
    %12 = arith.subf %6, %11 : vector<8x32xf32>
    %13 = arith.mulf %12, %12 : vector<8x32xf32>
    %cst_8 = arith.constant dense<0.000000e+00> : vector<8xf32>
    %14 = vector.multi_reduction <add>, %13, %cst_8 [1] : vector<8x32xf32> to vector<8xf32>
    %15 = vector.shape_cast %14 : vector<8xf32> to vector<8x1xf32>
    %cst_9 = arith.constant 3.200000e+01 : f32
    %16 = vector.broadcast %cst_9 : f32 to vector<8x1xf32>
    %17 = arith.divf %15, %16 : vector<8x1xf32>
    %18 = vector.broadcast %10 : vector<8x1xf32> to vector<8x32xf32>
    %19 = arith.subf %6, %18 : vector<8x32xf32>
    %cst_10 = arith.constant 9.99999997E-7 : f32
    %20 = vector.broadcast %cst_10 : f32 to vector<8x1xf32>
    %21 = arith.addf %17, %20 : vector<8x1xf32>
    %22 = math.rsqrt %21 : vector<8x1xf32>
    %23 = vector.broadcast %22 : vector<8x1xf32> to vector<8x32xf32>
    %24 = arith.mulf %19, %23 : vector<8x32xf32>
    %25 = vector.broadcast %0 : vector<1x32xf32> to vector<8x32xf32>
    %26 = arith.mulf %24, %25 : vector<8x32xf32>
    %27 = vector.broadcast %1 : vector<1x32xf32> to vector<8x32xf32>
    %28 = arith.addf %26, %27 : vector<8x32xf32>
    %29 = arith.truncf %28 : vector<8x32xf32> to vector<8x32xbf16>
    %30 = tpu.iota {dimensions = array<i32: 1>} : vector<1x24xi32>
    %c17_i32 = arith.constant 17 : i32
    %31 = vector.broadcast %c17_i32 : i32 to vector<1x24xi32>
    %32 = arith.cmpi slt, %30, %31 : vector<1x24xi32>
    %cst_11 = arith.constant 0.000000e+00 : f32
    %cst_12 = arith.constant -1.000000e+30 : f32
    %33 = vector.broadcast %cst_11 : f32 to vector<1x24xf32>
    %34 = vector.broadcast %cst_12 : f32 to vector<1x24xf32>
    %35 = arith.select %32, %33, %34 : vector<1x24xi1>, vector<1x24xf32>
    %cst_13 = arith.constant 0.000000e+00 : f32
    %36 = vector.broadcast %cst_13 : f32 to vector<8x32xf32>
    %c0_14 = arith.constant 0 : index
    %c0_15 = arith.constant 0 : index
    %c0_16 = arith.constant 0 : index
    %37 = vector.load %arg6[%c0_14, %c0_15, %c0_16] : memref<4x32x8xbf16, #tpu.memory_space<vmem>>, vector<1x32x8xbf16>
    %38 = vector.shape_cast %37 : vector<1x32x8xbf16> to vector<32x8xbf16>
    %cst_17 = arith.constant dense<0.000000e+00> : vector<8x8xf32>
    %39 = tpu.matmul %29, %38, %cst_17 {dimension_numbers = #tpu.dot_dimension_numbers<[1], [0], [0], [1], [0, 0, 1, 1], [], []>} : vector<8x32xbf16>, vector<32x8xbf16>, vector<8x8xf32> -> vector<8x8xf32>
    %c0_18 = arith.constant 0 : index
    %c0_19 = arith.constant 0 : index
    %c0_20 = arith.constant 0 : index
    %40 = vector.load %arg7[%c0_18, %c0_19, %c0_20] : memref<4x1x8xf32, #tpu.memory_space<vmem>>, vector<1x1x8xf32>
    %41 = vector.shape_cast %40 : vector<1x1x8xf32> to vector<1x8xf32>
    %42 = vector.broadcast %41 : vector<1x8xf32> to vector<8x8xf32>
    %43 = arith.addf %39, %42 : vector<8x8xf32>
    %cst_21 = arith.constant 0.353553385 : f32
    %44 = vector.broadcast %cst_21 : f32 to vector<8x8xf32>
    %45 = arith.mulf %43, %44 : vector<8x8xf32>
    %46 = arith.truncf %45 : vector<8x8xf32> to vector<8x8xbf16>
    %c0_22 = arith.constant 0 : index
    %c0_23 = arith.constant 0 : index
    %c0_24 = arith.constant 0 : index
    %47 = vector.load %arg26[%c0_22, %c0_23, %c0_24] : memref<4x24x8xbf16, #tpu.memory_space<vmem>>, vector<1x24x8xbf16>
    %48 = vector.shape_cast %47 : vector<1x24x8xbf16> to vector<24x8xbf16>
    %cst_25 = arith.constant dense<0.000000e+00> : vector<8x24xf32>
    %49 = tpu.matmul %46, %48, %cst_25 {dimension_numbers = #tpu.dot_dimension_numbers<[1], [1], [0], [0], [0, 0, 1, 0], [], []>} : vector<8x8xbf16>, vector<24x8xbf16>, vector<8x24xf32> -> vector<8x24xf32>
    %50 = vector.broadcast %35 : vector<1x24xf32> to vector<8x24xf32>
    %51 = arith.addf %49, %50 : vector<8x24xf32>
    %cst_26 = arith.constant dense<0xFF800000> : vector<8xf32>
    %52 = vector.multi_reduction <maximumf>, %51, %cst_26 [1] : vector<8x24xf32> to vector<8xf32>
    %53 = vector.shape_cast %52 : vector<8xf32> to vector<8x1xf32>
    %54 = vector.broadcast %53 : vector<8x1xf32> to vector<8x24xf32>
    %55 = arith.subf %51, %54 : vector<8x24xf32>
    %56 = math.exp %55 : vector<8x24xf32>
    %cst_27 = arith.constant dense<0.000000e+00> : vector<8xf32>
    %57 = vector.multi_reduction <add>, %56, %cst_27 [1] : vector<8x24xf32> to vector<8xf32>
    %58 = vector.shape_cast %57 : vector<8xf32> to vector<8x1xf32>
    %59 = tpu.reciprocal %58 {approx = true} : vector<8x1xf32> -> vector<8x1xf32>
    %60 = vector.broadcast %59 : vector<8x1xf32> to vector<8x24xf32>
    %61 = arith.mulf %56, %60 : vector<8x24xf32>
    %62 = arith.truncf %61 : vector<8x24xf32> to vector<8x24xbf16>
    %c0_28 = arith.constant 0 : index
    %c0_29 = arith.constant 0 : index
    %c0_30 = arith.constant 0 : index
    %63 = vector.load %arg27[%c0_28, %c0_29, %c0_30] : memref<4x24x8xbf16, #tpu.memory_space<vmem>>, vector<1x24x8xbf16>
    %64 = vector.shape_cast %63 : vector<1x24x8xbf16> to vector<24x8xbf16>
    %cst_31 = arith.constant dense<0.000000e+00> : vector<8x8xf32>
    %65 = tpu.matmul %62, %64, %cst_31 {dimension_numbers = #tpu.dot_dimension_numbers<[1], [0], [0], [1], [0, 0, 1, 1], [], []>} : vector<8x24xbf16>, vector<24x8xbf16>, vector<8x8xf32> -> vector<8x8xf32>
    %66 = arith.truncf %65 : vector<8x8xf32> to vector<8x8xbf16>
    %c0_32 = arith.constant 0 : index
    %c0_33 = arith.constant 0 : index
    %c0_34 = arith.constant 0 : index
    %67 = vector.load %arg12[%c0_32, %c0_33, %c0_34] : memref<4x8x32xbf16, #tpu.memory_space<vmem>>, vector<1x8x32xbf16>
    %68 = vector.shape_cast %67 : vector<1x8x32xbf16> to vector<8x32xbf16>
    %cst_35 = arith.constant dense<0.000000e+00> : vector<8x32xf32>
    %69 = tpu.matmul %66, %68, %cst_35 {dimension_numbers = #tpu.dot_dimension_numbers<[1], [0], [0], [1], [0, 0, 1, 1], [], []>} : vector<8x8xbf16>, vector<8x32xbf16>, vector<8x32xf32> -> vector<8x32xf32>
    %70 = arith.addf %36, %69 : vector<8x32xf32>
    %c1 = arith.constant 1 : index
    %c0_36 = arith.constant 0 : index
    %c0_37 = arith.constant 0 : index
    %71 = vector.load %arg6[%c1, %c0_36, %c0_37] : memref<4x32x8xbf16, #tpu.memory_space<vmem>>, vector<1x32x8xbf16>
    %72 = vector.shape_cast %71 : vector<1x32x8xbf16> to vector<32x8xbf16>
    %cst_38 = arith.constant dense<0.000000e+00> : vector<8x8xf32>
    %73 = tpu.matmul %29, %72, %cst_38 {dimension_numbers = #tpu.dot_dimension_numbers<[1], [0], [0], [1], [0, 0, 1, 1], [], []>} : vector<8x32xbf16>, vector<32x8xbf16>, vector<8x8xf32> -> vector<8x8xf32>
    %c1_39 = arith.constant 1 : index
    %c0_40 = arith.constant 0 : index
    %c0_41 = arith.constant 0 : index
    %74 = vector.load %arg7[%c1_39, %c0_40, %c0_41] : memref<4x1x8xf32, #tpu.memory_space<vmem>>, vector<1x1x8xf32>
    %75 = vector.shape_cast %74 : vector<1x1x8xf32> to vector<1x8xf32>
    %76 = vector.broadcast %75 : vector<1x8xf32> to vector<8x8xf32>
    %77 = arith.addf %73, %76 : vector<8x8xf32>
    %cst_42 = arith.constant 0.353553385 : f32
    %78 = vector.broadcast %cst_42 : f32 to vector<8x8xf32>
    %79 = arith.mulf %77, %78 : vector<8x8xf32>
    %80 = arith.truncf %79 : vector<8x8xf32> to vector<8x8xbf16>
    %c1_43 = arith.constant 1 : index
    %c0_44 = arith.constant 0 : index
    %c0_45 = arith.constant 0 : index
    %81 = vector.load %arg26[%c1_43, %c0_44, %c0_45] : memref<4x24x8xbf16, #tpu.memory_space<vmem>>, vector<1x24x8xbf16>
    %82 = vector.shape_cast %81 : vector<1x24x8xbf16> to vector<24x8xbf16>
    %cst_46 = arith.constant dense<0.000000e+00> : vector<8x24xf32>
    %83 = tpu.matmul %80, %82, %cst_46 {dimension_numbers = #tpu.dot_dimension_numbers<[1], [1], [0], [0], [0, 0, 1, 0], [], []>} : vector<8x8xbf16>, vector<24x8xbf16>, vector<8x24xf32> -> vector<8x24xf32>
    %84 = vector.broadcast %35 : vector<1x24xf32> to vector<8x24xf32>
    %85 = arith.addf %83, %84 : vector<8x24xf32>
    %cst_47 = arith.constant dense<0xFF800000> : vector<8xf32>
    %86 = vector.multi_reduction <maximumf>, %85, %cst_47 [1] : vector<8x24xf32> to vector<8xf32>
    %87 = vector.shape_cast %86 : vector<8xf32> to vector<8x1xf32>
    %88 = vector.broadcast %87 : vector<8x1xf32> to vector<8x24xf32>
    %89 = arith.subf %85, %88 : vector<8x24xf32>
    %90 = math.exp %89 : vector<8x24xf32>
    %cst_48 = arith.constant dense<0.000000e+00> : vector<8xf32>
    %91 = vector.multi_reduction <add>, %90, %cst_48 [1] : vector<8x24xf32> to vector<8xf32>
    %92 = vector.shape_cast %91 : vector<8xf32> to vector<8x1xf32>
    %93 = tpu.reciprocal %92 {approx = true} : vector<8x1xf32> -> vector<8x1xf32>
    %94 = vector.broadcast %93 : vector<8x1xf32> to vector<8x24xf32>
    %95 = arith.mulf %90, %94 : vector<8x24xf32>
    %96 = arith.truncf %95 : vector<8x24xf32> to vector<8x24xbf16>
    %c1_49 = arith.constant 1 : index
    %c0_50 = arith.constant 0 : index
    %c0_51 = arith.constant 0 : index
    %97 = vector.load %arg27[%c1_49, %c0_50, %c0_51] : memref<4x24x8xbf16, #tpu.memory_space<vmem>>, vector<1x24x8xbf16>
    %98 = vector.shape_cast %97 : vector<1x24x8xbf16> to vector<24x8xbf16>
    %cst_52 = arith.constant dense<0.000000e+00> : vector<8x8xf32>
    %99 = tpu.matmul %96, %98, %cst_52 {dimension_numbers = #tpu.dot_dimension_numbers<[1], [0], [0], [1], [0, 0, 1, 1], [], []>} : vector<8x24xbf16>, vector<24x8xbf16>, vector<8x8xf32> -> vector<8x8xf32>
    %100 = arith.truncf %99 : vector<8x8xf32> to vector<8x8xbf16>
    %c1_53 = arith.constant 1 : index
    %c0_54 = arith.constant 0 : index
    %c0_55 = arith.constant 0 : index
    %101 = vector.load %arg12[%c1_53, %c0_54, %c0_55] : memref<4x8x32xbf16, #tpu.memory_space<vmem>>, vector<1x8x32xbf16>
    %102 = vector.shape_cast %101 : vector<1x8x32xbf16> to vector<8x32xbf16>
    %cst_56 = arith.constant dense<0.000000e+00> : vector<8x32xf32>
    %103 = tpu.matmul %100, %102, %cst_56 {dimension_numbers = #tpu.dot_dimension_numbers<[1], [0], [0], [1], [0, 0, 1, 1], [], []>} : vector<8x8xbf16>, vector<8x32xbf16>, vector<8x32xf32> -> vector<8x32xf32>
    %104 = arith.addf %70, %103 : vector<8x32xf32>
    %c2 = arith.constant 2 : index
    %c0_57 = arith.constant 0 : index
    %c0_58 = arith.constant 0 : index
    %105 = vector.load %arg6[%c2, %c0_57, %c0_58] : memref<4x32x8xbf16, #tpu.memory_space<vmem>>, vector<1x32x8xbf16>
    %106 = vector.shape_cast %105 : vector<1x32x8xbf16> to vector<32x8xbf16>
    %cst_59 = arith.constant dense<0.000000e+00> : vector<8x8xf32>
    %107 = tpu.matmul %29, %106, %cst_59 {dimension_numbers = #tpu.dot_dimension_numbers<[1], [0], [0], [1], [0, 0, 1, 1], [], []>} : vector<8x32xbf16>, vector<32x8xbf16>, vector<8x8xf32> -> vector<8x8xf32>
    %c2_60 = arith.constant 2 : index
    %c0_61 = arith.constant 0 : index
    %c0_62 = arith.constant 0 : index
    %108 = vector.load %arg7[%c2_60, %c0_61, %c0_62] : memref<4x1x8xf32, #tpu.memory_space<vmem>>, vector<1x1x8xf32>
    %109 = vector.shape_cast %108 : vector<1x1x8xf32> to vector<1x8xf32>
    %110 = vector.broadcast %109 : vector<1x8xf32> to vector<8x8xf32>
    %111 = arith.addf %107, %110 : vector<8x8xf32>
    %cst_63 = arith.constant 0.353553385 : f32
    %112 = vector.broadcast %cst_63 : f32 to vector<8x8xf32>
    %113 = arith.mulf %111, %112 : vector<8x8xf32>
    %114 = arith.truncf %113 : vector<8x8xf32> to vector<8x8xbf16>
    %c2_64 = arith.constant 2 : index
    %c0_65 = arith.constant 0 : index
    %c0_66 = arith.constant 0 : index
    %115 = vector.load %arg26[%c2_64, %c0_65, %c0_66] : memref<4x24x8xbf16, #tpu.memory_space<vmem>>, vector<1x24x8xbf16>
    %116 = vector.shape_cast %115 : vector<1x24x8xbf16> to vector<24x8xbf16>
    %cst_67 = arith.constant dense<0.000000e+00> : vector<8x24xf32>
    %117 = tpu.matmul %114, %116, %cst_67 {dimension_numbers = #tpu.dot_dimension_numbers<[1], [1], [0], [0], [0, 0, 1, 0], [], []>} : vector<8x8xbf16>, vector<24x8xbf16>, vector<8x24xf32> -> vector<8x24xf32>
    %118 = vector.broadcast %35 : vector<1x24xf32> to vector<8x24xf32>
    %119 = arith.addf %117, %118 : vector<8x24xf32>
    %cst_68 = arith.constant dense<0xFF800000> : vector<8xf32>
    %120 = vector.multi_reduction <maximumf>, %119, %cst_68 [1] : vector<8x24xf32> to vector<8xf32>
    %121 = vector.shape_cast %120 : vector<8xf32> to vector<8x1xf32>
    %122 = vector.broadcast %121 : vector<8x1xf32> to vector<8x24xf32>
    %123 = arith.subf %119, %122 : vector<8x24xf32>
    %124 = math.exp %123 : vector<8x24xf32>
    %cst_69 = arith.constant dense<0.000000e+00> : vector<8xf32>
    %125 = vector.multi_reduction <add>, %124, %cst_69 [1] : vector<8x24xf32> to vector<8xf32>
    %126 = vector.shape_cast %125 : vector<8xf32> to vector<8x1xf32>
    %127 = tpu.reciprocal %126 {approx = true} : vector<8x1xf32> -> vector<8x1xf32>
    %128 = vector.broadcast %127 : vector<8x1xf32> to vector<8x24xf32>
    %129 = arith.mulf %124, %128 : vector<8x24xf32>
    %130 = arith.truncf %129 : vector<8x24xf32> to vector<8x24xbf16>
    %c2_70 = arith.constant 2 : index
    %c0_71 = arith.constant 0 : index
    %c0_72 = arith.constant 0 : index
    %131 = vector.load %arg27[%c2_70, %c0_71, %c0_72] : memref<4x24x8xbf16, #tpu.memory_space<vmem>>, vector<1x24x8xbf16>
    %132 = vector.shape_cast %131 : vector<1x24x8xbf16> to vector<24x8xbf16>
    %cst_73 = arith.constant dense<0.000000e+00> : vector<8x8xf32>
    %133 = tpu.matmul %130, %132, %cst_73 {dimension_numbers = #tpu.dot_dimension_numbers<[1], [0], [0], [1], [0, 0, 1, 1], [], []>} : vector<8x24xbf16>, vector<24x8xbf16>, vector<8x8xf32> -> vector<8x8xf32>
    %134 = arith.truncf %133 : vector<8x8xf32> to vector<8x8xbf16>
    %c2_74 = arith.constant 2 : index
    %c0_75 = arith.constant 0 : index
    %c0_76 = arith.constant 0 : index
    %135 = vector.load %arg12[%c2_74, %c0_75, %c0_76] : memref<4x8x32xbf16, #tpu.memory_space<vmem>>, vector<1x8x32xbf16>
    %136 = vector.shape_cast %135 : vector<1x8x32xbf16> to vector<8x32xbf16>
    %cst_77 = arith.constant dense<0.000000e+00> : vector<8x32xf32>
    %137 = tpu.matmul %134, %136, %cst_77 {dimension_numbers = #tpu.dot_dimension_numbers<[1], [0], [0], [1], [0, 0, 1, 1], [], []>} : vector<8x8xbf16>, vector<8x32xbf16>, vector<8x32xf32> -> vector<8x32xf32>
    %138 = arith.addf %104, %137 : vector<8x32xf32>
    %c3 = arith.constant 3 : index
    %c0_78 = arith.constant 0 : index
    %c0_79 = arith.constant 0 : index
    %139 = vector.load %arg6[%c3, %c0_78, %c0_79] : memref<4x32x8xbf16, #tpu.memory_space<vmem>>, vector<1x32x8xbf16>
    %140 = vector.shape_cast %139 : vector<1x32x8xbf16> to vector<32x8xbf16>
    %cst_80 = arith.constant dense<0.000000e+00> : vector<8x8xf32>
    %141 = tpu.matmul %29, %140, %cst_80 {dimension_numbers = #tpu.dot_dimension_numbers<[1], [0], [0], [1], [0, 0, 1, 1], [], []>} : vector<8x32xbf16>, vector<32x8xbf16>, vector<8x8xf32> -> vector<8x8xf32>
    %c3_81 = arith.constant 3 : index
    %c0_82 = arith.constant 0 : index
    %c0_83 = arith.constant 0 : index
    %142 = vector.load %arg7[%c3_81, %c0_82, %c0_83] : memref<4x1x8xf32, #tpu.memory_space<vmem>>, vector<1x1x8xf32>
    %143 = vector.shape_cast %142 : vector<1x1x8xf32> to vector<1x8xf32>
    %144 = vector.broadcast %143 : vector<1x8xf32> to vector<8x8xf32>
    %145 = arith.addf %141, %144 : vector<8x8xf32>
    %cst_84 = arith.constant 0.353553385 : f32
    %146 = vector.broadcast %cst_84 : f32 to vector<8x8xf32>
    %147 = arith.mulf %145, %146 : vector<8x8xf32>
    %148 = arith.truncf %147 : vector<8x8xf32> to vector<8x8xbf16>
    %c3_85 = arith.constant 3 : index
    %c0_86 = arith.constant 0 : index
    %c0_87 = arith.constant 0 : index
    %149 = vector.load %arg26[%c3_85, %c0_86, %c0_87] : memref<4x24x8xbf16, #tpu.memory_space<vmem>>, vector<1x24x8xbf16>
    %150 = vector.shape_cast %149 : vector<1x24x8xbf16> to vector<24x8xbf16>
    %cst_88 = arith.constant dense<0.000000e+00> : vector<8x24xf32>
    %151 = tpu.matmul %148, %150, %cst_88 {dimension_numbers = #tpu.dot_dimension_numbers<[1], [1], [0], [0], [0, 0, 1, 0], [], []>} : vector<8x8xbf16>, vector<24x8xbf16>, vector<8x24xf32> -> vector<8x24xf32>
    %152 = vector.broadcast %35 : vector<1x24xf32> to vector<8x24xf32>
    %153 = arith.addf %151, %152 : vector<8x24xf32>
    %cst_89 = arith.constant dense<0xFF800000> : vector<8xf32>
    %154 = vector.multi_reduction <maximumf>, %153, %cst_89 [1] : vector<8x24xf32> to vector<8xf32>
    %155 = vector.shape_cast %154 : vector<8xf32> to vector<8x1xf32>
    %156 = vector.broadcast %155 : vector<8x1xf32> to vector<8x24xf32>
    %157 = arith.subf %153, %156 : vector<8x24xf32>
    %158 = math.exp %157 : vector<8x24xf32>
    %cst_90 = arith.constant dense<0.000000e+00> : vector<8xf32>
    %159 = vector.multi_reduction <add>, %158, %cst_90 [1] : vector<8x24xf32> to vector<8xf32>
    %160 = vector.shape_cast %159 : vector<8xf32> to vector<8x1xf32>
    %161 = tpu.reciprocal %160 {approx = true} : vector<8x1xf32> -> vector<8x1xf32>
    %162 = vector.broadcast %161 : vector<8x1xf32> to vector<8x24xf32>
    %163 = arith.mulf %158, %162 : vector<8x24xf32>
    %164 = arith.truncf %163 : vector<8x24xf32> to vector<8x24xbf16>
    %c3_91 = arith.constant 3 : index
    %c0_92 = arith.constant 0 : index
    %c0_93 = arith.constant 0 : index
    %165 = vector.load %arg27[%c3_91, %c0_92, %c0_93] : memref<4x24x8xbf16, #tpu.memory_space<vmem>>, vector<1x24x8xbf16>
    %166 = vector.shape_cast %165 : vector<1x24x8xbf16> to vector<24x8xbf16>
    %cst_94 = arith.constant dense<0.000000e+00> : vector<8x8xf32>
    %167 = tpu.matmul %164, %166, %cst_94 {dimension_numbers = #tpu.dot_dimension_numbers<[1], [0], [0], [1], [0, 0, 1, 1], [], []>} : vector<8x24xbf16>, vector<24x8xbf16>, vector<8x8xf32> -> vector<8x8xf32>
    %168 = arith.truncf %167 : vector<8x8xf32> to vector<8x8xbf16>
    %c3_95 = arith.constant 3 : index
    %c0_96 = arith.constant 0 : index
    %c0_97 = arith.constant 0 : index
    %169 = vector.load %arg12[%c3_95, %c0_96, %c0_97] : memref<4x8x32xbf16, #tpu.memory_space<vmem>>, vector<1x8x32xbf16>
    %170 = vector.shape_cast %169 : vector<1x8x32xbf16> to vector<8x32xbf16>
    %cst_98 = arith.constant dense<0.000000e+00> : vector<8x32xf32>
    %171 = tpu.matmul %168, %170, %cst_98 {dimension_numbers = #tpu.dot_dimension_numbers<[1], [0], [0], [1], [0, 0, 1, 1], [], []>} : vector<8x8xbf16>, vector<8x32xbf16>, vector<8x32xf32> -> vector<8x32xf32>
    %172 = arith.addf %138, %171 : vector<8x32xf32>
    %c0_99 = arith.constant 0 : index
    %c0_100 = arith.constant 0 : index
    %173 = vector.load %arg14[%c0_99, %c0_100] : memref<1x32xf32, #tpu.memory_space<vmem>>, vector<1x32xf32>
    %c0_101 = arith.constant 0 : index
    %c0_102 = arith.constant 0 : index
    %174 = vector.load %arg13[%c0_101, %c0_102] : memref<1x32xf32, #tpu.memory_space<vmem>>, vector<1x32xf32>
    %175 = vector.broadcast %174 : vector<1x32xf32> to vector<8x32xf32>
    %176 = arith.addf %172, %175 : vector<8x32xf32>
    %177 = vector.broadcast %173 : vector<1x32xf32> to vector<8x32xf32>
    %178 = arith.mulf %177, %176 : vector<8x32xf32>
    %179 = arith.addf %6, %178 : vector<8x32xf32>
    %c0_103 = arith.constant 0 : index
    %c0_104 = arith.constant 0 : index
    %180 = vector.load %arg15[%c0_103, %c0_104] : memref<1x32xf32, #tpu.memory_space<vmem>>, vector<1x32xf32>
    %c0_105 = arith.constant 0 : index
    %c0_106 = arith.constant 0 : index
    %181 = vector.load %arg16[%c0_105, %c0_106] : memref<1x32xf32, #tpu.memory_space<vmem>>, vector<1x32xf32>
    %cst_107 = arith.constant dense<0.000000e+00> : vector<8xf32>
    %182 = vector.multi_reduction <add>, %179, %cst_107 [1] : vector<8x32xf32> to vector<8xf32>
    %183 = vector.shape_cast %182 : vector<8xf32> to vector<8x1xf32>
    %cst_108 = arith.constant 3.200000e+01 : f32
    %184 = vector.broadcast %cst_108 : f32 to vector<8x1xf32>
    %185 = arith.divf %183, %184 : vector<8x1xf32>
    %186 = vector.broadcast %185 : vector<8x1xf32> to vector<8x32xf32>
    %187 = arith.subf %179, %186 : vector<8x32xf32>
    %188 = arith.mulf %187, %187 : vector<8x32xf32>
    %cst_109 = arith.constant dense<0.000000e+00> : vector<8xf32>
    %189 = vector.multi_reduction <add>, %188, %cst_109 [1] : vector<8x32xf32> to vector<8xf32>
    %190 = vector.shape_cast %189 : vector<8xf32> to vector<8x1xf32>
    %cst_110 = arith.constant 3.200000e+01 : f32
    %191 = vector.broadcast %cst_110 : f32 to vector<8x1xf32>
    %192 = arith.divf %190, %191 : vector<8x1xf32>
    %193 = vector.broadcast %185 : vector<8x1xf32> to vector<8x32xf32>
    %194 = arith.subf %179, %193 : vector<8x32xf32>
    %cst_111 = arith.constant 9.99999997E-7 : f32
    %195 = vector.broadcast %cst_111 : f32 to vector<8x1xf32>
    %196 = arith.addf %192, %195 : vector<8x1xf32>
    %197 = math.rsqrt %196 : vector<8x1xf32>
    %198 = vector.broadcast %197 : vector<8x1xf32> to vector<8x32xf32>
    %199 = arith.mulf %194, %198 : vector<8x32xf32>
    %200 = vector.broadcast %180 : vector<1x32xf32> to vector<8x32xf32>
    %201 = arith.mulf %199, %200 : vector<8x32xf32>
    %202 = vector.broadcast %181 : vector<1x32xf32> to vector<8x32xf32>
    %203 = arith.addf %201, %202 : vector<8x32xf32>
    %204 = arith.truncf %203 : vector<8x32xf32> to vector<8x32xbf16>
    %c0_112 = arith.constant 0 : index
    %c0_113 = arith.constant 0 : index
    %205 = vector.load %arg17[%c0_112, %c0_113] : memref<32x128xbf16, #tpu.memory_space<vmem>>, vector<32x128xbf16>
    %cst_114 = arith.constant dense<0.000000e+00> : vector<8x128xf32>
    %206 = tpu.matmul %204, %205, %cst_114 {dimension_numbers = #tpu.dot_dimension_numbers<[1], [0], [0], [1], [0, 0, 1, 1], [], []>} : vector<8x32xbf16>, vector<32x128xbf16>, vector<8x128xf32> -> vector<8x128xf32>
    %c0_115 = arith.constant 0 : index
    %c0_116 = arith.constant 0 : index
    %207 = vector.load %arg18[%c0_115, %c0_116] : memref<1x128xf32, #tpu.memory_space<vmem>>, vector<1x128xf32>
    %208 = vector.broadcast %207 : vector<1x128xf32> to vector<8x128xf32>
    %209 = arith.addf %206, %208 : vector<8x128xf32>
    %210 = arith.mulf %209, %209 : vector<8x128xf32>
    %211 = arith.mulf %209, %210 : vector<8x128xf32>
    %cst_117 = arith.constant 4.471500e-02 : f32
    %212 = vector.broadcast %cst_117 : f32 to vector<8x128xf32>
    %213 = arith.mulf %212, %211 : vector<8x128xf32>
    %214 = arith.addf %209, %213 : vector<8x128xf32>
    %cst_118 = arith.constant 0.797884583 : f32
    %215 = vector.broadcast %cst_118 : f32 to vector<8x128xf32>
    %216 = arith.mulf %215, %214 : vector<8x128xf32>
    %217 = math.tanh %216 : vector<8x128xf32>
    %cst_119 = arith.constant 1.000000e+00 : f32
    %218 = vector.broadcast %cst_119 : f32 to vector<8x128xf32>
    %219 = arith.addf %218, %217 : vector<8x128xf32>
    %cst_120 = arith.constant 5.000000e-01 : f32
    %220 = vector.broadcast %cst_120 : f32 to vector<8x128xf32>
    %221 = arith.mulf %220, %219 : vector<8x128xf32>
    %222 = arith.mulf %209, %221 : vector<8x128xf32>
    %223 = arith.truncf %222 : vector<8x128xf32> to vector<8x128xbf16>
    %c0_121 = arith.constant 0 : index
    %c0_122 = arith.constant 0 : index
    %224 = vector.load %arg19[%c0_121, %c0_122] : memref<128x32xbf16, #tpu.memory_space<vmem>>, vector<128x32xbf16>
    %cst_123 = arith.constant dense<0.000000e+00> : vector<8x32xf32>
    %225 = tpu.matmul %223, %224, %cst_123 {dimension_numbers = #tpu.dot_dimension_numbers<[1], [0], [0], [1], [0, 0, 1, 1], [], []>} : vector<8x128xbf16>, vector<128x32xbf16>, vector<8x32xf32> -> vector<8x32xf32>
    %c0_124 = arith.constant 0 : index
    %c0_125 = arith.constant 0 : index
    %226 = vector.load %arg20[%c0_124, %c0_125] : memref<1x32xf32, #tpu.memory_space<vmem>>, vector<1x32xf32>
    %227 = vector.broadcast %226 : vector<1x32xf32> to vector<8x32xf32>
    %228 = arith.addf %225, %227 : vector<8x32xf32>
    %c0_126 = arith.constant 0 : index
    %c0_127 = arith.constant 0 : index
    %229 = vector.load %arg21[%c0_126, %c0_127] : memref<1x32xf32, #tpu.memory_space<vmem>>, vector<1x32xf32>
    %230 = vector.broadcast %229 : vector<1x32xf32> to vector<8x32xf32>
    %231 = arith.mulf %230, %228 : vector<8x32xf32>
    %232 = arith.addf %179, %231 : vector<8x32xf32>
    %c0_128 = arith.constant 0 : index
    %c0_129 = arith.constant 0 : index
    %c0_130 = arith.constant 0 : index
    %233 = vector.load %arg24[%c0_128, %c0_129, %c0_130] : memref<1x8x32xf32, #tpu.memory_space<vmem>>, vector<1x8x32xf32>
    %234 = vector.shape_cast %233 : vector<1x8x32xf32> to vector<8x32xf32>
    %235 = vector.shape_cast %232 : vector<8x32xf32> to vector<1x8x32xf32>
    tpu.vector_store %arg24[%c0_128, %c0_129, %c0_130], %235 {strides = array<i32>} : memref<1x8x32xf32, #tpu.memory_space<vmem>>, vector<1x8x32xf32>,
    %c0_131 = arith.constant 0 : index
    %c0_132 = arith.constant 0 : index
    %236 = vector.load %arg22[%c0_131, %c0_132] : memref<1x32xf32, #tpu.memory_space<vmem>>, vector<1x32xf32>
    %c0_133 = arith.constant 0 : index
    %c0_134 = arith.constant 0 : index
    %237 = vector.load %arg23[%c0_133, %c0_134] : memref<1x32xf32, #tpu.memory_space<vmem>>, vector<1x32xf32>
    %cst_135 = arith.constant dense<0.000000e+00> : vector<8xf32>
    %238 = vector.multi_reduction <add>, %232, %cst_135 [1] : vector<8x32xf32> to vector<8xf32>
    %239 = vector.shape_cast %238 : vector<8xf32> to vector<8x1xf32>
    %cst_136 = arith.constant 3.200000e+01 : f32
    %240 = vector.broadcast %cst_136 : f32 to vector<8x1xf32>
    %241 = arith.divf %239, %240 : vector<8x1xf32>
    %242 = vector.broadcast %241 : vector<8x1xf32> to vector<8x32xf32>
    %243 = arith.subf %232, %242 : vector<8x32xf32>
    %244 = arith.mulf %243, %243 : vector<8x32xf32>
    %cst_137 = arith.constant dense<0.000000e+00> : vector<8xf32>
    %245 = vector.multi_reduction <add>, %244, %cst_137 [1] : vector<8x32xf32> to vector<8xf32>
    %246 = vector.shape_cast %245 : vector<8xf32> to vector<8x1xf32>
    %cst_138 = arith.constant 3.200000e+01 : f32
    %247 = vector.broadcast %cst_138 : f32 to vector<8x1xf32>
    %248 = arith.divf %246, %247 : vector<8x1xf32>
    %249 = vector.broadcast %241 : vector<8x1xf32> to vector<8x32xf32>
    %250 = arith.subf %232, %249 : vector<8x32xf32>
    %cst_139 = arith.constant 9.99999997E-7 : f32
    %251 = vector.broadcast %cst_139 : f32 to vector<8x1xf32>
    %252 = arith.addf %248, %251 : vector<8x1xf32>
    %253 = math.rsqrt %252 : vector<8x1xf32>
    %254 = vector.broadcast %253 : vector<8x1xf32> to vector<8x32xf32>
    %255 = arith.mulf %250, %254 : vector<8x32xf32>
    %256 = vector.broadcast %236 : vector<1x32xf32> to vector<8x32xf32>
    %257 = arith.mulf %255, %256 : vector<8x32xf32>
    %258 = vector.broadcast %237 : vector<1x32xf32> to vector<8x32xf32>
    %259 = arith.addf %257, %258 : vector<8x32xf32>
    %c0_140 = arith.constant 0 : index
    %c0_141 = arith.constant 0 : index
    %c0_142 = arith.constant 0 : index
    %260 = vector.load %arg25[%c0_140, %c0_141, %c0_142] : memref<1x8x32xf32, #tpu.memory_space<vmem>>, vector<1x8x32xf32>
    %261 = vector.shape_cast %260 : vector<1x8x32xf32> to vector<8x32xf32>
    %262 = vector.shape_cast %259 : vector<8x32xf32> to vector<1x8x32xf32>
    tpu.vector_store %arg25[%c0_140, %c0_141, %c0_142], %262 {strides = array<i32>} : memref<1x8x32xf32, #tpu.memory_space<vmem>>, vector<1x8x32xf32>,
    return
  }
  func.func @transform_0(%arg0: i32, %arg1: i32) -> (i32, i32, i32) {
    %c0_i32 = arith.constant 0 : i32
    %c0_i32_0 = arith.constant 0 : i32
    return %arg0, %arg1, %c0_i32 : i32, i32, i32
  }
  func.func @transform_1(%arg0: i32, %arg1: i32) -> (i32, i32, i32) {
    %c0_i32 = arith.constant 0 : i32
    %c0_i32_0 = arith.constant 0 : i32
    %c0_i32_1 = arith.constant 0 : i32
    return %arg0, %c0_i32, %c0_i32_0 : i32, i32, i32
  }
  func.func @transform_2(%arg0: i32, %arg1: i32) -> (i32, i32) {
    %c0_i32 = arith.constant 0 : i32
    %c0_i32_0 = arith.constant 0 : i32
    %c0_i32_1 = arith.constant 0 : i32
    return %c0_i32, %c0_i32_0 : i32, i32
  }
  func.func @transform_3(%arg0: i32, %arg1: i32) -> (i32, i32) {
    %c0_i32 = arith.constant 0 : i32
    %c0_i32_0 = arith.constant 0 : i32
    %c0_i32_1 = arith.constant 0 : i32
    return %c0_i32, %c0_i32_0 : i32, i32
  }
  func.func @transform_4(%arg0: i32, %arg1: i32) -> (i32, i32, i32) {
    %c0_i32 = arith.constant 0 : i32
    %c0_i32_0 = arith.constant 0 : i32
    %c0_i32_1 = arith.constant 0 : i32
    %c0_i32_2 = arith.constant 0 : i32
    return %c0_i32, %c0_i32_0, %c0_i32_1 : i32, i32, i32
  }
  func.func @transform_5(%arg0: i32, %arg1: i32) -> (i32, i32, i32) {
    %c0_i32 = arith.constant 0 : i32
    %c0_i32_0 = arith.constant 0 : i32
    %c0_i32_1 = arith.constant 0 : i32
    %c0_i32_2 = arith.constant 0 : i32
    return %c0_i32, %c0_i32_0, %c0_i32_1 : i32, i32, i32
  }
  func.func @transform_6(%arg0: i32, %arg1: i32) -> (i32, i32, i32) {
    %c0_i32 = arith.constant 0 : i32
    %c0_i32_0 = arith.constant 0 : i32
    %c0_i32_1 = arith.constant 0 : i32
    %c0_i32_2 = arith.constant 0 : i32
    return %c0_i32, %c0_i32_0, %c0_i32_1 : i32, i32, i32
  }
  func.func @transform_7(%arg0: i32, %arg1: i32) -> (i32, i32, i32) {
    %c0_i32 = arith.constant 0 : i32
    %c0_i32_0 = arith.constant 0 : i32
    %c0_i32_1 = arith.constant 0 : i32
    %c0_i32_2 = arith.constant 0 : i32
    return %c0_i32, %c0_i32_0, %c0_i32_1 : i32, i32, i32
  }
  func.func @transform_8(%arg0: i32, %arg1: i32) -> (i32, i32, i32) {
    %c0_i32 = arith.constant 0 : i32
    %c0_i32_0 = arith.constant 0 : i32
    %c0_i32_1 = arith.constant 0 : i32
    %c0_i32_2 = arith.constant 0 : i32
    return %c0_i32, %c0_i32_0, %c0_i32_1 : i32, i32, i32
  }
  func.func @transform_9(%arg0: i32, %arg1: i32) -> (i32, i32, i32) {
    %c0_i32 = arith.constant 0 : i32
    %c0_i32_0 = arith.constant 0 : i32
    %c0_i32_1 = arith.constant 0 : i32
    %c0_i32_2 = arith.constant 0 : i32
    return %c0_i32, %c0_i32_0, %c0_i32_1 : i32, i32, i32
  }
  func.func @transform_10(%arg0: i32, %arg1: i32) -> (i32, i32, i32) {
    %c0_i32 = arith.constant 0 : i32
    %c0_i32_0 = arith.constant 0 : i32
    %c0_i32_1 = arith.constant 0 : i32
    %c0_i32_2 = arith.constant 0 : i32
    return %c0_i32, %c0_i32_0, %c0_i32_1 : i32, i32, i32
  }
  func.func @transform_11(%arg0: i32, %arg1: i32) -> (i32, i32) {
    %c0_i32 = arith.constant 0 : i32
    %c0_i32_0 = arith.constant 0 : i32
    %c0_i32_1 = arith.constant 0 : i32
    return %c0_i32, %c0_i32_0 : i32, i32
  }
  func.func @transform_12(%arg0: i32, %arg1: i32) -> (i32, i32) {
    %c0_i32 = arith.constant 0 : i32
    %c0_i32_0 = arith.constant 0 : i32
    %c0_i32_1 = arith.constant 0 : i32
    return %c0_i32, %c0_i32_0 : i32, i32
  }
  func.func @transform_13(%arg0: i32, %arg1: i32) -> (i32, i32) {
    %c0_i32 = arith.constant 0 : i32
    %c0_i32_0 = arith.constant 0 : i32
    %c0_i32_1 = arith.constant 0 : i32
    return %c0_i32, %c0_i32_0 : i32, i32
  }
  func.func @transform_14(%arg0: i32, %arg1: i32) -> (i32, i32) {
    %c0_i32 = arith.constant 0 : i32
    %c0_i32_0 = arith.constant 0 : i32
    %c0_i32_1 = arith.constant 0 : i32
    return %c0_i32, %c0_i32_0 : i32, i32
  }
  func.func @transform_15(%arg0: i32, %arg1: i32) -> (i32, i32) {
    %c0_i32 = arith.constant 0 : i32
    %c0_i32_0 = arith.constant 0 : i32
    %c0_i32_1 = arith.constant 0 : i32
    return %c0_i32, %c0_i32_0 : i32, i32
  }
  func.func @transform_16(%arg0: i32, %arg1: i32) -> (i32, i32) {
    %c0_i32 = arith.constant 0 : i32
    %c0_i32_0 = arith.constant 0 : i32
    %c0_i32_1 = arith.constant 0 : i32
    return %c0_i32, %c0_i32_0 : i32, i32
  }
  func.func @transform_17(%arg0: i32, %arg1: i32) -> (i32, i32) {
    %c0_i32 = arith.constant 0 : i32
    %c0_i32_0 = arith.constant 0 : i32
    %c0_i32_1 = arith.constant 0 : i32
    return %c0_i32, %c0_i32_0 : i32, i32
  }
  func.func @transform_18(%arg0: i32, %arg1: i32) -> (i32, i32) {
    %c0_i32 = arith.constant 0 : i32
    %c0_i32_0 = arith.constant 0 : i32
    %c0_i32_1 = arith.constant 0 : i32
    return %c0_i32, %c0_i32_0 : i32, i32
  }
  func.func @transform_19(%arg0: i32, %arg1: i32) -> (i32, i32) {
    %c0_i32 = arith.constant 0 : i32
    %c0_i32_0 = arith.constant 0 : i32
    %c0_i32_1 = arith.constant 0 : i32
    return %c0_i32, %c0_i32_0 : i32, i32
  }
  func.func @transform_20(%arg0: i32, %arg1: i32) -> (i32, i32) {
    %c0_i32 = arith.constant 0 : i32
    %c0_i32_0 = arith.constant 0 : i32
    %c0_i32_1 = arith.constant 0 : i32
    return %c0_i32, %c0_i32_0 : i32, i32
  }
  func.func @transform_21(%arg0: i32, %arg1: i32) -> (i32, i32) {
    %c0_i32 = arith.constant 0 : i32
    %c0_i32_0 = arith.constant 0 : i32
    %c0_i32_1 = arith.constant 0 : i32
    return %c0_i32, %c0_i32_0 : i32, i32
  }
  func.func @transform_22(%arg0: i32, %arg1: i32) -> (i32, i32, i32) {
    %c0_i32 = arith.constant 0 : i32
    %c0_i32_0 = arith.constant 0 : i32
    return %arg0, %arg1, %c0_i32 : i32, i32, i32
  }
  func.func @transform_23(%arg0: i32, %arg1: i32) -> (i32, i32, i32) {
    %c0_i32 = arith.constant 0 : i32
    %c0_i32_0 = arith.constant 0 : i32
    return %arg0, %arg1, %c0_i32 : i32, i32, i32
  }
}

</mosaic_0001>

<llo_original>
// kernel: tpu_custom_call.1
$region0: #{tpu_custom_call.1}
  #allocation0 [shape = 'u32[]', space=smem, size = 0x4, offset = 0x4, fixed_abs, tag = 'smem constant byte address 0x4 - core index']
  #allocation1 [shape = 'u32[144,128]{1,0:T(1,128)}', space=vmem, size = 0x12000, scoped, tag = 'internal scratch']
  #allocation2 [shape = 'bf16[4,24,8]{2,1,0:T(8,128)(2,1)}', space=vmem, size = 0x6000, scoped, tag = 'scratch operand']
  #allocation3 [shape = 'bf16[4,24,8]{2,1,0:T(8,128)(2,1)}', space=vmem, size = 0x6000, scoped, tag = 'scratch operand']
  %s0 = inlined_call_operand.vmem [shape: f32[2,24,32], index: 0, kind: input, shape index: {}]
  %s1 = inlined_call_operand.vmem [shape: f32[2,24,32], index: 1, kind: input, shape index: {}]
  %s2 = inlined_call_operand.vmem [shape: f32[1,32], index: 2, kind: input, shape index: {}]
  %s3 = inlined_call_operand.vmem [shape: f32[1,32], index: 3, kind: input, shape index: {}]
  %s4 = inlined_call_operand.vmem [shape: bf16[4,32,8], index: 4, kind: input, shape index: {}]
  %s5 = inlined_call_operand.vmem [shape: f32[4,1,8], index: 5, kind: input, shape index: {}]
  %s6 = inlined_call_operand.vmem [shape: bf16[4,32,8], index: 6, kind: input, shape index: {}]
  %s7 = inlined_call_operand.vmem [shape: f32[4,1,8], index: 7, kind: input, shape index: {}]
  %s8 = inlined_call_operand.vmem [shape: bf16[4,32,8], index: 8, kind: input, shape index: {}]
  %s9 = inlined_call_operand.vmem [shape: f32[4,1,8], index: 9, kind: input, shape index: {}]
  %s10 = inlined_call_operand.vmem [shape: bf16[4,8,32], index: 10, kind: input, shape index: {}]
  %s11 = inlined_call_operand.vmem [shape: f32[1,32], index: 11, kind: input, shape index: {}]
  %s12 = inlined_call_operand.vmem [shape: f32[1,32], index: 12, kind: input, shape index: {}]
  %s13 = inlined_call_operand.vmem [shape: f32[1,32], index: 13, kind: input, shape index: {}]
  %s14 = inlined_call_operand.vmem [shape: f32[1,32], index: 14, kind: input, shape index: {}]
  %s15 = inlined_call_operand.vmem [shape: bf16[32,128], index: 15, kind: input, shape index: {}]
  %s16 = inlined_call_operand.vmem [shape: f32[1,128], index: 16, kind: input, shape index: {}]
  %s17 = inlined_call_operand.vmem [shape: bf16[128,32], index: 17, kind: input, shape index: {}]
  %s18 = inlined_call_operand.vmem [shape: f32[1,32], index: 18, kind: input, shape index: {}]
  %s19 = inlined_call_operand.vmem [shape: f32[1,32], index: 19, kind: input, shape index: {}]
  %s20 = inlined_call_operand.vmem [shape: f32[1,32], index: 20, kind: input, shape index: {}]
  %s21 = inlined_call_operand.vmem [shape: f32[1,32], index: 21, kind: input, shape index: {}]
  %s22 = inlined_call_operand.hbm [shape: f32[2,24,32], index: 22, kind: output, shape index: {0}]
  %s23 = inlined_call_operand.hbm [shape: f32[2,24,32], index: 23, kind: output, shape index: {1}]
  %24 = xla_tuple %s22, %s23
  %s25 = sld [smem:[#allocation0]]
  $region133: #{tpu_custom_call.1} parent=0
    _
  %s27 = ssub.s32 1, %s25
  %s28 = scalar_select 0, %s27, %s25
  $region1: #{tpu_custom_call.1} parent=0
    #allocation4 [shape = 'u8[8192]{0}', space=vmem, size = 0x2000, scoped, tag = 'output window, operand 0']
    #allocation5 [shape = 's32[2]{0}', space=sflag, size = 0x8, scoped, tag = 'scoped memory for tpu_custom_call.1']
    #allocation6 [shape = 'u8[8192]{0}', space=vmem, size = 0x2000, scoped, tag = 'output window, operand 1']
    #allocation7 [shape = 's32[2]{0}', space=sflag, size = 0x8, scoped, tag = 'scoped memory for tpu_custom_call.1']
    %29 = vsyncpa [#allocation5], 0
    %s30 = scalar_lea.sflag [#allocation5], 1
    %31 = vsyncpa %s30, 0
    %32 = vsyncpa [#allocation7], 0
    %s33 = scalar_lea.sflag [#allocation7], 1
    %34 = vsyncpa %s33, 0
    loop: start=0, step=1, limit=8
    $region2: #{tpu_custom_call.1} parent=1 // loop_pre_header
      _
    $region3: #{tpu_custom_call.1} parent=1 // loop_header
      %s36 = sphi 0, %s40
      %p37 = scmp.ge.s32.totalorder %s36, 8
      %s43 = sphi 0, %s55
      %s44 = sphi 0, %s51
      %s45 = sphi 0, %s43
      %s46 = sphi 0, %s44
      %s47 = sphi 0, %s45
      %s48 = sphi 0, %s46
      %s60 = sphi 0, %s62
      %s63 = sphi 0, %s60
      %s64 = sphi 0, %s63
      %s80 = sphi 0, %s64
      %s86 = sphi 0, %s88
      %s89 = sphi 0, %s86
      %s90 = sphi 0, %s89
      %s106 = sphi 0, %s90
      %s110 = sphi 0, %s110
      %s112 = sphi 0, %s110
      %s113 = sphi 0, %s112
      %s127 = sphi 0, %s113
      %s131 = sphi 0, %s131
      %s133 = sphi 0, %s131
      %s134 = sphi 0, %s133
      %s148 = sphi 0, %s134
      %s152 = sphi 0, %s152
      %s154 = sphi 0, %s152
      %s155 = sphi 0, %s154
      %s169 = sphi 0, %s155
      %s173 = sphi 0, %s173
      %s175 = sphi 0, %s173
      %s176 = sphi 0, %s175
      %s190 = sphi 0, %s176
      %s194 = sphi 0, %s194
      %s196 = sphi 0, %s194
      %s197 = sphi 0, %s196
      %s211 = sphi 0, %s197
      %s215 = sphi 0, %s215
      %s217 = sphi 0, %s215
      %s218 = sphi 0, %s217
      %s232 = sphi 0, %s218
      %s236 = sphi 0, %s236
      %s238 = sphi 0, %s236
      %s239 = sphi 0, %s238
      %s253 = sphi 0, %s239
      %s257 = sphi 0, %s257
      %s259 = sphi 0, %s257
      %s260 = sphi 0, %s259
      %s274 = sphi 0, %s260
      %s278 = sphi 0, %s278
      %s280 = sphi 0, %s278
      %s281 = sphi 0, %s280
      %s295 = sphi 0, %s281
      %s299 = sphi 0, %s299
      %s301 = sphi 0, %s299
      %s302 = sphi 0, %s301
      %s316 = sphi 0, %s302
      %s320 = sphi 0, %s320
      %s322 = sphi 0, %s320
      %s323 = sphi 0, %s322
      %s337 = sphi 0, %s323
      %s341 = sphi 0, %s341
      %s343 = sphi 0, %s341
      %s344 = sphi 0, %s343
      %s358 = sphi 0, %s344
      %s362 = sphi 0, %s362
      %s364 = sphi 0, %s362
      %s365 = sphi 0, %s364
      %s379 = sphi 0, %s365
      %s383 = sphi 0, %s383
      %s385 = sphi 0, %s383
      %s386 = sphi 0, %s385
      %s400 = sphi 0, %s386
      %s404 = sphi 0, %s404
      %s406 = sphi 0, %s404
      %s407 = sphi 0, %s406
      %s421 = sphi 0, %s407
      %s425 = sphi 0, %s425
      %s427 = sphi 0, %s425
      %s428 = sphi 0, %s427
      %s442 = sphi 0, %s428
      %s446 = sphi 0, %s446
      %s448 = sphi 0, %s446
      %s449 = sphi 0, %s448
      %s463 = sphi 0, %s449
      %s467 = sphi 0, %s467
      %s469 = sphi 0, %s467
      %s470 = sphi 0, %s469
      %s484 = sphi 0, %s470
      %s488 = sphi 0, %s488
      %s490 = sphi 0, %s488
      %s491 = sphi 0, %s490
      %s505 = sphi 0, %s491
      %s509 = sphi 0, %s509
      %s511 = sphi 0, %s509
      %s512 = sphi 0, %s511
      %s526 = sphi 0, %s512
      %s534 = sphi 0, %s536
      %s537 = sphi 0, %s534
      %s538 = sphi 0, %s537
      %s554 = sphi 0, %s538
      %s562 = sphi 0, %s564
      %s565 = sphi 0, %s562
      %s566 = sphi 0, %s565
      %s582 = sphi 0, %s566
    $region4: #{tpu_custom_call.1} parent=1 // loop_header_branch
      %39 = sbr.rel (%p37) target = $region8
    $region5: #{tpu_custom_call.1} parent=1 // loop_body
      %s41 = ssub.s32 %s36, 1
      %s42 = ssub.s32 %s36, 2
      %s49 = sadd.s32 1, %s44
      %p50 = scmp.ge.s32.totalorder %s49, 3
      %s51 = scalar_select %p50, 0, %s49
      %s52 = sadd.s32 1, %s43
      %s53 = scalar_select %p50, %s52, %s43
      %p54 = scmp.ge.s32.totalorder %s53, 2
      %s55 = scalar_select %p54, 0, %s53
      %s56 = ssub.s32 %s43, %s55
      %s57 = ssub.s32 %s44, %s51
      %s58 = sor.u32 %s56, %s57
      %p59 = scmp.eq.s32.totalorder %s58, 0
      %s61 = sadd.s32 %s60, 1
      %s62 = scalar_select %p59, %s60, %s61
      %p65 = pneg %p59
      %p66 = scmp.eq.s32.totalorder %s36, 5
      %p67 = por %p65, %p66
      %p68 = scmp.ne.s32.totalorder %s60, %s63
      %p69 = scmp.eq.s32.totalorder %s36, 0
      %p70 = por %p68, %p69
      %p71 = scmp.ne.s32.totalorder %s60, %s63
      %p72 = scmp.eq.s32.totalorder %s41, 5
      %p73 = por %p71, %p72
      %p74 = scmp.ne.s32.totalorder %s63, %s64
      %p75 = scmp.eq.s32.totalorder %s41, 0
      %p76 = por %p74, %p75
      %p77 = scmp.ne.s32.totalorder %s63, %s64
      %p78 = scmp.eq.s32.totalorder %s42, 5
      %p79 = por %p77, %p78
      %p81 = scmp.ne.s32.totalorder %s64, %s80
      %p82 = scmp.eq.s32.totalorder %s42, 0
      %p83 = por %p81, %p82
      %s84 = ssub.s32 %s43, %s55
      %p85 = scmp.eq.s32.totalorder %s84, 0
      %s87 = sadd.s32 %s86, 1
      %s88 = scalar_select %p85, %s86, %s87
      %p91 = pneg %p85
      %p92 = scmp.eq.s32.totalorder %s36, 5
      %p93 = por %p91, %p92
      %p94 = scmp.ne.s32.totalorder %s86, %s89
      %p95 = scmp.eq.s32.totalorder %s36, 0
      %p96 = por %p94, %p95
      %p97 = scmp.ne.s32.totalorder %s86, %s89
      %p98 = scmp.eq.s32.totalorder %s41, 5
      %p99 = por %p97, %p98
      %p100 = scmp.ne.s32.totalorder %s89, %s90
      %p101 = scmp.eq.s32.totalorder %s41, 0
      %p102 = por %p100, %p101
      %p103 = scmp.ne.s32.totalorder %s89, %s90
      %p104 = scmp.eq.s32.totalorder %s42, 5
      %p105 = por %p103, %p104
      %p107 = scmp.ne.s32.totalorder %s90, %s106
      %p108 = scmp.eq.s32.totalorder %s42, 0
      %p109 = por %p107, %p108
      %s111 = sadd.s32 %s110, 1
      %p114 = scmp.eq.s32.totalorder %s36, 5
      %p115 = scmp.ne.s32.totalorder %s110, %s112
      %p116 = scmp.eq.s32.totalorder %s36, 0
      %p117 = por %p115, %p116
      %p118 = scmp.ne.s32.totalorder %s110, %s112
      %p119 = scmp.eq.s32.totalorder %s41, 5
      %p120 = por %p118, %p119
      %p121 = scmp.ne.s32.totalorder %s112, %s113
      %p122 = scmp.eq.s32.totalorder %s41, 0
      %p123 = por %p121, %p122
      %p124 = scmp.ne.s32.totalorder %s112, %s113
      %p125 = scmp.eq.s32.totalorder %s42, 5
      %p126 = por %p124, %p125
      %p128 = scmp.ne.s32.totalorder %s113, %s127
      %p129 = scmp.eq.s32.totalorder %s42, 0
      %p130 = por %p128, %p129
      %s132 = sadd.s32 %s131, 1
      %p135 = scmp.eq.s32.totalorder %s36, 5
      %p136 = scmp.ne.s32.totalorder %s131, %s133
      %p137 = scmp.eq.s32.totalorder %s36, 0
      %p138 = por %p136, %p137
      %p139 = scmp.ne.s32.totalorder %s131, %s133
      %p140 = scmp.eq.s32.totalorder %s41, 5
      %p141 = por %p139, %p140
      %p142 = scmp.ne.s32.totalorder %s133, %s134
      %p143 = scmp.eq.s32.totalorder %s41, 0
      %p144 = por %p142, %p143
      %p145 = scmp.ne.s32.totalorder %s133, %s134
      %p146 = scmp.eq.s32.totalorder %s42, 5
      %p147 = por %p145, %p146
      %p149 = scmp.ne.s32.totalorder %s134, %s148
      %p150 = scmp.eq.s32.totalorder %s42, 0
      %p151 = por %p149, %p150
      %s153 = sadd.s32 %s152, 1
      %p156 = scmp.eq.s32.totalorder %s36, 5
      %p157 = scmp.ne.s32.totalorder %s152, %s154
      %p158 = scmp.eq.s32.totalorder %s36, 0
      %p159 = por %p157, %p158
      %p160 = scmp.ne.s32.totalorder %s152, %s154
      %p161 = scmp.eq.s32.totalorder %s41, 5
      %p162 = por %p160, %p161
      %p163 = scmp.ne.s32.totalorder %s154, %s155
      %p164 = scmp.eq.s32.totalorder %s41, 0
      %p165 = por %p163, %p164
      %p166 = scmp.ne.s32.totalorder %s154, %s155
      %p167 = scmp.eq.s32.totalorder %s42, 5
      %p168 = por %p166, %p167
      %p170 = scmp.ne.s32.totalorder %s155, %s169
      %p171 = scmp.eq.s32.totalorder %s42, 0
      %p172 = por %p170, %p171
      %s174 = sadd.s32 %s173, 1
      %p177 = scmp.eq.s32.totalorder %s36, 5
      %p178 = scmp.ne.s32.totalorder %s173, %s175
      %p179 = scmp.eq.s32.totalorder %s36, 0
      %p180 = por %p178, %p179
      %p181 = scmp.ne.s32.totalorder %s173, %s175
      %p182 = scmp.eq.s32.totalorder %s41, 5
      %p183 = por %p181, %p182
      %p184 = scmp.ne.s32.totalorder %s175, %s176
      %p185 = scmp.eq.s32.totalorder %s41, 0
      %p186 = por %p184, %p185
      %p187 = scmp.ne.s32.totalorder %s175, %s176
      %p188 = scmp.eq.s32.totalorder %s42, 5
      %p189 = por %p187, %p188
      %p191 = scmp.ne.s32.totalorder %s176, %s190
      %p192 = scmp.eq.s32.totalorder %s42, 0
      %p193 = por %p191, %p192
      %s195 = sadd.s32 %s194, 1
      %p198 = scmp.eq.s32.totalorder %s36, 5
      %p199 = scmp.ne.s32.totalorder %s194, %s196
      %p200 = scmp.eq.s32.totalorder %s36, 0
      %p201 = por %p199, %p200
      %p202 = scmp.ne.s32.totalorder %s194, %s196
      %p203 = scmp.eq.s32.totalorder %s41, 5
      %p204 = por %p202, %p203
      %p205 = scmp.ne.s32.totalorder %s196, %s197
      %p206 = scmp.eq.s32.totalorder %s41, 0
      %p207 = por %p205, %p206
      %p208 = scmp.ne.s32.totalorder %s196, %s197
      %p209 = scmp.eq.s32.totalorder %s42, 5
      %p210 = por %p208, %p209
      %p212 = scmp.ne.s32.totalorder %s197, %s211
      %p213 = scmp.eq.s32.totalorder %s42, 0
      %p214 = por %p212, %p213
      %s216 = sadd.s32 %s215, 1
      %p219 = scmp.eq.s32.totalorder %s36, 5
      %p220 = scmp.ne.s32.totalorder %s215, %s217
      %p221 = scmp.eq.s32.totalorder %s36, 0
      %p222 = por %p220, %p221
      %p223 = scmp.ne.s32.totalorder %s215, %s217
      %p224 = scmp.eq.s32.totalorder %s41, 5
      %p225 = por %p223, %p224
      %p226 = scmp.ne.s32.totalorder %s217, %s218
      %p227 = scmp.eq.s32.totalorder %s41, 0
      %p228 = por %p226, %p227
      %p229 = scmp.ne.s32.totalorder %s217, %s218
      %p230 = scmp.eq.s32.totalorder %s42, 5
      %p231 = por %p229, %p230
      %p233 = scmp.ne.s32.totalorder %s218, %s232
      %p234 = scmp.eq.s32.totalorder %s42, 0
      %p235 = por %p233, %p234
      %s237 = sadd.s32 %s236, 1
      %p240 = scmp.eq.s32.totalorder %s36, 5
      %p241 = scmp.ne.s32.totalorder %s236, %s238
      %p242 = scmp.eq.s32.totalorder %s36, 0
      %p243 = por %p241, %p242
      %p244 = scmp.ne.s32.totalorder %s236, %s238
      %p245 = scmp.eq.s32.totalorder %s41, 5
      %p246 = por %p244, %p245
      %p247 = scmp.ne.s32.totalorder %s238, %s239
      %p248 = scmp.eq.s32.totalorder %s41, 0
      %p249 = por %p247, %p248
      %p250 = scmp.ne.s32.totalorder %s238, %s239
      %p251 = scmp.eq.s32.totalorder %s42, 5
      %p252 = por %p250, %p251
      %p254 = scmp.ne.s32.totalorder %s239, %s253
      %p255 = scmp.eq.s32.totalorder %s42, 0
      %p256 = por %p254, %p255
      %s258 = sadd.s32 %s257, 1
      %p261 = scmp.eq.s32.totalorder %s36, 5
      %p262 = scmp.ne.s32.totalorder %s257, %s259
      %p263 = scmp.eq.s32.totalorder %s36, 0
      %p264 = por %p262, %p263
      %p265 = scmp.ne.s32.totalorder %s257, %s259
      %p266 = scmp.eq.s32.totalorder %s41, 5
      %p267 = por %p265, %p266
      %p268 = scmp.ne.s32.totalorder %s259, %s260
      %p269 = scmp.eq.s32.totalorder %s41, 0
      %p270 = por %p268, %p269
      %p271 = scmp.ne.s32.totalorder %s259, %s260
      %p272 = scmp.eq.s32.totalorder %s42, 5
      %p273 = por %p271, %p272
      %p275 = scmp.ne.s32.totalorder %s260, %s274
      %p276 = scmp.eq.s32.totalorder %s42, 0
      %p277 = por %p275, %p276
      %s279 = sadd.s32 %s278, 1
      %p282 = scmp.eq.s32.totalorder %s36, 5
      %p283 = scmp.ne.s32.totalorder %s278, %s280
      %p284 = scmp.eq.s32.totalorder %s36, 0
      %p285 = por %p283, %p284
      %p286 = scmp.ne.s32.totalorder %s278, %s280
      %p287 = scmp.eq.s32.totalorder %s41, 5
      %p288 = por %p286, %p287
      %p289 = scmp.ne.s32.totalorder %s280, %s281
      %p290 = scmp.eq.s32.totalorder %s41, 0
      %p291 = por %p289, %p290
      %p292 = scmp.ne.s32.totalorder %s280, %s281
      %p293 = scmp.eq.s32.totalorder %s42, 5
      %p294 = por %p292, %p293
      %p296 = scmp.ne.s32.totalorder %s281, %s295
      %p297 = scmp.eq.s32.totalorder %s42, 0
      %p298 = por %p296, %p297
      %s300 = sadd.s32 %s299, 1
      %p303 = scmp.eq.s32.totalorder %s36, 5
      %p304 = scmp.ne.s32.totalorder %s299, %s301
      %p305 = scmp.eq.s32.totalorder %s36, 0
      %p306 = por %p304, %p305
      %p307 = scmp.ne.s32.totalorder %s299, %s301
      %p308 = scmp.eq.s32.totalorder %s41, 5
      %p309 = por %p307, %p308
      %p310 = scmp.ne.s32.totalorder %s301, %s302
      %p311 = scmp.eq.s32.totalorder %s41, 0
      %p312 = por %p310, %p311
      %p313 = scmp.ne.s32.totalorder %s301, %s302
      %p314 = scmp.eq.s32.totalorder %s42, 5
      %p315 = por %p313, %p314
      %p317 = scmp.ne.s32.totalorder %s302, %s316
      %p318 = scmp.eq.s32.totalorder %s42, 0
      %p319 = por %p317, %p318
      %s321 = sadd.s32 %s320, 1
      %p324 = scmp.eq.s32.totalorder %s36, 5
      %p325 = scmp.ne.s32.totalorder %s320, %s322
      %p326 = scmp.eq.s32.totalorder %s36, 0
      %p327 = por %p325, %p326
      %p328 = scmp.ne.s32.totalorder %s320, %s322
      %p329 = scmp.eq.s32.totalorder %s41, 5
      %p330 = por %p328, %p329
      %p331 = scmp.ne.s32.totalorder %s322, %s323
      %p332 = scmp.eq.s32.totalorder %s41, 0
      %p333 = por %p331, %p332
      %p334 = scmp.ne.s32.totalorder %s322, %s323
      %p335 = scmp.eq.s32.totalorder %s42, 5
      %p336 = por %p334, %p335
      %p338 = scmp.ne.s32.totalorder %s323, %s337
      %p339 = scmp.eq.s32.totalorder %s42, 0
      %p340 = por %p338, %p339
      %s342 = sadd.s32 %s341, 1
      %p345 = scmp.eq.s32.totalorder %s36, 5
      %p346 = scmp.ne.s32.totalorder %s341, %s343
      %p347 = scmp.eq.s32.totalorder %s36, 0
      %p348 = por %p346, %p347
      %p349 = scmp.ne.s32.totalorder %s341, %s343
      %p350 = scmp.eq.s32.totalorder %s41, 5
      %p351 = por %p349, %p350
      %p352 = scmp.ne.s32.totalorder %s343, %s344
      %p353 = scmp.eq.s32.totalorder %s41, 0
      %p354 = por %p352, %p353
      %p355 = scmp.ne.s32.totalorder %s343, %s344
      %p356 = scmp.eq.s32.totalorder %s42, 5
      %p357 = por %p355, %p356
      %p359 = scmp.ne.s32.totalorder %s344, %s358
      %p360 = scmp.eq.s32.totalorder %s42, 0
      %p361 = por %p359, %p360
      %s363 = sadd.s32 %s362, 1
      %p366 = scmp.eq.s32.totalorder %s36, 5
      %p367 = scmp.ne.s32.totalorder %s362, %s364
      %p368 = scmp.eq.s32.totalorder %s36, 0
      %p369 = por %p367, %p368
      %p370 = scmp.ne.s32.totalorder %s362, %s364
      %p371 = scmp.eq.s32.totalorder %s41, 5
      %p372 = por %p370, %p371
      %p373 = scmp.ne.s32.totalorder %s364, %s365
      %p374 = scmp.eq.s32.totalorder %s41, 0
      %p375 = por %p373, %p374
      %p376 = scmp.ne.s32.totalorder %s364, %s365
      %p377 = scmp.eq.s32.totalorder %s42, 5
      %p378 = por %p376, %p377
      %p380 = scmp.ne.s32.totalorder %s365, %s379
      %p381 = scmp.eq.s32.totalorder %s42, 0
      %p382 = por %p380, %p381
      %s384 = sadd.s32 %s383, 1
      %p387 = scmp.eq.s32.totalorder %s36, 5
      %p388 = scmp.ne.s32.totalorder %s383, %s385
      %p389 = scmp.eq.s32.totalorder %s36, 0
      %p390 = por %p388, %p389
      %p391 = scmp.ne.s32.totalorder %s383, %s385
      %p392 = scmp.eq.s32.totalorder %s41, 5
      %p393 = por %p391, %p392
      %p394 = scmp.ne.s32.totalorder %s385, %s386
      %p395 = scmp.eq.s32.totalorder %s41, 0
      %p396 = por %p394, %p395
      %p397 = scmp.ne.s32.totalorder %s385, %s386
      %p398 = scmp.eq.s32.totalorder %s42, 5
      %p399 = por %p397, %p398
      %p401 = scmp.ne.s32.totalorder %s386, %s400
      %p402 = scmp.eq.s32.totalorder %s42, 0
      %p403 = por %p401, %p402
      %s405 = sadd.s32 %s404, 1
      %p408 = scmp.eq.s32.totalorder %s36, 5
      %p409 = scmp.ne.s32.totalorder %s404, %s406
      %p410 = scmp.eq.s32.totalorder %s36, 0
      %p411 = por %p409, %p410
      %p412 = scmp.ne.s32.totalorder %s404, %s406
      %p413 = scmp.eq.s32.totalorder %s41, 5
      %p414 = por %p412, %p413
      %p415 = scmp.ne.s32.totalorder %s406, %s407
      %p416 = scmp.eq.s32.totalorder %s41, 0
      %p417 = por %p415, %p416
      %p418 = scmp.ne.s32.totalorder %s406, %s407
      %p419 = scmp.eq.s32.totalorder %s42, 5
      %p420 = por %p418, %p419
      %p422 = scmp.ne.s32.totalorder %s407, %s421
      %p423 = scmp.eq.s32.totalorder %s42, 0
      %p424 = por %p422, %p423
      %s426 = sadd.s32 %s425, 1
      %p429 = scmp.eq.s32.totalorder %s36, 5
      %p430 = scmp.ne.s32.totalorder %s425, %s427
      %p431 = scmp.eq.s32.totalorder %s36, 0
      %p432 = por %p430, %p431
      %p433 = scmp.ne.s32.totalorder %s425, %s427
      %p434 = scmp.eq.s32.totalorder %s41, 5
      %p435 = por %p433, %p434
      %p436 = scmp.ne.s32.totalorder %s427, %s428
      %p437 = scmp.eq.s32.totalorder %s41, 0
      %p438 = por %p436, %p437
      %p439 = scmp.ne.s32.totalorder %s427, %s428
      %p440 = scmp.eq.s32.totalorder %s42, 5
      %p441 = por %p439, %p440
      %p443 = scmp.ne.s32.totalorder %s428, %s442
      %p444 = scmp.eq.s32.totalorder %s42, 0
      %p445 = por %p443, %p444
      %s447 = sadd.s32 %s446, 1
      %p450 = scmp.eq.s32.totalorder %s36, 5
      %p451 = scmp.ne.s32.totalorder %s446, %s448
      %p452 = scmp.eq.s32.totalorder %s36, 0
      %p453 = por %p451, %p452
      %p454 = scmp.ne.s32.totalorder %s446, %s448
      %p455 = scmp.eq.s32.totalorder %s41, 5
      %p456 = por %p454, %p455
      %p457 = scmp.ne.s32.totalorder %s448, %s449
      %p458 = scmp.eq.s32.totalorder %s41, 0
      %p459 = por %p457, %p458
      %p460 = scmp.ne.s32.totalorder %s448, %s449
      %p461 = scmp.eq.s32.totalorder %s42, 5
      %p462 = por %p460, %p461
      %p464 = scmp.ne.s32.totalorder %s449, %s463
      %p465 = scmp.eq.s32.totalorder %s42, 0
      %p466 = por %p464, %p465
      %s468 = sadd.s32 %s467, 1
      %p471 = scmp.eq.s32.totalorder %s36, 5
      %p472 = scmp.ne.s32.totalorder %s467, %s469
      %p473 = scmp.eq.s32.totalorder %s36, 0
      %p474 = por %p472, %p473
      %p475 = scmp.ne.s32.totalorder %s467, %s469
      %p476 = scmp.eq.s32.totalorder %s41, 5
      %p477 = por %p475, %p476
      %p478 = scmp.ne.s32.totalorder %s469, %s470
      %p479 = scmp.eq.s32.totalorder %s41, 0
      %p480 = por %p478, %p479
      %p481 = scmp.ne.s32.totalorder %s469, %s470
      %p482 = scmp.eq.s32.totalorder %s42, 5
      %p483 = por %p481, %p482
      %p485 = scmp.ne.s32.totalorder %s470, %s484
      %p486 = scmp.eq.s32.totalorder %s42, 0
      %p487 = por %p485, %p486
      %s489 = sadd.s32 %s488, 1
      %p492 = scmp.eq.s32.totalorder %s36, 5
      %p493 = scmp.ne.s32.totalorder %s488, %s490
      %p494 = scmp.eq.s32.totalorder %s36, 0
      %p495 = por %p493, %p494
      %p496 = scmp.ne.s32.totalorder %s488, %s490
      %p497 = scmp.eq.s32.totalorder %s41, 5
      %p498 = por %p496, %p497
      %p499 = scmp.ne.s32.totalorder %s490, %s491
      %p500 = scmp.eq.s32.totalorder %s41, 0
      %p501 = por %p499, %p500
      %p502 = scmp.ne.s32.totalorder %s490, %s491
      %p503 = scmp.eq.s32.totalorder %s42, 5
      %p504 = por %p502, %p503
      %p506 = scmp.ne.s32.totalorder %s491, %s505
      %p507 = scmp.eq.s32.totalorder %s42, 0
      %p508 = por %p506, %p507
      %s510 = sadd.s32 %s509, 1
      %p513 = scmp.eq.s32.totalorder %s36, 5
      %p514 = scmp.ne.s32.totalorder %s509, %s511
      %p515 = scmp.eq.s32.totalorder %s36, 0
      %p516 = por %p514, %p515
      %p517 = scmp.ne.s32.totalorder %s509, %s511
      %p518 = scmp.eq.s32.totalorder %s41, 5
      %p519 = por %p517, %p518
      %p520 = scmp.ne.s32.totalorder %s511, %s512
      %p521 = scmp.eq.s32.totalorder %s41, 0
      %p522 = por %p520, %p521
      %p523 = scmp.ne.s32.totalorder %s511, %s512
      %p524 = scmp.eq.s32.totalorder %s42, 5
      %p525 = por %p523, %p524
      %p527 = scmp.ne.s32.totalorder %s512, %s526
      %p528 = scmp.eq.s32.totalorder %s42, 0
      %p529 = por %p527, %p528
      %s530 = ssub.s32 %s43, %s55
      %s531 = ssub.s32 %s44, %s51
      %s532 = sor.u32 %s530, %s531
      %p533 = scmp.eq.s32.totalorder %s532, 0
      %s535 = sadd.s32 %s534, 1
      %s536 = scalar_select %p533, %s534, %s535
      %p539 = pneg %p533
      %p540 = scmp.eq.s32.totalorder %s36, 5
      %p541 = por %p539, %p540
      %p542 = scmp.ne.s32.totalorder %s534, %s537
      %p543 = scmp.eq.s32.totalorder %s36, 0
      %p544 = por %p542, %p543
      %p545 = scmp.ne.s32.totalorder %s534, %s537
      %p546 = scmp.eq.s32.totalorder %s41, 5
      %p547 = por %p545, %p546
      %p548 = scmp.ne.s32.totalorder %s537, %s538
      %p549 = scmp.eq.s32.totalorder %s41, 0
      %p550 = por %p548, %p549
      %p551 = scmp.ne.s32.totalorder %s537, %s538
      %p552 = scmp.eq.s32.totalorder %s42, 5
      %p553 = por %p551, %p552
      %p555 = scmp.ne.s32.totalorder %s538, %s554
      %p556 = scmp.eq.s32.totalorder %s42, 0
      %p557 = por %p555, %p556
      %s558 = ssub.s32 %s43, %s55
      %s559 = ssub.s32 %s44, %s51
      %s560 = sor.u32 %s558, %s559
      %p561 = scmp.eq.s32.totalorder %s560, 0
      %s563 = sadd.s32 %s562, 1
      %s564 = scalar_select %p561, %s562, %s563
      %p567 = pneg %p561
      %p568 = scmp.eq.s32.totalorder %s36, 5
      %p569 = por %p567, %p568
      %p570 = scmp.ne.s32.totalorder %s562, %s565
      %p571 = scmp.eq.s32.totalorder %s36, 0
      %p572 = por %p570, %p571
      %p573 = scmp.ne.s32.totalorder %s562, %s565
      %p574 = scmp.eq.s32.totalorder %s41, 5
      %p575 = por %p573, %p574
      %p576 = scmp.ne.s32.totalorder %s565, %s566
      %p577 = scmp.eq.s32.totalorder %s41, 0
      %p578 = por %p576, %p577
      %p579 = scmp.ne.s32.totalorder %s565, %s566
      %p580 = scmp.eq.s32.totalorder %s42, 5
      %p581 = por %p579, %p580
      %p583 = scmp.ne.s32.totalorder %s566, %s582
      %p584 = scmp.eq.s32.totalorder %s42, 0
      %p585 = por %p583, %p584
      %p586 = scmp.le.s32.totalorder 1, %s36
      %p587 = scmp.lt.s32.totalorder %s36, 7
      %p588 = pnand %p586, %p587
      %p589 = pneg %p588
      // Predicated region
      $region9: #{tpu_custom_call.1} parent=5 // pred_check
        _
      $region10: #{tpu_custom_call.1} parent=5 // pred_check_branch
        %591 = sbr.rel (%p588) target = $region12
      $region11: #{tpu_custom_call.1} parent=5 // pred_region
        %s592 = ssub.s32 %s36, 1
        // Predicated region
        $region13: #{tpu_custom_call.1} parent=11 // pred_check
          %p593 = pneg %p123
        $region14: #{tpu_custom_call.1} parent=11 // pred_check_branch
          %595 = sbr.rel (%p593) target = $region16
        $region15: #{tpu_custom_call.1} parent=11 // pred_region
          _
        $region16: #{tpu_custom_call.1} parent=11 // pred_fallthru
          _
        // Predicated region
        $region17: #{tpu_custom_call.1} parent=11 // pred_check
          %p596 = pneg %p144
        $region18: #{tpu_custom_call.1} parent=11 // pred_check_branch
          %598 = sbr.rel (%p596) target = $region20
        $region19: #{tpu_custom_call.1} parent=11 // pred_region
          _
        $region20: #{tpu_custom_call.1} parent=11 // pred_fallthru
          _
        // Predicated region
        $region21: #{tpu_custom_call.1} parent=11 // pred_check
          %p599 = pneg %p165
        $region22: #{tpu_custom_call.1} parent=11 // pred_check_branch
          %601 = sbr.rel (%p599) target = $region24
        $region23: #{tpu_custom_call.1} parent=11 // pred_region
          _
        $region24: #{tpu_custom_call.1} parent=11 // pred_fallthru
          _
        // Predicated region
        $region25: #{tpu_custom_call.1} parent=11 // pred_check
          %p602 = pneg %p186
        $region26: #{tpu_custom_call.1} parent=11 // pred_check_branch
          %604 = sbr.rel (%p602) target = $region28
        $region27: #{tpu_custom_call.1} parent=11 // pred_region
          _
        $region28: #{tpu_custom_call.1} parent=11 // pred_fallthru
          _
        // Predicated region
        $region29: #{tpu_custom_call.1} parent=11 // pred_check
          %p605 = pneg %p207
        $region30: #{tpu_custom_call.1} parent=11 // pred_check_branch
          %607 = sbr.rel (%p605) target = $region32
        $region31: #{tpu_custom_call.1} parent=11 // pred_region
          _
        $region32: #{tpu_custom_call.1} parent=11 // pred_fallthru
          _
        // Predicated region
        $region33: #{tpu_custom_call.1} parent=11 // pred_check
          %p608 = pneg %p228
        $region34: #{tpu_custom_call.1} parent=11 // pred_check_branch
          %610 = sbr.rel (%p608) target = $region36
        $region35: #{tpu_custom_call.1} parent=11 // pred_region
          _
        $region36: #{tpu_custom_call.1} parent=11 // pred_fallthru
          _
        // Predicated region
        $region37: #{tpu_custom_call.1} parent=11 // pred_check
          %p611 = pneg %p249
        $region38: #{tpu_custom_call.1} parent=11 // pred_check_branch
          %613 = sbr.rel (%p611) target = $region40
        $region39: #{tpu_custom_call.1} parent=11 // pred_region
          _
        $region40: #{tpu_custom_call.1} parent=11 // pred_fallthru
          _
        // Predicated region
        $region41: #{tpu_custom_call.1} parent=11 // pred_check
          %p614 = pneg %p270
        $region42: #{tpu_custom_call.1} parent=11 // pred_check_branch
          %616 = sbr.rel (%p614) target = $region44
        $region43: #{tpu_custom_call.1} parent=11 // pred_region
          _
        $region44: #{tpu_custom_call.1} parent=11 // pred_fallthru
          _
        // Predicated region
        $region45: #{tpu_custom_call.1} parent=11 // pred_check
          %p617 = pneg %p291
        $region46: #{tpu_custom_call.1} parent=11 // pred_check_branch
          %619 = sbr.rel (%p617) target = $region48
        $region47: #{tpu_custom_call.1} parent=11 // pred_region
          _
        $region48: #{tpu_custom_call.1} parent=11 // pred_fallthru
          _
        // Predicated region
        $region49: #{tpu_custom_call.1} parent=11 // pred_check
          %p620 = pneg %p312
        $region50: #{tpu_custom_call.1} parent=11 // pred_check_branch
          %622 = sbr.rel (%p620) target = $region52
        $region51: #{tpu_custom_call.1} parent=11 // pred_region
          _
        $region52: #{tpu_custom_call.1} parent=11 // pred_fallthru
          _
        // Predicated region
        $region53: #{tpu_custom_call.1} parent=11 // pred_check
          %p623 = pneg %p333
        $region54: #{tpu_custom_call.1} parent=11 // pred_check_branch
          %625 = sbr.rel (%p623) target = $region56
        $region55: #{tpu_custom_call.1} parent=11 // pred_region
          _
        $region56: #{tpu_custom_call.1} parent=11 // pred_fallthru
          _
        // Predicated region
        $region57: #{tpu_custom_call.1} parent=11 // pred_check
          %p626 = pneg %p354
        $region58: #{tpu_custom_call.1} parent=11 // pred_check_branch
          %628 = sbr.rel (%p626) target = $region60
        $region59: #{tpu_custom_call.1} parent=11 // pred_region
          _
        $region60: #{tpu_custom_call.1} parent=11 // pred_fallthru
          _
        // Predicated region
        $region61: #{tpu_custom_call.1} parent=11 // pred_check
          %p629 = pneg %p375
        $region62: #{tpu_custom_call.1} parent=11 // pred_check_branch
          %631 = sbr.rel (%p629) target = $region64
        $region63: #{tpu_custom_call.1} parent=11 // pred_region
          _
        $region64: #{tpu_custom_call.1} parent=11 // pred_fallthru
          _
        // Predicated region
        $region65: #{tpu_custom_call.1} parent=11 // pred_check
          %p632 = pneg %p396
        $region66: #{tpu_custom_call.1} parent=11 // pred_check_branch
          %634 = sbr.rel (%p632) target = $region68
        $region67: #{tpu_custom_call.1} parent=11 // pred_region
          _
        $region68: #{tpu_custom_call.1} parent=11 // pred_fallthru
          _
        // Predicated region
        $region69: #{tpu_custom_call.1} parent=11 // pred_check
          %p635 = pneg %p417
        $region70: #{tpu_custom_call.1} parent=11 // pred_check_branch
          %637 = sbr.rel (%p635) target = $region72
        $region71: #{tpu_custom_call.1} parent=11 // pred_region
          _
        $region72: #{tpu_custom_call.1} parent=11 // pred_fallthru
          _
        // Predicated region
        $region73: #{tpu_custom_call.1} parent=11 // pred_check
          %p638 = pneg %p438
        $region74: #{tpu_custom_call.1} parent=11 // pred_check_branch
          %640 = sbr.rel (%p638) target = $region76
        $region75: #{tpu_custom_call.1} parent=11 // pred_region
          _
        $region76: #{tpu_custom_call.1} parent=11 // pred_fallthru
          _
        // Predicated region
        $region77: #{tpu_custom_call.1} parent=11 // pred_check
          %p641 = pneg %p459
        $region78: #{tpu_custom_call.1} parent=11 // pred_check_branch
          %643 = sbr.rel (%p641) target = $region80
        $region79: #{tpu_custom_call.1} parent=11 // pred_region
          _
        $region80: #{tpu_custom_call.1} parent=11 // pred_fallthru
          _
        // Predicated region
        $region81: #{tpu_custom_call.1} parent=11 // pred_check
          %p644 = pneg %p480
        $region82: #{tpu_custom_call.1} parent=11 // pred_check_branch
          %646 = sbr.rel (%p644) target = $region84
        $region83: #{tpu_custom_call.1} parent=11 // pred_region
          _
        $region84: #{tpu_custom_call.1} parent=11 // pred_fallthru
          _
        // Predicated region
        $region85: #{tpu_custom_call.1} parent=11 // pred_check
          %p647 = pneg %p501
        $region86: #{tpu_custom_call.1} parent=11 // pred_check_branch
          %649 = sbr.rel (%p647) target = $region88
        $region87: #{tpu_custom_call.1} parent=11 // pred_region
          _
        $region88: #{tpu_custom_call.1} parent=11 // pred_fallthru
          _
        // Predicated region
        $region89: #{tpu_custom_call.1} parent=11 // pred_check
          %p650 = pneg %p522
        $region90: #{tpu_custom_call.1} parent=11 // pred_check_branch
          %652 = sbr.rel (%p650) target = $region92
        $region91: #{tpu_custom_call.1} parent=11 // pred_region
          _
        $region92: #{tpu_custom_call.1} parent=11 // pred_fallthru
          _
      $region12: #{tpu_custom_call.1} parent=5 // pred_fallthru
        _
      %p653 = scmp.lt.s32.totalorder %s36, 6
      // Predicated region
      $region93: #{tpu_custom_call.1} parent=5 // pred_check
        %p654 = pneg %p653
      $region94: #{tpu_custom_call.1} parent=5 // pred_check_branch
        %656 = sbr.rel (%p654) target = $region96
      $region95: #{tpu_custom_call.1} parent=5 // pred_region
        // Predicated region
        $region97: #{tpu_custom_call.1} parent=95 // pred_check
          %p657 = pneg %p70
        $region98: #{tpu_custom_call.1} parent=95 // pred_check_branch
          %659 = sbr.rel (%p657) target = $region100
        $region99: #{tpu_custom_call.1} parent=95 // pred_region
          %p660 = scmp.lt.s32.totalorder %s43, 1
          %s661 = scalar_select %p660, %s43, 1
          %p662 = scmp.lt.s32.totalorder %s44, 2
          %s663 = scalar_select %p662, %s44, 2
          %s664 = smul.addr %s661, 3
          %s665 = sadd.s32 %s663, %s664
          %s666 = smul.addr %s665, 8
          %s667 = scalar_lea.vmem %s0, %s666
        $region100: #{tpu_custom_call.1} parent=95 // pred_fallthru
          _
        // Predicated region
        $region101: #{tpu_custom_call.1} parent=95 // pred_check
          %p668 = pneg %p96
        $region102: #{tpu_custom_call.1} parent=95 // pred_check_branch
          %670 = sbr.rel (%p668) target = $region104
        $region103: #{tpu_custom_call.1} parent=95 // pred_region
          %p671 = scmp.lt.s32.totalorder %s43, 1
          %s672 = scalar_select %p671, %s43, 1
          %s673 = smul.addr %s672, 3
          %s674 = smul.addr %s673, 8
          %s675 = scalar_lea.vmem %s1, %s674
        $region104: #{tpu_custom_call.1} parent=95 // pred_fallthru
          _
      $region96: #{tpu_custom_call.1} parent=5 // pred_fallthru
        _
      %p676 = scmp.le.s32.totalorder 1, %s36
      %p677 = scmp.lt.s32.totalorder %s36, 7
      %p678 = pnand %p676, %p677
      %p679 = pneg %p678
      // Predicated region
      $region105: #{tpu_custom_call.1} parent=5 // pred_check
        _
      $region106: #{tpu_custom_call.1} parent=5 // pred_check_branch
        %681 = sbr.rel (%p678) target = $region108
      $region107: #{tpu_custom_call.1} parent=5 // pred_region
        %s682 = ssub.s32 %s36, 1
        %p683 = scmp.lt.s32.totalorder %s45, 1
        %s684 = scalar_select %p683, %s45, 1
        %p685 = scmp.lt.s32.totalorder %s46, 2
        %s686 = scalar_select %p685, %s46, 2
        %s687 = smul.addr %s684, 3
        %s688 = sadd.s32 %s686, %s687
        %s689 = smul.addr %s688, 8
        %s690 = scalar_lea.vmem %s0, %s689
        %p691 = pneg %p76
        %p692 = pneg %p73
        %p693 = scmp.lt.s32.totalorder %s45, 1
        %s694 = scalar_select %p693, %s45, 1
        %s695 = smul.addr %s694, 3
        %s696 = smul.addr %s695, 8
        %s697 = scalar_lea.vmem %s1, %s696
        %p698 = pneg %p102
        %p699 = pneg %p99
        %p700 = pneg %p123
        %p701 = pneg %p120
        %p702 = pneg %p144
        %p703 = pneg %p141
        %p704 = pneg %p165
        %p705 = pneg %p162
        %p706 = pneg %p186
        %p707 = pneg %p183
        %p708 = pneg %p207
        %p709 = pneg %p204
        %p710 = pneg %p228
        %p711 = pneg %p225
        %p712 = pneg %p249
        %p713 = pneg %p246
        %p714 = pneg %p270
        %p715 = pneg %p267
        %p716 = pneg %p291
        %p717 = pneg %p288
        %p718 = pneg %p312
        %p719 = pneg %p309
        %p720 = pneg %p333
        %p721 = pneg %p330
        %p722 = pneg %p354
        %p723 = pneg %p351
        %p724 = pneg %p375
        %p725 = pneg %p372
        %p726 = pneg %p396
        %p727 = pneg %p393
        %p728 = pneg %p417
        %p729 = pneg %p414
        %p730 = pneg %p438
        %p731 = pneg %p435
        %p732 = pneg %p459
        %p733 = pneg %p456
        %p734 = pneg %p480
        %p735 = pneg %p477
        %p736 = pneg %p501
        %p737 = pneg %p498
        %p738 = pneg %p522
        %p739 = pneg %p519
        %p740 = pneg %p550
        %p741 = pneg %p547
        %s742 = sand.u32 %s537, 1
        %s743 = scalar_lea.sflag [#allocation5], %s742
        %s744 = sand.u32 %s537, 1
        %s745 = smul.addr %s744, 8
        %s746 = scalar_lea.vmem [#allocation4], %s745
        %p747 = pneg %p578
        %p748 = pneg %p575
        %s749 = sand.u32 %s565, 1
        %s750 = scalar_lea.sflag [#allocation7], %s749
        %s751 = sand.u32 %s565, 1
        %s752 = smul.addr %s751, 8
        %s753 = scalar_lea.vmem [#allocation6], %s752
        %p754 = scmp.lt.s32.totalorder %s45, 1
        %s755 = scalar_select %p754, %s45, 1
        %p756 = scmp.lt.s32.totalorder %s46, 2
        %s757 = scalar_select %p756, %s46, 2
        %s758 = smul.addr %s755, 3
        %s759 = sadd.s32 %s757, %s758
        %s760 = smul.addr %s759, 8
        %s761 = scalar_lea.vmem %s0, %s760
        %p762 = scmp.lt.s32.totalorder %s45, 1
        %s763 = scalar_select %p762, %s45, 1
        %s764 = smul.addr %s763, 3
        %s765 = smul.addr %s764, 8
        %s766 = scalar_lea.vmem %s1, %s765
        %v768 = vld [vmem:[%s2] sm:$0x1]
        %v769 = vld [vmem:[%s3] sm:$0x1]
        %p770 = scmp.eq.s32.totalorder %s46, 0
        // Predicated region
        $region109: #{tpu_custom_call.1} parent=107 // pred_check
          %p771 = pneg %p770
        $region110: #{tpu_custom_call.1} parent=107 // pred_check_branch
          %773 = sbr.rel (%p771) target = $region112
        $region111: #{tpu_custom_call.1} parent=107 // pred_region
          %v774 = vld [vmem:[%s766] sm:$0xff]
          %v775 = vld [vmem:[%s766 + $0x8] sm:$0xff]
          %v776 = vld [vmem:[%s766 + $0x10] sm:$0xff]
          %vm777 = vcmask 261120
          %v778 = vsel %vm777, %v774, 0.0
          %779 = vadd.xlane.f32.xlu0 %v778
          %v780 = vpop.xlane.xlu0 %779
          %v781 = vsel %vm777, %v775, 0.0
          %782 = vadd.xlane.f32.xlu0 %v781
          %v783 = vpop.xlane.xlu0 %782
          %v784 = vsel %vm777, %v776, 0.0
          %785 = vadd.xlane.f32.xlu0 %v784
          %v786 = vpop.xlane.xlu0 %785
          %v787 = vrcp.pop 32.0
          %v788 = vmul.f32 %v780, %v787
          %v789 = vmul.f32 %v783, %v787
          %v790 = vmul.f32 %v786, %v787
          %v791 = vsub.f32 %v774, %v788
          %v792 = vsub.f32 %v775, %v789
          %v793 = vsub.f32 %v776, %v790
          %v794 = vmul.f32 %v791, %v791
          %v795 = vmul.f32 %v792, %v792
          %v796 = vmul.f32 %v793, %v793
          %v797 = vsel %vm777, %v794, 0.0
          %798 = vadd.xlane.f32.xlu0 %v797
          %v799 = vpop.xlane.xlu0 %798
          %v800 = vsel %vm777, %v795, 0.0
          %801 = vadd.xlane.f32.xlu0 %v800
          %v802 = vpop.xlane.xlu0 %801
          %v803 = vsel %vm777, %v796, 0.0
          %804 = vadd.xlane.f32.xlu0 %v803
          %v805 = vpop.xlane.xlu0 %804
          %v806 = vmul.f32 %v799, %v787
          %v807 = vmul.f32 %v802, %v787
          %v808 = vmul.f32 %v805, %v787
          %v809 = vadd.f32 %v806, 1e-06
          %v810 = vadd.f32 %v807, 1e-06
          %v811 = vadd.f32 %v808, 1e-06
          %v812 = vrsqrt.pop %v809
          %v813 = vrsqrt.pop %v810
          %v814 = vrsqrt.pop %v811
          %v815 = vmul.f32 %v791, %v812
          %v816 = vmul.f32 %v792, %v813
          %v817 = vmul.f32 %v793, %v814
          %v819 = vlaneseq
          %v820 = vshrl.u32 %v819, 7
          %v821 = vsub.s32 0, %v820
          %v822 = vrot.slane %v768, %v821
          %v824 = vmul.f32 %v815, %v822
          %v825 = vmul.f32 %v816, %v822
          %v826 = vmul.f32 %v817, %v822
          %v828 = vlaneseq
          %v829 = vshrl.u32 %v828, 7
          %v830 = vsub.s32 0, %v829
          %v831 = vrot.slane %v769, %v830
          %v833 = vadd.f32 %v824, %v831
          %v834 = vadd.f32 %v825, %v831
          %v835 = vadd.f32 %v826, %v831
          %v836 = vpack.c.bf16 %v834, %v833
          %v837 = vpack.c.bf16 %v835, %v835
          %v838 = vld [vmem:[%s6] sm:$0xf]
          %v839 = vld [vmem:[%s6 + $0x4] sm:$0xf]
          %v840 = vld [vmem:[%s6 + $0x8] sm:$0xf]
          %v841 = vld [vmem:[%s6 + $0xc] sm:$0xf]
          %v842 = vld [vmem:[%s7] sm:$0x1]
          %v844 = vlaneseq
          %v845 = vshrl.u32 %v844, 7
          %v846 = vsub.s32 0, %v845
          %v847 = vrot.slane %v842, %v846
          %v853 = vunpack.c.l.b16 %v838
          %v854 = vunpack.c.l.b16 %v839
          %v855 = vunpack.c.l.b16 %v840
          %v856 = vunpack.c.l.b16 %v841
          %v857 = vpack.c.b16 %v854, %v853
          %v858 = vpack.c.b16 %v856, %v855
          %v862 = vsel %vm777, %v836, 0
          %v865 = vsel %vm777, %v837, 0
          %867 = vmatprep.subr.bf16.mxu0 0
          %868 = vmatpush1.bf16.msra.mxu0 0
          %869 = vmatprep.subr.bf16.mxu0 0
          %870 = vmatpush1.bf16.msra.mxu0 0
          %871 = vmatprep.subr.bf16.mxu0 0
          %872 = vmatpush1.bf16.msra.mxu0 0
          %873 = vmatprep.subr.bf16.mxu0 0
          %874 = vmatpush1.bf16.msra.mxu0 0
          %875 = vmatprep.subr.bf16.mxu0 0
          %876 = vmatpush1.bf16.msra.mxu0 0
          %877 = vmatprep.subr.bf16.mxu0 0
          %878 = vmatpush1.bf16.msra.mxu0 0
          %879 = vmatprep.subr.bf16.mxu0 0
          %880 = vmatpush1.bf16.msra.mxu0 %v858
          %881 = vmatprep.subr.bf16.mxu0 0
          %882 = vmatpush1.bf16.msra.mxu0 %v857
          %883 = vmatprep.subr.bf16.mxu0 0
          %884 = vmatpush2.bf16.msra.mxu0 0
          %885 = vmatprep.subr.bf16.mxu0 0
          %886 = vmatpush2.bf16.msra.mxu0 0
          %887 = vmatprep.subr.bf16.mxu0 0
          %888 = vmatpush2.bf16.msra.mxu0 0
          %889 = vmatprep.subr.bf16.mxu0 0
          %890 = vmatpush2.bf16.msra.mxu0 0
          %891 = vmatprep.subr.bf16.mxu0 0
          %892 = vmatpush2.bf16.msra.mxu0 0
          %893 = vmatprep.subr.bf16.mxu0 0
          %894 = vmatpush2.bf16.msra.mxu0 0
          %895 = vmatprep.subr.bf16.mxu0 0
          %896 = vmatpush2.bf16.msra.mxu0 0
          %897 = vmatprep.subr.bf16.mxu0 0
          %898 = vmatpush2.bf16.msra.mxu0 0
          %899 = vmatprep.mubr.bf16.mxu0 0
          %900 = vmatmul.mubr.bf16.gmra.mxu0 %v862
          %v901 = vpop.f32.mrf.mxu0
          %v902 = vadd.f32 %v847, %v901
          %v903 = vpop.f32.mrf.mxu0
          %v904 = vpop.f32.mrf.mxu0
          %v905 = vadd.f32 %v847, %v904
          %v906 = vpop.f32.mrf.mxu0
          %907 = vmatprep.mubr.bf16.mxu0 0
          %908 = vmatmul.mubr.bf16.gmra.mxu0 %v865
          %v909 = vpop.f32.mrf.mxu0
          %v910 = vadd.f32 %v847, %v909
          %v911 = vpop.f32.mrf.mxu0
          %v912 = vpop.f32.mrf.mxu0
          %v913 = vpop.f32.mrf.mxu0
          %914 = vdwg.mxu0
          %v915 = vld [vmem:[%s8] sm:$0xf]
          %v916 = vld [vmem:[%s8 + $0x4] sm:$0xf]
          %v917 = vld [vmem:[%s8 + $0x8] sm:$0xf]
          %v918 = vld [vmem:[%s8 + $0xc] sm:$0xf]
          %v919 = vld [vmem:[%s9] sm:$0x1]
          %v921 = vlaneseq
          %v922 = vshrl.u32 %v921, 7
          %v923 = vsub.s32 0, %v922
          %v924 = vrot.slane %v919, %v923
          %v930 = vunpack.c.l.b16 %v915
          %v931 = vunpack.c.l.b16 %v916
          %v932 = vunpack.c.l.b16 %v917
          %v933 = vunpack.c.l.b16 %v918
          %v934 = vpack.c.b16 %v931, %v930
          %v935 = vpack.c.b16 %v933, %v932
          %938 = vmatprep.subr.bf16.mxu0 0
          %939 = vmatpush1.bf16.msra.mxu0 0
          %940 = vmatprep.subr.bf16.mxu0 0
          %941 = vmatpush1.bf16.msra.mxu0 0
          %942 = vmatprep.subr.bf16.mxu0 0
          %943 = vmatpush1.bf16.msra.mxu0 0
          %944 = vmatprep.subr.bf16.mxu0 0
          %945 = vmatpush1.bf16.msra.mxu0 0
          %946 = vmatprep.subr.bf16.mxu0 0
          %947 = vmatpush1.bf16.msra.mxu0 0
          %948 = vmatprep.subr.bf16.mxu0 0
          %949 = vmatpush1.bf16.msra.mxu0 0
          %950 = vmatprep.subr.bf16.mxu0 0
          %951 = vmatpush1.bf16.msra.mxu0 %v935
          %952 = vmatprep.subr.bf16.mxu0 0
          %953 = vmatpush1.bf16.msra.mxu0 %v934
          %954 = vmatprep.subr.bf16.mxu0 0
          %955 = vmatpush2.bf16.msra.mxu0 0
          %956 = vmatprep.subr.bf16.mxu0 0
          %957 = vmatpush2.bf16.msra.mxu0 0
          %958 = vmatprep.subr.bf16.mxu0 0
          %959 = vmatpush2.bf16.msra.mxu0 0
          %960 = vmatprep.subr.bf16.mxu0 0
          %961 = vmatpush2.bf16.msra.mxu0 0
          %962 = vmatprep.subr.bf16.mxu0 0
          %963 = vmatpush2.bf16.msra.mxu0 0
          %964 = vmatprep.subr.bf16.mxu0 0
          %965 = vmatpush2.bf16.msra.mxu0 0
          %966 = vmatprep.subr.bf16.mxu0 0
          %967 = vmatpush2.bf16.msra.mxu0 0
          %968 = vmatprep.subr.bf16.mxu0 0
          %969 = vmatpush2.bf16.msra.mxu0 0
          %970 = vmatprep.mubr.bf16.mxu0 0
          %971 = vmatmul.mubr.bf16.gmra.mxu0 %v862
          %v972 = vpop.f32.mrf.mxu0
          %v973 = vadd.f32 %v924, %v972
          %v974 = vpop.f32.mrf.mxu0
          %v975 = vpop.f32.mrf.mxu0
          %v976 = vadd.f32 %v924, %v975
          %v977 = vpop.f32.mrf.mxu0
          %978 = vmatprep.mubr.bf16.mxu0 0
          %979 = vmatmul.mubr.bf16.gmra.mxu0 %v865
          %v980 = vpop.f32.mrf.mxu0
          %v981 = vadd.f32 %v924, %v980
          %v982 = vpop.f32.mrf.mxu0
          %v983 = vpop.f32.mrf.mxu0
          %v984 = vpop.f32.mrf.mxu0
          %985 = vdwg.mxu0
          %v986 = vpack.c.bf16 %v905, %v902
          %v987 = vpack.c.bf16 %v910, %v910
          %v990 = vunpack.c.l.b16 %v986
          %v991 = vunpack.c.h.b16 %v986
          %v992 = vunpack.c.l.b16 %v987
          %v993 = vpack.c.b16 %v990, %v990
          %v994 = vpack.c.b16 %v991, %v991
          %v995 = vpack.c.b16 %v992, %v992
          %vm999 = vcmask 60416
          %1000 = vst.msk [vmem:[#allocation2] sm:$0xf] %vm999, %v993
          %1001 = vst.msk [vmem:[#allocation2 + $0x4] sm:$0xf] %vm999, %v994
          %1002 = vst.msk [vmem:[#allocation2 + $0x8] sm:$0xf] %vm999, %v995
          %v1003 = vpack.c.bf16 %v976, %v973
          %v1004 = vpack.c.bf16 %v981, %v981
          %v1007 = vunpack.c.l.b16 %v1003
          %v1008 = vunpack.c.h.b16 %v1003
          %v1009 = vunpack.c.l.b16 %v1004
          %v1010 = vpack.c.b16 %v1007, %v1007
          %v1011 = vpack.c.b16 %v1008, %v1008
          %v1012 = vpack.c.b16 %v1009, %v1009
          %1016 = vst.msk [vmem:[#allocation3] sm:$0xf] %vm999, %v1010
          %1017 = vst.msk [vmem:[#allocation3 + $0x4] sm:$0xf] %vm999, %v1011
          %1018 = vst.msk [vmem:[#allocation3 + $0x8] sm:$0xf] %vm999, %v1012
          %s1019 = scalar_lea.vmem %s6, 16
          %v1020 = vld [vmem:[%s1019] sm:$0xf]
          %v1021 = vld [vmem:[%s1019 + $0x4] sm:$0xf]
          %v1022 = vld [vmem:[%s1019 + $0x8] sm:$0xf]
          %v1023 = vld [vmem:[%s1019 + $0xc] sm:$0xf]
          %s1024 = scalar_lea.vmem %s7, 1
          %v1025 = vld [vmem:[%s1024] sm:$0x1]
          %v1027 = vlaneseq
          %v1028 = vshrl.u32 %v1027, 7
          %v1029 = vsub.s32 0, %v1028
          %v1030 = vrot.slane %v1025, %v1029
          %v1036 = vunpack.c.l.b16 %v1020
          %v1037 = vunpack.c.l.b16 %v1021
          %v1038 = vunpack.c.l.b16 %v1022
          %v1039 = vunpack.c.l.b16 %v1023
          %v1040 = vpack.c.b16 %v1037, %v1036
          %v1041 = vpack.c.b16 %v1039, %v1038
          %1044 = vmatprep.subr.bf16.mxu0 0
          %1045 = vmatpush1.bf16.msra.mxu0 0
          %1046 = vmatprep.subr.bf16.mxu0 0
          %1047 = vmatpush1.bf16.msra.mxu0 0
          %1048 = vmatprep.subr.bf16.mxu0 0
          %1049 = vmatpush1.bf16.msra.mxu0 0
          %1050 = vmatprep.subr.bf16.mxu0 0
          %1051 = vmatpush1.bf16.msra.mxu0 0
          %1052 = vmatprep.subr.bf16.mxu0 0
          %1053 = vmatpush1.bf16.msra.mxu0 0
          %1054 = vmatprep.subr.bf16.mxu0 0
          %1055 = vmatpush1.bf16.msra.mxu0 0
          %1056 = vmatprep.subr.bf16.mxu0 0
          %1057 = vmatpush1.bf16.msra.mxu0 %v1041
          %1058 = vmatprep.subr.bf16.mxu0 0
          %1059 = vmatpush1.bf16.msra.mxu0 %v1040
          %1060 = vmatprep.subr.bf16.mxu0 0
          %1061 = vmatpush2.bf16.msra.mxu0 0
          %1062 = vmatprep.subr.bf16.mxu0 0
          %1063 = vmatpush2.bf16.msra.mxu0 0
          %1064 = vmatprep.subr.bf16.mxu0 0
          %1065 = vmatpush2.bf16.msra.mxu0 0
          %1066 = vmatprep.subr.bf16.mxu0 0
          %1067 = vmatpush2.bf16.msra.mxu0 0
          %1068 = vmatprep.subr.bf16.mxu0 0
          %1069 = vmatpush2.bf16.msra.mxu0 0
          %1070 = vmatprep.subr.bf16.mxu0 0
          %1071 = vmatpush2.bf16.msra.mxu0 0
          %1072 = vmatprep.subr.bf16.mxu0 0
          %1073 = vmatpush2.bf16.msra.mxu0 0
          %1074 = vmatprep.subr.bf16.mxu0 0
          %1075 = vmatpush2.bf16.msra.mxu0 0
          %1076 = vmatprep.mubr.bf16.mxu0 0
          %1077 = vmatmul.mubr.bf16.gmra.mxu0 %v862
          %v1078 = vpop.f32.mrf.mxu0
          %v1079 = vadd.f32 %v1030, %v1078
          %v1080 = vpop.f32.mrf.mxu0
          %v1081 = vpop.f32.mrf.mxu0
          %v1082 = vadd.f32 %v1030, %v1081
          %v1083 = vpop.f32.mrf.mxu0
          %1084 = vmatprep.mubr.bf16.mxu0 0
          %1085 = vmatmul.mubr.bf16.gmra.mxu0 %v865
          %v1086 = vpop.f32.mrf.mxu0
          %v1087 = vadd.f32 %v1030, %v1086
          %v1088 = vpop.f32.mrf.mxu0
          %v1089 = vpop.f32.mrf.mxu0
          %v1090 = vpop.f32.mrf.mxu0
          %1091 = vdwg.mxu0
          %s1092 = scalar_lea.vmem %s8, 16
          %v1093 = vld [vmem:[%s1092] sm:$0xf]
          %v1094 = vld [vmem:[%s1092 + $0x4] sm:$0xf]
          %v1095 = vld [vmem:[%s1092 + $0x8] sm:$0xf]
          %v1096 = vld [vmem:[%s1092 + $0xc] sm:$0xf]
          %s1097 = scalar_lea.vmem %s9, 1
          %v1098 = vld [vmem:[%s1097] sm:$0x1]
          %v1100 = vlaneseq
          %v1101 = vshrl.u32 %v1100, 7
          %v1102 = vsub.s32 0, %v1101
          %v1103 = vrot.slane %v1098, %v1102
          %v1109 = vunpack.c.l.b16 %v1093
          %v1110 = vunpack.c.l.b16 %v1094
          %v1111 = vunpack.c.l.b16 %v1095
          %v1112 = vunpack.c.l.b16 %v1096
          %v1113 = vpack.c.b16 %v1110, %v1109
          %v1114 = vpack.c.b16 %v1112, %v1111
          %1117 = vmatprep.subr.bf16.mxu0 0
          %1118 = vmatpush1.bf16.msra.mxu0 0
          %1119 = vmatprep.subr.bf16.mxu0 0
          %1120 = vmatpush1.bf16.msra.mxu0 0
          %1121 = vmatprep.subr.bf16.mxu0 0
          %1122 = vmatpush1.bf16.msra.mxu0 0
          %1123 = vmatprep.subr.bf16.mxu0 0
          %1124 = vmatpush1.bf16.msra.mxu0 0
          %1125 = vmatprep.subr.bf16.mxu0 0
          %1126 = vmatpush1.bf16.msra.mxu0 0
          %1127 = vmatprep.subr.bf16.mxu0 0
          %1128 = vmatpush1.bf16.msra.mxu0 0
          %1129 = vmatprep.subr.bf16.mxu0 0
          %1130 = vmatpush1.bf16.msra.mxu0 %v1114
          %1131 = vmatprep.subr.bf16.mxu0 0
          %1132 = vmatpush1.bf16.msra.mxu0 %v1113
          %1133 = vmatprep.subr.bf16.mxu0 0
          %1134 = vmatpush2.bf16.msra.mxu0 0
          %1135 = vmatprep.subr.bf16.mxu0 0
          %1136 = vmatpush2.bf16.msra.mxu0 0
          %1137 = vmatprep.subr.bf16.mxu0 0
          %1138 = vmatpush2.bf16.msra.mxu0 0
          %1139 = vmatprep.subr.bf16.mxu0 0
          %1140 = vmatpush2.bf16.msra.mxu0 0
          %1141 = vmatprep.subr.bf16.mxu0 0
          %1142 = vmatpush2.bf16.msra.mxu0 0
          %1143 = vmatprep.subr.bf16.mxu0 0
          %1144 = vmatpush2.bf16.msra.mxu0 0
          %1145 = vmatprep.subr.bf16.mxu0 0
          %1146 = vmatpush2.bf16.msra.mxu0 0
          %1147 = vmatprep.subr.bf16.mxu0 0
          %1148 = vmatpush2.bf16.msra.mxu0 0
          %1149 = vmatprep.mubr.bf16.mxu0 0
          %1150 = vmatmul.mubr.bf16.gmra.mxu0 %v862
          %v1151 = vpop.f32.mrf.mxu0
          %v1152 = vadd.f32 %v1103, %v1151
          %v1153 = vpop.f32.mrf.mxu0
          %v1154 = vpop.f32.mrf.mxu0
          %v1155 = vadd.f32 %v1103, %v1154
          %v1156 = vpop.f32.mrf.mxu0
          %1157 = vmatprep.mubr.bf16.mxu0 0
          %1158 = vmatmul.mubr.bf16.gmra.mxu0 %v865
          %v1159 = vpop.f32.mrf.mxu0
          %v1160 = vadd.f32 %v1103, %v1159
          %v1161 = vpop.f32.mrf.mxu0
          %v1162 = vpop.f32.mrf.mxu0
          %v1163 = vpop.f32.mrf.mxu0
          %1164 = vdwg.mxu0
          %v1165 = vpack.c.bf16 %v1082, %v1079
          %v1166 = vpack.c.bf16 %v1087, %v1087
          %v1169 = vunpack.c.l.b16 %v1165
          %v1170 = vunpack.c.h.b16 %v1165
          %v1171 = vunpack.c.l.b16 %v1166
          %v1172 = vpack.c.b16 %v1169, %v1169
          %v1173 = vpack.c.b16 %v1170, %v1170
          %v1174 = vpack.c.b16 %v1171, %v1171
          %s1178 = scalar_lea.vmem [#allocation2], 12
          %1179 = vst.msk [vmem:[%s1178] sm:$0xf] %vm999, %v1172
          %1180 = vst.msk [vmem:[%s1178 + $0x4] sm:$0xf] %vm999, %v1173
          %1181 = vst.msk [vmem:[%s1178 + $0x8] sm:$0xf] %vm999, %v1174
          %v1182 = vpack.c.bf16 %v1155, %v1152
          %v1183 = vpack.c.bf16 %v1160, %v1160
          %v1186 = vunpack.c.l.b16 %v1182
          %v1187 = vunpack.c.h.b16 %v1182
          %v1188 = vunpack.c.l.b16 %v1183
          %v1189 = vpack.c.b16 %v1186, %v1186
          %v1190 = vpack.c.b16 %v1187, %v1187
          %v1191 = vpack.c.b16 %v1188, %v1188
          %s1195 = scalar_lea.vmem [#allocation3], 12
          %1196 = vst.msk [vmem:[%s1195] sm:$0xf] %vm999, %v1189
          %1197 = vst.msk [vmem:[%s1195 + $0x4] sm:$0xf] %vm999, %v1190
          %1198 = vst.msk [vmem:[%s1195 + $0x8] sm:$0xf] %vm999, %v1191
          %s1199 = scalar_lea.vmem %s6, 32
          %v1200 = vld [vmem:[%s1199] sm:$0xf]
          %v1201 = vld [vmem:[%s1199 + $0x4] sm:$0xf]
          %v1202 = vld [vmem:[%s1199 + $0x8] sm:$0xf]
          %v1203 = vld [vmem:[%s1199 + $0xc] sm:$0xf]
          %s1204 = scalar_lea.vmem %s7, 2
          %v1205 = vld [vmem:[%s1204] sm:$0x1]
          %v1207 = vlaneseq
          %v1208 = vshrl.u32 %v1207, 7
          %v1209 = vsub.s32 0, %v1208
          %v1210 = vrot.slane %v1205, %v1209
          %v1216 = vunpack.c.l.b16 %v1200
          %v1217 = vunpack.c.l.b16 %v1201
          %v1218 = vunpack.c.l.b16 %v1202
          %v1219 = vunpack.c.l.b16 %v1203
          %v1220 = vpack.c.b16 %v1217, %v1216
          %v1221 = vpack.c.b16 %v1219, %v1218
          %1224 = vmatprep.subr.bf16.mxu0 0
          %1225 = vmatpush1.bf16.msra.mxu0 0
          %1226 = vmatprep.subr.bf16.mxu0 0
          %1227 = vmatpush1.bf16.msra.mxu0 0
          %1228 = vmatprep.subr.bf16.mxu0 0
          %1229 = vmatpush1.bf16.msra.mxu0 0
          %1230 = vmatprep.subr.bf16.mxu0 0
          %1231 = vmatpush1.bf16.msra.mxu0 0
          %1232 = vmatprep.subr.bf16.mxu0 0
          %1233 = vmatpush1.bf16.msra.mxu0 0
          %1234 = vmatprep.subr.bf16.mxu0 0
          %1235 = vmatpush1.bf16.msra.mxu0 0
          %1236 = vmatprep.subr.bf16.mxu0 0
          %1237 = vmatpush1.bf16.msra.mxu0 %v1221
          %1238 = vmatprep.subr.bf16.mxu0 0
          %1239 = vmatpush1.bf16.msra.mxu0 %v1220
          %1240 = vmatprep.subr.bf16.mxu0 0
          %1241 = vmatpush2.bf16.msra.mxu0 0
          %1242 = vmatprep.subr.bf16.mxu0 0
          %1243 = vmatpush2.bf16.msra.mxu0 0
          %1244 = vmatprep.subr.bf16.mxu0 0
          %1245 = vmatpush2.bf16.msra.mxu0 0
          %1246 = vmatprep.subr.bf16.mxu0 0
          %1247 = vmatpush2.bf16.msra.mxu0 0
          %1248 = vmatprep.subr.bf16.mxu0 0
          %1249 = vmatpush2.bf16.msra.mxu0 0
          %1250 = vmatprep.subr.bf16.mxu0 0
          %1251 = vmatpush2.bf16.msra.mxu0 0
          %1252 = vmatprep.subr.bf16.mxu0 0
          %1253 = vmatpush2.bf16.msra.mxu0 0
          %1254 = vmatprep.subr.bf16.mxu0 0
          %1255 = vmatpush2.bf16.msra.mxu0 0
          %1256 = vmatprep.mubr.bf16.mxu0 0
          %1257 = vmatmul.mubr.bf16.gmra.mxu0 %v862
          %v1258 = vpop.f32.mrf.mxu0
          %v1259 = vadd.f32 %v1210, %v1258
          %v1260 = vpop.f32.mrf.mxu0
          %v1261 = vpop.f32.mrf.mxu0
          %v1262 = vadd.f32 %v1210, %v1261
          %v1263 = vpop.f32.mrf.mxu0
          %1264 = vmatprep.mubr.bf16.mxu0 0
          %1265 = vmatmul.mubr.bf16.gmra.mxu0 %v865
          %v1266 = vpop.f32.mrf.mxu0
          %v1267 = vadd.f32 %v1210, %v1266
          %v1268 = vpop.f32.mrf.mxu0
          %v1269 = vpop.f32.mrf.mxu0
          %v1270 = vpop.f32.mrf.mxu0
          %1271 = vdwg.mxu0
          %s1272 = scalar_lea.vmem %s8, 32
          %v1273 = vld [vmem:[%s1272] sm:$0xf]
          %v1274 = vld [vmem:[%s1272 + $0x4] sm:$0xf]
          %v1275 = vld [vmem:[%s1272 + $0x8] sm:$0xf]
          %v1276 = vld [vmem:[%s1272 + $0xc] sm:$0xf]
          %s1277 = scalar_lea.vmem %s9, 2
          %v1278 = vld [vmem:[%s1277] sm:$0x1]
          %v1280 = vlaneseq
          %v1281 = vshrl.u32 %v1280, 7
          %v1282 = vsub.s32 0, %v1281
          %v1283 = vrot.slane %v1278, %v1282
          %v1289 = vunpack.c.l.b16 %v1273
          %v1290 = vunpack.c.l.b16 %v1274
          %v1291 = vunpack.c.l.b16 %v1275
          %v1292 = vunpack.c.l.b16 %v1276
          %v1293 = vpack.c.b16 %v1290, %v1289
          %v1294 = vpack.c.b16 %v1292, %v1291
          %1297 = vmatprep.subr.bf16.mxu0 0
          %1298 = vmatpush1.bf16.msra.mxu0 0
          %1299 = vmatprep.subr.bf16.mxu0 0
          %1300 = vmatpush1.bf16.msra.mxu0 0
          %1301 = vmatprep.subr.bf16.mxu0 0
          %1302 = vmatpush1.bf16.msra.mxu0 0
          %1303 = vmatprep.subr.bf16.mxu0 0
          %1304 = vmatpush1.bf16.msra.mxu0 0
          %1305 = vmatprep.subr.bf16.mxu0 0
          %1306 = vmatpush1.bf16.msra.mxu0 0
          %1307 = vmatprep.subr.bf16.mxu0 0
          %1308 = vmatpush1.bf16.msra.mxu0 0
          %1309 = vmatprep.subr.bf16.mxu0 0
          %1310 = vmatpush1.bf16.msra.mxu0 %v1294
          %1311 = vmatprep.subr.bf16.mxu0 0
          %1312 = vmatpush1.bf16.msra.mxu0 %v1293
          %1313 = vmatprep.subr.bf16.mxu0 0
          %1314 = vmatpush2.bf16.msra.mxu0 0
          %1315 = vmatprep.subr.bf16.mxu0 0
          %1316 = vmatpush2.bf16.msra.mxu0 0
          %1317 = vmatprep.subr.bf16.mxu0 0
          %1318 = vmatpush2.bf16.msra.mxu0 0
          %1319 = vmatprep.subr.bf16.mxu0 0
          %1320 = vmatpush2.bf16.msra.mxu0 0
          %1321 = vmatprep.subr.bf16.mxu0 0
          %1322 = vmatpush2.bf16.msra.mxu0 0
          %1323 = vmatprep.subr.bf16.mxu0 0
          %1324 = vmatpush2.bf16.msra.mxu0 0
          %1325 = vmatprep.subr.bf16.mxu0 0
          %1326 = vmatpush2.bf16.msra.mxu0 0
          %1327 = vmatprep.subr.bf16.mxu0 0
          %1328 = vmatpush2.bf16.msra.mxu0 0
          %1329 = vmatprep.mubr.bf16.mxu0 0
          %1330 = vmatmul.mubr.bf16.gmra.mxu0 %v862
          %v1331 = vpop.f32.mrf.mxu0
          %v1332 = vadd.f32 %v1283, %v1331
          %v1333 = vpop.f32.mrf.mxu0
          %v1334 = vpop.f32.mrf.mxu0
          %v1335 = vadd.f32 %v1283, %v1334
          %v1336 = vpop.f32.mrf.mxu0
          %1337 = vmatprep.mubr.bf16.mxu0 0
          %1338 = vmatmul.mubr.bf16.gmra.mxu0 %v865
          %v1339 = vpop.f32.mrf.mxu0
          %v1340 = vadd.f32 %v1283, %v1339
          %v1341 = vpop.f32.mrf.mxu0
          %v1342 = vpop.f32.mrf.mxu0
          %v1343 = vpop.f32.mrf.mxu0
          %1344 = vdwg.mxu0
          %v1345 = vpack.c.bf16 %v1262, %v1259
          %v1346 = vpack.c.bf16 %v1267, %v1267
          %v1349 = vunpack.c.l.b16 %v1345
          %v1350 = vunpack.c.h.b16 %v1345
          %v1351 = vunpack.c.l.b16 %v1346
          %v1352 = vpack.c.b16 %v1349, %v1349
          %v1353 = vpack.c.b16 %v1350, %v1350
          %v1354 = vpack.c.b16 %v1351, %v1351
          %s1358 = scalar_lea.vmem [#allocation2], 24
          %1359 = vst.msk [vmem:[%s1358] sm:$0xf] %vm999, %v1352
          %1360 = vst.msk [vmem:[%s1358 + $0x4] sm:$0xf] %vm999, %v1353
          %1361 = vst.msk [vmem:[%s1358 + $0x8] sm:$0xf] %vm999, %v1354
          %v1362 = vpack.c.bf16 %v1335, %v1332
          %v1363 = vpack.c.bf16 %v1340, %v1340
          %v1366 = vunpack.c.l.b16 %v1362
          %v1367 = vunpack.c.h.b16 %v1362
          %v1368 = vunpack.c.l.b16 %v1363
          %v1369 = vpack.c.b16 %v1366, %v1366
          %v1370 = vpack.c.b16 %v1367, %v1367
          %v1371 = vpack.c.b16 %v1368, %v1368
          %s1375 = scalar_lea.vmem [#allocation3], 24
          %1376 = vst.msk [vmem:[%s1375] sm:$0xf] %vm999, %v1369
          %1377 = vst.msk [vmem:[%s1375 + $0x4] sm:$0xf] %vm999, %v1370
          %1378 = vst.msk [vmem:[%s1375 + $0x8] sm:$0xf] %vm999, %v1371
          %s1379 = scalar_lea.vmem %s6, 48
          %v1380 = vld [vmem:[%s1379] sm:$0xf]
          %v1381 = vld [vmem:[%s1379 + $0x4] sm:$0xf]
          %v1382 = vld [vmem:[%s1379 + $0x8] sm:$0xf]
          %v1383 = vld [vmem:[%s1379 + $0xc] sm:$0xf]
          %s1384 = scalar_lea.vmem %s7, 3
          %v1385 = vld [vmem:[%s1384] sm:$0x1]
          %v1387 = vlaneseq
          %v1388 = vshrl.u32 %v1387, 7
          %v1389 = vsub.s32 0, %v1388
          %v1390 = vrot.slane %v1385, %v1389
          %v1396 = vunpack.c.l.b16 %v1380
          %v1397 = vunpack.c.l.b16 %v1381
          %v1398 = vunpack.c.l.b16 %v1382
          %v1399 = vunpack.c.l.b16 %v1383
          %v1400 = vpack.c.b16 %v1397, %v1396
          %v1401 = vpack.c.b16 %v1399, %v1398
          %1404 = vmatprep.subr.bf16.mxu0 0
          %1405 = vmatpush1.bf16.msra.mxu0 0
          %1406 = vmatprep.subr.bf16.mxu0 0
          %1407 = vmatpush1.bf16.msra.mxu0 0
          %1408 = vmatprep.subr.bf16.mxu0 0
          %1409 = vmatpush1.bf16.msra.mxu0 0
          %1410 = vmatprep.subr.bf16.mxu0 0
          %1411 = vmatpush1.bf16.msra.mxu0 0
          %1412 = vmatprep.subr.bf16.mxu0 0
          %1413 = vmatpush1.bf16.msra.mxu0 0
          %1414 = vmatprep.subr.bf16.mxu0 0
          %1415 = vmatpush1.bf16.msra.mxu0 0
          %1416 = vmatprep.subr.bf16.mxu0 0
          %1417 = vmatpush1.bf16.msra.mxu0 %v1401
          %1418 = vmatprep.subr.bf16.mxu0 0
          %1419 = vmatpush1.bf16.msra.mxu0 %v1400
          %1420 = vmatprep.subr.bf16.mxu0 0
          %1421 = vmatpush2.bf16.msra.mxu0 0
          %1422 = vmatprep.subr.bf16.mxu0 0
          %1423 = vmatpush2.bf16.msra.mxu0 0
          %1424 = vmatprep.subr.bf16.mxu0 0
          %1425 = vmatpush2.bf16.msra.mxu0 0
          %1426 = vmatprep.subr.bf16.mxu0 0
          %1427 = vmatpush2.bf16.msra.mxu0 0
          %1428 = vmatprep.subr.bf16.mxu0 0
          %1429 = vmatpush2.bf16.msra.mxu0 0
          %1430 = vmatprep.subr.bf16.mxu0 0
          %1431 = vmatpush2.bf16.msra.mxu0 0
          %1432 = vmatprep.subr.bf16.mxu0 0
          %1433 = vmatpush2.bf16.msra.mxu0 0
          %1434 = vmatprep.subr.bf16.mxu0 0
          %1435 = vmatpush2.bf16.msra.mxu0 0
          %1436 = vmatprep.mubr.bf16.mxu0 0
          %1437 = vmatmul.mubr.bf16.gmra.mxu0 %v862
          %v1438 = vpop.f32.mrf.mxu0
          %v1439 = vadd.f32 %v1390, %v1438
          %v1440 = vpop.f32.mrf.mxu0
          %v1441 = vpop.f32.mrf.mxu0
          %v1442 = vadd.f32 %v1390, %v1441
          %v1443 = vpop.f32.mrf.mxu0
          %1444 = vmatprep.mubr.bf16.mxu0 0
          %1445 = vmatmul.mubr.bf16.gmra.mxu0 %v865
          %v1446 = vpop.f32.mrf.mxu0
          %v1447 = vadd.f32 %v1390, %v1446
          %v1448 = vpop.f32.mrf.mxu0
          %v1449 = vpop.f32.mrf.mxu0
          %v1450 = vpop.f32.mrf.mxu0
          %1451 = vdwg.mxu0
          %s1452 = scalar_lea.vmem %s8, 48
          %v1453 = vld [vmem:[%s1452] sm:$0xf]
          %v1454 = vld [vmem:[%s1452 + $0x4] sm:$0xf]
          %v1455 = vld [vmem:[%s1452 + $0x8] sm:$0xf]
          %v1456 = vld [vmem:[%s1452 + $0xc] sm:$0xf]
          %s1457 = scalar_lea.vmem %s9, 3
          %v1458 = vld [vmem:[%s1457] sm:$0x1]
          %v1460 = vlaneseq
          %v1461 = vshrl.u32 %v1460, 7
          %v1462 = vsub.s32 0, %v1461
          %v1463 = vrot.slane %v1458, %v1462
          %v1469 = vunpack.c.l.b16 %v1453
          %v1470 = vunpack.c.l.b16 %v1454
          %v1471 = vunpack.c.l.b16 %v1455
          %v1472 = vunpack.c.l.b16 %v1456
          %v1473 = vpack.c.b16 %v1470, %v1469
          %v1474 = vpack.c.b16 %v1472, %v1471
          %1477 = vmatprep.subr.bf16.mxu0 0
          %1478 = vmatpush1.bf16.msra.mxu0 0
          %1479 = vmatprep.subr.bf16.mxu0 0
          %1480 = vmatpush1.bf16.msra.mxu0 0
          %1481 = vmatprep.subr.bf16.mxu0 0
          %1482 = vmatpush1.bf16.msra.mxu0 0
          %1483 = vmatprep.subr.bf16.mxu0 0
          %1484 = vmatpush1.bf16.msra.mxu0 0
          %1485 = vmatprep.subr.bf16.mxu0 0
          %1486 = vmatpush1.bf16.msra.mxu0 0
          %1487 = vmatprep.subr.bf16.mxu0 0
          %1488 = vmatpush1.bf16.msra.mxu0 0
          %1489 = vmatprep.subr.bf16.mxu0 0
          %1490 = vmatpush1.bf16.msra.mxu0 %v1474
          %1491 = vmatprep.subr.bf16.mxu0 0
          %1492 = vmatpush1.bf16.msra.mxu0 %v1473
          %1493 = vmatprep.subr.bf16.mxu0 0
          %1494 = vmatpush2.bf16.msra.mxu0 0
          %1495 = vmatprep.subr.bf16.mxu0 0
          %1496 = vmatpush2.bf16.msra.mxu0 0
          %1497 = vmatprep.subr.bf16.mxu0 0
          %1498 = vmatpush2.bf16.msra.mxu0 0
          %1499 = vmatprep.subr.bf16.mxu0 0
          %1500 = vmatpush2.bf16.msra.mxu0 0
          %1501 = vmatprep.subr.bf16.mxu0 0
          %1502 = vmatpush2.bf16.msra.mxu0 0
          %1503 = vmatprep.subr.bf16.mxu0 0
          %1504 = vmatpush2.bf16.msra.mxu0 0
          %1505 = vmatprep.subr.bf16.mxu0 0
          %1506 = vmatpush2.bf16.msra.mxu0 0
          %1507 = vmatprep.subr.bf16.mxu0 0
          %1508 = vmatpush2.bf16.msra.mxu0 0
          %1509 = vmatprep.mubr.bf16.mxu0 0
          %1510 = vmatmul.mubr.bf16.gmra.mxu0 %v862
          %v1511 = vpop.f32.mrf.mxu0
          %v1512 = vadd.f32 %v1463, %v1511
          %v1513 = vpop.f32.mrf.mxu0
          %v1514 = vpop.f32.mrf.mxu0
          %v1515 = vadd.f32 %v1463, %v1514
          %v1516 = vpop.f32.mrf.mxu0
          %1517 = vmatprep.mubr.bf16.mxu0 0
          %1518 = vmatmul.mubr.bf16.gmra.mxu0 %v865
          %v1519 = vpop.f32.mrf.mxu0
          %v1520 = vadd.f32 %v1463, %v1519
          %v1521 = vpop.f32.mrf.mxu0
          %v1522 = vpop.f32.mrf.mxu0
          %v1523 = vpop.f32.mrf.mxu0
          %1524 = vdwg.mxu0
          %v1525 = vpack.c.bf16 %v1442, %v1439
          %v1526 = vpack.c.bf16 %v1447, %v1447
          %v1529 = vunpack.c.l.b16 %v1525
          %v1530 = vunpack.c.h.b16 %v1525
          %v1531 = vunpack.c.l.b16 %v1526
          %v1532 = vpack.c.b16 %v1529, %v1529
          %v1533 = vpack.c.b16 %v1530, %v1530
          %v1534 = vpack.c.b16 %v1531, %v1531
          %s1538 = scalar_lea.vmem [#allocation2], 36
          %1539 = vst.msk [vmem:[%s1538] sm:$0xf] %vm999, %v1532
          %1540 = vst.msk [vmem:[%s1538 + $0x4] sm:$0xf] %vm999, %v1533
          %1541 = vst.msk [vmem:[%s1538 + $0x8] sm:$0xf] %vm999, %v1534
          %v1542 = vpack.c.bf16 %v1515, %v1512
          %v1543 = vpack.c.bf16 %v1520, %v1520
          %v1546 = vunpack.c.l.b16 %v1542
          %v1547 = vunpack.c.h.b16 %v1542
          %v1548 = vunpack.c.l.b16 %v1543
          %v1549 = vpack.c.b16 %v1546, %v1546
          %v1550 = vpack.c.b16 %v1547, %v1547
          %v1551 = vpack.c.b16 %v1548, %v1548
          %s1555 = scalar_lea.vmem [#allocation3], 36
          %1556 = vst.msk [vmem:[%s1555] sm:$0xf] %vm999, %v1549
          %1557 = vst.msk [vmem:[%s1555 + $0x4] sm:$0xf] %vm999, %v1550
          %1558 = vst.msk [vmem:[%s1555 + $0x8] sm:$0xf] %vm999, %v1551
        $region112: #{tpu_custom_call.1} parent=107 // pred_fallthru
          _
        %v1559 = vld [vmem:[%s761] sm:$0xff]
        %vm1560 = vcmask 261120
        %v1561 = vsel %vm1560, %v1559, 0.0
        %1562 = vadd.xlane.f32.xlu0 %v1561
        %v1563 = vpop.xlane.xlu0 %1562
        %v1564 = vrcp.pop 32.0
        %v1565 = vmul.f32 %v1563, %v1564
        %v1566 = vsub.f32 %v1559, %v1565
        %v1567 = vmul.f32 %v1566, %v1566
        %v1568 = vsel %vm1560, %v1567, 0.0
        %1569 = vadd.xlane.f32.xlu0 %v1568
        %v1570 = vpop.xlane.xlu0 %1569
        %v1571 = vmul.f32 %v1570, %v1564
        %v1572 = vadd.f32 %v1571, 1e-06
        %v1573 = vrsqrt.pop %v1572
        %v1574 = vmul.f32 %v1566, %v1573
        %v1576 = vlaneseq
        %v1577 = vshrl.u32 %v1576, 7
        %v1578 = vsub.s32 0, %v1577
        %v1579 = vrot.slane %v768, %v1578
        %v1581 = vmul.f32 %v1574, %v1579
        %v1583 = vlaneseq
        %v1584 = vshrl.u32 %v1583, 7
        %v1585 = vsub.s32 0, %v1584
        %v1586 = vrot.slane %v769, %v1585
        %v1588 = vadd.f32 %v1581, %v1586
        %v1589 = vpack.c.bf16 %v1588, %v1588
        %v1590 = vlaneseq
        %v1591 = vand.u32 %v1590, 127
        %vm1592 = vcmp.lt.s32.totalorder %v1591, 17
        %v1593 = vsel %vm1592, 0.0, -1e+30
        %v1594 = vld [vmem:[%s4] sm:$0xf]
        %v1595 = vld [vmem:[%s4 + $0x4] sm:$0xf]
        %v1596 = vld [vmem:[%s4 + $0x8] sm:$0xf]
        %v1597 = vld [vmem:[%s4 + $0xc] sm:$0xf]
        %v1598 = vld [vmem:[%s5] sm:$0x1]
        %v1600 = vlaneseq
        %v1601 = vshrl.u32 %v1600, 7
        %v1602 = vsub.s32 0, %v1601
        %v1603 = vrot.slane %v1598, %v1602
        %v1609 = vunpack.c.l.b16 %v1594
        %v1610 = vunpack.c.l.b16 %v1595
        %v1611 = vunpack.c.l.b16 %v1596
        %v1612 = vunpack.c.l.b16 %v1597
        %v1613 = vpack.c.b16 %v1610, %v1609
        %v1614 = vpack.c.b16 %v1612, %v1611
        %v1618 = vsel %vm1560, %v1589, 0
        %1620 = vmatprep.subr.bf16.mxu0 0
        %1621 = vmatpush1.bf16.msra.mxu0 0
        %1622 = vmatprep.subr.bf16.mxu0 0
        %1623 = vmatpush1.bf16.msra.mxu0 0
        %1624 = vmatprep.subr.bf16.mxu0 0
        %1625 = vmatpush1.bf16.msra.mxu0 0
        %1626 = vmatprep.subr.bf16.mxu0 0
        %1627 = vmatpush1.bf16.msra.mxu0 0
        %1628 = vmatprep.subr.bf16.mxu0 0
        %1629 = vmatpush1.bf16.msra.mxu0 0
        %1630 = vmatprep.subr.bf16.mxu0 0
        %1631 = vmatpush1.bf16.msra.mxu0 0
        %1632 = vmatprep.subr.bf16.mxu0 0
        %1633 = vmatpush1.bf16.msra.mxu0 %v1614
        %1634 = vmatprep.subr.bf16.mxu0 0
        %1635 = vmatpush1.bf16.msra.mxu0 %v1613
        %1636 = vmatprep.subr.bf16.mxu0 0
        %1637 = vmatpush2.bf16.msra.mxu0 0
        %1638 = vmatprep.subr.bf16.mxu0 0
        %1639 = vmatpush2.bf16.msra.mxu0 0
        %1640 = vmatprep.subr.bf16.mxu0 0
        %1641 = vmatpush2.bf16.msra.mxu0 0
        %1642 = vmatprep.subr.bf16.mxu0 0
        %1643 = vmatpush2.bf16.msra.mxu0 0
        %1644 = vmatprep.subr.bf16.mxu0 0
        %1645 = vmatpush2.bf16.msra.mxu0 0
        %1646 = vmatprep.subr.bf16.mxu0 0
        %1647 = vmatpush2.bf16.msra.mxu0 0
        %1648 = vmatprep.subr.bf16.mxu0 0
        %1649 = vmatpush2.bf16.msra.mxu0 0
        %1650 = vmatprep.subr.bf16.mxu0 0
        %1651 = vmatpush2.bf16.msra.mxu0 0
        %1652 = vmatprep.mubr.bf16.mxu0 0
        %1653 = vmatmul.mubr.bf16.gmra.mxu0 %v1618
        %v1654 = vpop.f32.mrf.mxu0
        %v1655 = vadd.f32 %v1603, %v1654
        %v1656 = vpop.f32.mrf.mxu0
        %v1657 = vpop.f32.mrf.mxu0
        %v1658 = vpop.f32.mrf.mxu0
        %1659 = vdwg.mxu0
        %v1660 = vmul.f32 %v1655, 0.35355338
        %v1661 = vpack.c.bf16 %v1660, %v1660
        %v1662 = vld [vmem:[#allocation2] sm:$0xf]
        %v1663 = vld [vmem:[#allocation2 + $0x4] sm:$0xf]
        %v1664 = vld [vmem:[#allocation2 + $0x8] sm:$0xf]
        %v1668 = vunpack.c.l.b16 %v1662
        %v1669 = vunpack.c.l.b16 %v1663
        %v1670 = vunpack.c.l.b16 %v1664
        %v1671 = vpack.c.b16 %v1669, %v1668
        %v1672 = vpack.c.b16 %v1670, %v1670
        %vm1673 = vcmask 64512
        %v1675 = vsel %vm1673, %v1661, 0
        %v1678 = vsel %vm1673, %v1671, 0
        %v1681 = vsel %vm1673, %v1672, 0
        %1683 = vmatprep.subr.bf16.mxu0 0
        %1684 = vmatpush1.bf16.xpose.msra.mxu0 0
        %1685 = vmatprep.subr.bf16.mxu0 0
        %1686 = vmatpush1.bf16.xpose.msra.mxu0 0
        %1687 = vmatprep.subr.bf16.mxu0 0
        %1688 = vmatpush1.bf16.xpose.msra.mxu0 0
        %1689 = vmatprep.subr.bf16.mxu0 0
        %1690 = vmatpush1.bf16.xpose.msra.mxu0 0
        %1691 = vmatprep.subr.bf16.mxu0 0
        %1692 = vmatpush1.bf16.xpose.msra.mxu0 0
        %1693 = vmatprep.subr.bf16.mxu0 0
        %1694 = vmatpush1.bf16.xpose.msra.mxu0 0
        %1695 = vmatprep.subr.bf16.mxu0 0
        %1696 = vmatpush1.bf16.xpose.msra.mxu0 %v1681
        %1697 = vmatprep.subr.bf16.mxu0 0
        %1698 = vmatpush1.bf16.xpose.msra.mxu0 %v1678
        %1699 = vmatprep.subr.bf16.mxu0 0
        %1700 = vmatpush2.bf16.xpose.msra.mxu0 0
        %1701 = vmatprep.subr.bf16.mxu0 0
        %1702 = vmatpush2.bf16.xpose.msra.mxu0 0
        %1703 = vmatprep.subr.bf16.mxu0 0
        %1704 = vmatpush2.bf16.xpose.msra.mxu0 0
        %1705 = vmatprep.subr.bf16.mxu0 0
        %1706 = vmatpush2.bf16.xpose.msra.mxu0 0
        %1707 = vmatprep.subr.bf16.mxu0 0
        %1708 = vmatpush2.bf16.xpose.msra.mxu0 0
        %1709 = vmatprep.subr.bf16.mxu0 0
        %1710 = vmatpush2.bf16.xpose.msra.mxu0 0
        %1711 = vmatprep.subr.bf16.mxu0 0
        %1712 = vmatpush2.bf16.xpose.msra.mxu0 0
        %1713 = vmatprep.subr.bf16.mxu0 0
        %1714 = vmatpush2.bf16.xpose.msra.mxu0 0
        %1715 = vmatprep.mubr.bf16.mxu0 0
        %1716 = vmatmul.mubr.bf16.gmra.mxu0 %v1675
        %v1717 = vpop.f32.mrf.mxu0
        %v1718 = vadd.f32 %v1593, %v1717
        %v1719 = vpop.f32.mrf.mxu0
        %v1720 = vpop.f32.mrf.mxu0
        %v1721 = vpop.f32.mrf.mxu0
        %1722 = vdwg.mxu0
        %vm1723 = vcmask 195584
        %v1724 = vsel %vm1723, %v1718, -inf
        %1725 = vmax.xlane.f32.xlu0 %v1724
        %v1726 = vpop.xlane.xlu0 %1725
        %v1727 = vsub.f32 %v1718, %v1726
        %v1728 = vmul.f32 %v1727, 1.442695
        %v1729 = vpow.pop %v1728
        %v1730 = vsel %vm1723, %v1729, 0.0
        %1731 = vadd.xlane.f32.xlu0 %v1730
        %v1732 = vpop.xlane.xlu0 %1731
        %v1733 = vrcp.pop %v1732
        %v1734 = vmul.f32 %v1729, %v1733
        %v1735 = vpack.c.bf16 %v1734, %v1734
        %v1736 = vld [vmem:[#allocation3] sm:$0xf]
        %v1737 = vld [vmem:[#allocation3 + $0x4] sm:$0xf]
        %v1738 = vld [vmem:[#allocation3 + $0x8] sm:$0xf]
        %v1742 = vunpack.c.l.b16 %v1736
        %v1743 = vunpack.c.l.b16 %v1737
        %v1744 = vunpack.c.l.b16 %v1738
        %v1745 = vpack.c.b16 %v1743, %v1742
        %v1746 = vpack.c.b16 %v1744, %v1744
        %v1749 = vsel %vm1723, %v1735, 0
        %vm1751 = vcmask 1043456
        %v1753 = vsel %vm1751, %v1746, 0
        %1755 = vmatprep.subr.bf16.mxu0 0
        %1756 = vmatpush1.bf16.msra.mxu0 0
        %1757 = vmatprep.subr.bf16.mxu0 0
        %1758 = vmatpush1.bf16.msra.mxu0 0
        %1759 = vmatprep.subr.bf16.mxu0 0
        %1760 = vmatpush1.bf16.msra.mxu0 0
        %1761 = vmatprep.subr.bf16.mxu0 0
        %1762 = vmatpush1.bf16.msra.mxu0 0
        %1763 = vmatprep.subr.bf16.mxu0 0
        %1764 = vmatpush1.bf16.msra.mxu0 0
        %1765 = vmatprep.subr.bf16.mxu0 0
        %1766 = vmatpush1.bf16.msra.mxu0 0
        %1767 = vmatprep.subr.bf16.mxu0 0
        %1768 = vmatpush1.bf16.msra.mxu0 %v1753
        %1769 = vmatprep.subr.bf16.mxu0 0
        %1770 = vmatpush1.bf16.msra.mxu0 %v1745
        %1771 = vmatprep.subr.bf16.mxu0 0
        %1772 = vmatpush2.bf16.msra.mxu0 0
        %1773 = vmatprep.subr.bf16.mxu0 0
        %1774 = vmatpush2.bf16.msra.mxu0 0
        %1775 = vmatprep.subr.bf16.mxu0 0
        %1776 = vmatpush2.bf16.msra.mxu0 0
        %1777 = vmatprep.subr.bf16.mxu0 0
        %1778 = vmatpush2.bf16.msra.mxu0 0
        %1779 = vmatprep.subr.bf16.mxu0 0
        %1780 = vmatpush2.bf16.msra.mxu0 0
        %1781 = vmatprep.subr.bf16.mxu0 0
        %1782 = vmatpush2.bf16.msra.mxu0 0
        %1783 = vmatprep.subr.bf16.mxu0 0
        %1784 = vmatpush2.bf16.msra.mxu0 0
        %1785 = vmatprep.subr.bf16.mxu0 0
        %1786 = vmatpush2.bf16.msra.mxu0 0
        %1787 = vmatprep.mubr.bf16.mxu0 0
        %1788 = vmatmul.mubr.bf16.gmra.mxu0 %v1749
        %v1789 = vpop.f32.mrf.mxu0
        %v1790 = vadd.f32 0.0, %v1789
        %v1791 = vpop.f32.mrf.mxu0
        %v1792 = vpop.f32.mrf.mxu0
        %v1793 = vpop.f32.mrf.mxu0
        %1794 = vdwg.mxu0
        %v1795 = vpack.c.bf16 %v1790, %v1790
        %v1796 = vld [vmem:[%s10] sm:$0xf]
        %s1797 = scalar_lea.vmem %s4, 16
        %v1798 = vld [vmem:[%s1797] sm:$0xf]
        %v1799 = vld [vmem:[%s1797 + $0x4] sm:$0xf]
        %v1800 = vld [vmem:[%s1797 + $0x8] sm:$0xf]
        %v1801 = vld [vmem:[%s1797 + $0xc] sm:$0xf]
        %s1802 = scalar_lea.vmem %s5, 1
        %v1803 = vld [vmem:[%s1802] sm:$0x1]
        %v1805 = vlaneseq
        %v1806 = vshrl.u32 %v1805, 7
        %v1807 = vsub.s32 0, %v1806
        %v1808 = vrot.slane %v1803, %v1807
        %v1814 = vunpack.c.l.b16 %v1798
        %v1815 = vunpack.c.l.b16 %v1799
        %v1816 = vunpack.c.l.b16 %v1800
        %v1817 = vunpack.c.l.b16 %v1801
        %v1818 = vpack.c.b16 %v1815, %v1814
        %v1819 = vpack.c.b16 %v1817, %v1816
        %1822 = vmatprep.subr.bf16.mxu0 0
        %1823 = vmatpush1.bf16.msra.mxu0 0
        %1824 = vmatprep.subr.bf16.mxu0 0
        %1825 = vmatpush1.bf16.msra.mxu0 0
        %1826 = vmatprep.subr.bf16.mxu0 0
        %1827 = vmatpush1.bf16.msra.mxu0 0
        %1828 = vmatprep.subr.bf16.mxu0 0
        %1829 = vmatpush1.bf16.msra.mxu0 0
        %1830 = vmatprep.subr.bf16.mxu0 0
        %1831 = vmatpush1.bf16.msra.mxu0 0
        %1832 = vmatprep.subr.bf16.mxu0 0
        %1833 = vmatpush1.bf16.msra.mxu0 0
        %1834 = vmatprep.subr.bf16.mxu0 0
        %1835 = vmatpush1.bf16.msra.mxu0 %v1819
        %1836 = vmatprep.subr.bf16.mxu0 0
        %1837 = vmatpush1.bf16.msra.mxu0 %v1818
        %1838 = vmatprep.subr.bf16.mxu0 0
        %1839 = vmatpush2.bf16.msra.mxu0 0
        %1840 = vmatprep.subr.bf16.mxu0 0
        %1841 = vmatpush2.bf16.msra.mxu0 0
        %1842 = vmatprep.subr.bf16.mxu0 0
        %1843 = vmatpush2.bf16.msra.mxu0 0
        %1844 = vmatprep.subr.bf16.mxu0 0
        %1845 = vmatpush2.bf16.msra.mxu0 0
        %1846 = vmatprep.subr.bf16.mxu0 0
        %1847 = vmatpush2.bf16.msra.mxu0 0
        %1848 = vmatprep.subr.bf16.mxu0 0
        %1849 = vmatpush2.bf16.msra.mxu0 0
        %1850 = vmatprep.subr.bf16.mxu0 0
        %1851 = vmatpush2.bf16.msra.mxu0 0
        %1852 = vmatprep.subr.bf16.mxu0 0
        %1853 = vmatpush2.bf16.msra.mxu0 0
        %1854 = vmatprep.mubr.bf16.mxu0 0
        %1855 = vmatmul.mubr.bf16.gmra.mxu0 %v1618
        %v1856 = vpop.f32.mrf.mxu0
        %v1857 = vadd.f32 %v1808, %v1856
        %v1858 = vpop.f32.mrf.mxu0
        %v1859 = vpop.f32.mrf.mxu0
        %v1860 = vpop.f32.mrf.mxu0
        %1861 = vdwg.mxu0
        %v1862 = vmul.f32 %v1857, 0.35355338
        %v1863 = vpack.c.bf16 %v1862, %v1862
        %s1864 = scalar_lea.vmem [#allocation2], 12
        %v1865 = vld [vmem:[%s1864] sm:$0xf]
        %v1866 = vld [vmem:[%s1864 + $0x4] sm:$0xf]
        %v1867 = vld [vmem:[%s1864 + $0x8] sm:$0xf]
        %v1871 = vunpack.c.l.b16 %v1865
        %v1872 = vunpack.c.l.b16 %v1866
        %v1873 = vunpack.c.l.b16 %v1867
        %v1874 = vpack.c.b16 %v1872, %v1871
        %v1875 = vpack.c.b16 %v1873, %v1873
        %v1877 = vsel %vm1673, %v1863, 0
        %v1880 = vsel %vm1673, %v1874, 0
        %v1883 = vsel %vm1673, %v1875, 0
        %1885 = vmatprep.subr.bf16.mxu0 0
        %1886 = vmatpush1.bf16.xpose.msra.mxu0 0
        %1887 = vmatprep.subr.bf16.mxu0 0
        %1888 = vmatpush1.bf16.xpose.msra.mxu0 0
        %1889 = vmatprep.subr.bf16.mxu0 0
        %1890 = vmatpush1.bf16.xpose.msra.mxu0 0
        %1891 = vmatprep.subr.bf16.mxu0 0
        %1892 = vmatpush1.bf16.xpose.msra.mxu0 0
        %1893 = vmatprep.subr.bf16.mxu0 0
        %1894 = vmatpush1.bf16.xpose.msra.mxu0 0
        %1895 = vmatprep.subr.bf16.mxu0 0
        %1896 = vmatpush1.bf16.xpose.msra.mxu0 0
        %1897 = vmatprep.subr.bf16.mxu0 0
        %1898 = vmatpush1.bf16.xpose.msra.mxu0 %v1883
        %1899 = vmatprep.subr.bf16.mxu0 0
        %1900 = vmatpush1.bf16.xpose.msra.mxu0 %v1880
        %1901 = vmatprep.subr.bf16.mxu0 0
        %1902 = vmatpush2.bf16.xpose.msra.mxu0 0
        %1903 = vmatprep.subr.bf16.mxu0 0
        %1904 = vmatpush2.bf16.xpose.msra.mxu0 0
        %1905 = vmatprep.subr.bf16.mxu0 0
        %1906 = vmatpush2.bf16.xpose.msra.mxu0 0
        %1907 = vmatprep.subr.bf16.mxu0 0
        %1908 = vmatpush2.bf16.xpose.msra.mxu0 0
        %1909 = vmatprep.subr.bf16.mxu0 0
        %1910 = vmatpush2.bf16.xpose.msra.mxu0 0
        %1911 = vmatprep.subr.bf16.mxu0 0
        %1912 = vmatpush2.bf16.xpose.msra.mxu0 0
        %1913 = vmatprep.subr.bf16.mxu0 0
        %1914 = vmatpush2.bf16.xpose.msra.mxu0 0
        %1915 = vmatprep.subr.bf16.mxu0 0
        %1916 = vmatpush2.bf16.xpose.msra.mxu0 0
        %1917 = vmatprep.mubr.bf16.mxu0 0
        %1918 = vmatmul.mubr.bf16.gmra.mxu0 %v1877
        %v1919 = vpop.f32.mrf.mxu0
        %v1920 = vadd.f32 %v1593, %v1919
        %v1921 = vpop.f32.mrf.mxu0
        %v1922 = vpop.f32.mrf.mxu0
        %v1923 = vpop.f32.mrf.mxu0
        %1924 = vdwg.mxu0
        %v1925 = vsel %vm1723, %v1920, -inf
        %1926 = vmax.xlane.f32.xlu0 %v1925
        %v1927 = vpop.xlane.xlu0 %1926
        %v1928 = vsub.f32 %v1920, %v1927
        %v1929 = vmul.f32 %v1928, 1.442695
        %v1930 = vpow.pop %v1929
        %v1931 = vsel %vm1723, %v1930, 0.0
        %1932 = vadd.xlane.f32.xlu0 %v1931
        %v1933 = vpop.xlane.xlu0 %1932
        %v1934 = vrcp.pop %v1933
        %v1935 = vmul.f32 %v1930, %v1934
        %v1936 = vpack.c.bf16 %v1935, %v1935
        %s1937 = scalar_lea.vmem [#allocation3], 12
        %v1938 = vld [vmem:[%s1937] sm:$0xf]
        %v1939 = vld [vmem:[%s1937 + $0x4] sm:$0xf]
        %v1940 = vld [vmem:[%s1937 + $0x8] sm:$0xf]
        %v1944 = vunpack.c.l.b16 %v1938
        %v1945 = vunpack.c.l.b16 %v1939
        %v1946 = vunpack.c.l.b16 %v1940
        %v1947 = vpack.c.b16 %v1945, %v1944
        %v1948 = vpack.c.b16 %v1946, %v1946
        %v1951 = vsel %vm1723, %v1936, 0
        %v1954 = vsel %vm1751, %v1948, 0
        %1956 = vmatprep.subr.bf16.mxu0 0
        %1957 = vmatpush1.bf16.msra.mxu0 0
        %1958 = vmatprep.subr.bf16.mxu0 0
        %1959 = vmatpush1.bf16.msra.mxu0 0
        %1960 = vmatprep.subr.bf16.mxu0 0
        %1961 = vmatpush1.bf16.msra.mxu0 0
        %1962 = vmatprep.subr.bf16.mxu0 0
        %1963 = vmatpush1.bf16.msra.mxu0 0
        %1964 = vmatprep.subr.bf16.mxu0 0
        %1965 = vmatpush1.bf16.msra.mxu0 0
        %1966 = vmatprep.subr.bf16.mxu0 0
        %1967 = vmatpush1.bf16.msra.mxu0 0
        %1968 = vmatprep.subr.bf16.mxu0 0
        %1969 = vmatpush1.bf16.msra.mxu0 %v1954
        %1970 = vmatprep.subr.bf16.mxu0 0
        %1971 = vmatpush1.bf16.msra.mxu0 %v1947
        %1972 = vmatprep.subr.bf16.mxu0 0
        %1973 = vmatpush2.bf16.msra.mxu0 0
        %1974 = vmatprep.subr.bf16.mxu0 0
        %1975 = vmatpush2.bf16.msra.mxu0 0
        %1976 = vmatprep.subr.bf16.mxu0 0
        %1977 = vmatpush2.bf16.msra.mxu0 0
        %1978 = vmatprep.subr.bf16.mxu0 0
        %1979 = vmatpush2.bf16.msra.mxu0 0
        %1980 = vmatprep.subr.bf16.mxu0 0
        %1981 = vmatpush2.bf16.msra.mxu0 0
        %1982 = vmatprep.subr.bf16.mxu0 0
        %1983 = vmatpush2.bf16.msra.mxu0 0
        %1984 = vmatprep.subr.bf16.mxu0 0
        %1985 = vmatpush2.bf16.msra.mxu0 0
        %1986 = vmatprep.subr.bf16.mxu0 0
        %1987 = vmatpush2.bf16.msra.mxu0 0
        %1988 = vmatprep.mubr.bf16.mxu0 0
        %1989 = vmatmul.mubr.bf16.gmra.mxu0 %v1951
        %v1990 = vpop.f32.mrf.mxu0
        %v1991 = vadd.f32 0.0, %v1990
        %v1992 = vpop.f32.mrf.mxu0
        %v1993 = vpop.f32.mrf.mxu0
        %v1994 = vpop.f32.mrf.mxu0
        %1995 = vdwg.mxu0
        %v1996 = vpack.c.bf16 %v1991, %v1991
        %s1997 = scalar_lea.vmem %s10, 4
        %v1998 = vld [vmem:[%s1997] sm:$0xf]
        %v2000 = vsel %vm1673, %v1996, 0
        %v2003 = vsel %vm1751, %v1998, 0
        %2005 = vmatprep.subr.bf16.mxu0 0
        %2006 = vmatpush1.bf16.msra.mxu0 0
        %2007 = vmatprep.subr.bf16.mxu0 0
        %2008 = vmatpush1.bf16.msra.mxu0 0
        %2009 = vmatprep.subr.bf16.mxu0 0
        %2010 = vmatpush1.bf16.msra.mxu0 0
        %2011 = vmatprep.subr.bf16.mxu0 0
        %2012 = vmatpush1.bf16.msra.mxu0 0
        %2013 = vmatprep.subr.bf16.mxu0 0
        %2014 = vmatpush1.bf16.msra.mxu0 0
        %2015 = vmatprep.subr.bf16.mxu0 0
        %2016 = vmatpush1.bf16.msra.mxu0 0
        %2017 = vmatprep.subr.bf16.mxu0 0
        %2018 = vmatpush1.bf16.msra.mxu0 0
        %2019 = vmatprep.subr.bf16.mxu0 0
        %2020 = vmatpush1.bf16.msra.mxu0 %v2003
        %2021 = vmatprep.subr.bf16.mxu0 0
        %2022 = vmatpush2.bf16.msra.mxu0 0
        %2023 = vmatprep.subr.bf16.mxu0 0
        %2024 = vmatpush2.bf16.msra.mxu0 0
        %2025 = vmatprep.subr.bf16.mxu0 0
        %2026 = vmatpush2.bf16.msra.mxu0 0
        %2027 = vmatprep.subr.bf16.mxu0 0
        %2028 = vmatpush2.bf16.msra.mxu0 0
        %2029 = vmatprep.subr.bf16.mxu0 0
        %2030 = vmatpush2.bf16.msra.mxu0 0
        %2031 = vmatprep.subr.bf16.mxu0 0
        %2032 = vmatpush2.bf16.msra.mxu0 0
        %2033 = vmatprep.subr.bf16.mxu0 0
        %2034 = vmatpush2.bf16.msra.mxu0 0
        %2035 = vmatprep.subr.bf16.mxu0 0
        %2036 = vmatpush2.bf16.msra.mxu0 0
        %2037 = vmatprep.mubr.bf16.mxu0 0
        %2038 = vmatmul.mubr.bf16.gmra.mxu0 %v2000
        %v2039 = vpop.f32.mrf.mxu0
        %v2040 = vadd.f32 0.0, %v2039
        %v2041 = vpop.f32.mrf.mxu0
        %v2042 = vpop.f32.mrf.mxu0
        %v2043 = vpop.f32.mrf.mxu0
        %2044 = vdwg.mxu0
        %v2046 = vsel %vm1673, %v1795, 0
        %v2049 = vsel %vm1751, %v1796, 0
        %2051 = vmatprep.subr.bf16.mxu0 0
        %2052 = vmatpush1.bf16.msra.mxu0 0
        %2053 = vmatprep.subr.bf16.mxu0 0
        %2054 = vmatpush1.bf16.msra.mxu0 0
        %2055 = vmatprep.subr.bf16.mxu0 0
        %2056 = vmatpush1.bf16.msra.mxu0 0
        %2057 = vmatprep.subr.bf16.mxu0 0
        %2058 = vmatpush1.bf16.msra.mxu0 0
        %2059 = vmatprep.subr.bf16.mxu0 0
        %2060 = vmatpush1.bf16.msra.mxu0 0
        %2061 = vmatprep.subr.bf16.mxu0 0
        %2062 = vmatpush1.bf16.msra.mxu0 0
        %2063 = vmatprep.subr.bf16.mxu0 0
        %2064 = vmatpush1.bf16.msra.mxu0 0
        %2065 = vmatprep.subr.bf16.mxu0 0
        %2066 = vmatpush1.bf16.msra.mxu0 %v2049
        %2067 = vmatprep.subr.bf16.mxu0 0
        %2068 = vmatpush2.bf16.msra.mxu0 0
        %2069 = vmatprep.subr.bf16.mxu0 0
        %2070 = vmatpush2.bf16.msra.mxu0 0
        %2071 = vmatprep.subr.bf16.mxu0 0
        %2072 = vmatpush2.bf16.msra.mxu0 0
        %2073 = vmatprep.subr.bf16.mxu0 0
        %2074 = vmatpush2.bf16.msra.mxu0 0
        %2075 = vmatprep.subr.bf16.mxu0 0
        %2076 = vmatpush2.bf16.msra.mxu0 0
        %2077 = vmatprep.subr.bf16.mxu0 0
        %2078 = vmatpush2.bf16.msra.mxu0 0
        %2079 = vmatprep.subr.bf16.mxu0 0
        %2080 = vmatpush2.bf16.msra.mxu0 0
        %2081 = vmatprep.subr.bf16.mxu0 0
        %2082 = vmatpush2.bf16.msra.mxu0 0
        %2083 = vmatprep.mubr.bf16.mxu0 0
        %2084 = vmatmul.mubr.bf16.gmra.mxu0 %v2046
        %v2085 = vpop.f32.mrf.mxu0
        %v2086 = vadd.f32 %v2040, %v2085
        %v2087 = vpop.f32.mrf.mxu0
        %v2088 = vpop.f32.mrf.mxu0
        %v2089 = vpop.f32.mrf.mxu0
        %2090 = vdwg.mxu0
        %s2091 = scalar_lea.vmem %s4, 32
        %v2092 = vld [vmem:[%s2091] sm:$0xf]
        %v2093 = vld [vmem:[%s2091 + $0x4] sm:$0xf]
        %v2094 = vld [vmem:[%s2091 + $0x8] sm:$0xf]
        %v2095 = vld [vmem:[%s2091 + $0xc] sm:$0xf]
        %s2096 = scalar_lea.vmem %s5, 2
        %v2097 = vld [vmem:[%s2096] sm:$0x1]
        %v2099 = vlaneseq
        %v2100 = vshrl.u32 %v2099, 7
        %v2101 = vsub.s32 0, %v2100
        %v2102 = vrot.slane %v2097, %v2101
        %v2108 = vunpack.c.l.b16 %v2092
        %v2109 = vunpack.c.l.b16 %v2093
        %v2110 = vunpack.c.l.b16 %v2094
        %v2111 = vunpack.c.l.b16 %v2095
        %v2112 = vpack.c.b16 %v2109, %v2108
        %v2113 = vpack.c.b16 %v2111, %v2110
        %2116 = vmatprep.subr.bf16.mxu0 0
        %2117 = vmatpush1.bf16.msra.mxu0 0
        %2118 = vmatprep.subr.bf16.mxu0 0
        %2119 = vmatpush1.bf16.msra.mxu0 0
        %2120 = vmatprep.subr.bf16.mxu0 0
        %2121 = vmatpush1.bf16.msra.mxu0 0
        %2122 = vmatprep.subr.bf16.mxu0 0
        %2123 = vmatpush1.bf16.msra.mxu0 0
        %2124 = vmatprep.subr.bf16.mxu0 0
        %2125 = vmatpush1.bf16.msra.mxu0 0
        %2126 = vmatprep.subr.bf16.mxu0 0
        %2127 = vmatpush1.bf16.msra.mxu0 0
        %2128 = vmatprep.subr.bf16.mxu0 0
        %2129 = vmatpush1.bf16.msra.mxu0 %v2113
        %2130 = vmatprep.subr.bf16.mxu0 0
        %2131 = vmatpush1.bf16.msra.mxu0 %v2112
        %2132 = vmatprep.subr.bf16.mxu0 0
        %2133 = vmatpush2.bf16.msra.mxu0 0
        %2134 = vmatprep.subr.bf16.mxu0 0
        %2135 = vmatpush2.bf16.msra.mxu0 0
        %2136 = vmatprep.subr.bf16.mxu0 0
        %2137 = vmatpush2.bf16.msra.mxu0 0
        %2138 = vmatprep.subr.bf16.mxu0 0
        %2139 = vmatpush2.bf16.msra.mxu0 0
        %2140 = vmatprep.subr.bf16.mxu0 0
        %2141 = vmatpush2.bf16.msra.mxu0 0
        %2142 = vmatprep.subr.bf16.mxu0 0
        %2143 = vmatpush2.bf16.msra.mxu0 0
        %2144 = vmatprep.subr.bf16.mxu0 0
        %2145 = vmatpush2.bf16.msra.mxu0 0
        %2146 = vmatprep.subr.bf16.mxu0 0
        %2147 = vmatpush2.bf16.msra.mxu0 0
        %2148 = vmatprep.mubr.bf16.mxu0 0
        %2149 = vmatmul.mubr.bf16.gmra.mxu0 %v1618
        %v2150 = vpop.f32.mrf.mxu0
        %v2151 = vadd.f32 %v2102, %v2150
        %v2152 = vpop.f32.mrf.mxu0
        %v2153 = vpop.f32.mrf.mxu0
        %v2154 = vpop.f32.mrf.mxu0
        %2155 = vdwg.mxu0
        %v2156 = vmul.f32 %v2151, 0.35355338
        %v2157 = vpack.c.bf16 %v2156, %v2156
        %s2158 = scalar_lea.vmem [#allocation2], 24
        %v2159 = vld [vmem:[%s2158] sm:$0xf]
        %v2160 = vld [vmem:[%s2158 + $0x4] sm:$0xf]
        %v2161 = vld [vmem:[%s2158 + $0x8] sm:$0xf]
        %v2165 = vunpack.c.l.b16 %v2159
        %v2166 = vunpack.c.l.b16 %v2160
        %v2167 = vunpack.c.l.b16 %v2161
        %v2168 = vpack.c.b16 %v2166, %v2165
        %v2169 = vpack.c.b16 %v2167, %v2167
        %v2171 = vsel %vm1673, %v2157, 0
        %v2174 = vsel %vm1673, %v2168, 0
        %v2177 = vsel %vm1673, %v2169, 0
        %2179 = vmatprep.subr.bf16.mxu0 0
        %2180 = vmatpush1.bf16.xpose.msra.mxu0 0
        %2181 = vmatprep.subr.bf16.mxu0 0
        %2182 = vmatpush1.bf16.xpose.msra.mxu0 0
        %2183 = vmatprep.subr.bf16.mxu0 0
        %2184 = vmatpush1.bf16.xpose.msra.mxu0 0
        %2185 = vmatprep.subr.bf16.mxu0 0
        %2186 = vmatpush1.bf16.xpose.msra.mxu0 0
        %2187 = vmatprep.subr.bf16.mxu0 0
        %2188 = vmatpush1.bf16.xpose.msra.mxu0 0
        %2189 = vmatprep.subr.bf16.mxu0 0
        %2190 = vmatpush1.bf16.xpose.msra.mxu0 0
        %2191 = vmatprep.subr.bf16.mxu0 0
        %2192 = vmatpush1.bf16.xpose.msra.mxu0 %v2177
        %2193 = vmatprep.subr.bf16.mxu0 0
        %2194 = vmatpush1.bf16.xpose.msra.mxu0 %v2174
        %2195 = vmatprep.subr.bf16.mxu0 0
        %2196 = vmatpush2.bf16.xpose.msra.mxu0 0
        %2197 = vmatprep.subr.bf16.mxu0 0
        %2198 = vmatpush2.bf16.xpose.msra.mxu0 0
        %2199 = vmatprep.subr.bf16.mxu0 0
        %2200 = vmatpush2.bf16.xpose.msra.mxu0 0
        %2201 = vmatprep.subr.bf16.mxu0 0
        %2202 = vmatpush2.bf16.xpose.msra.mxu0 0
        %2203 = vmatprep.subr.bf16.mxu0 0
        %2204 = vmatpush2.bf16.xpose.msra.mxu0 0
        %2205 = vmatprep.subr.bf16.mxu0 0
        %2206 = vmatpush2.bf16.xpose.msra.mxu0 0
        %2207 = vmatprep.subr.bf16.mxu0 0
        %2208 = vmatpush2.bf16.xpose.msra.mxu0 0
        %2209 = vmatprep.subr.bf16.mxu0 0
        %2210 = vmatpush2.bf16.xpose.msra.mxu0 0
        %2211 = vmatprep.mubr.bf16.mxu0 0
        %2212 = vmatmul.mubr.bf16.gmra.mxu0 %v2171
        %v2213 = vpop.f32.mrf.mxu0
        %v2214 = vadd.f32 %v1593, %v2213
        %v2215 = vpop.f32.mrf.mxu0
        %v2216 = vpop.f32.mrf.mxu0
        %v2217 = vpop.f32.mrf.mxu0
        %2218 = vdwg.mxu0
        %v2219 = vsel %vm1723, %v2214, -inf
        %2220 = vmax.xlane.f32.xlu0 %v2219
        %v2221 = vpop.xlane.xlu0 %2220
        %v2222 = vsub.f32 %v2214, %v2221
        %v2223 = vmul.f32 %v2222, 1.442695
        %v2224 = vpow.pop %v2223
        %v2225 = vsel %vm1723, %v2224, 0.0
        %2226 = vadd.xlane.f32.xlu0 %v2225
        %v2227 = vpop.xlane.xlu0 %2226
        %v2228 = vrcp.pop %v2227
        %v2229 = vmul.f32 %v2224, %v2228
        %v2230 = vpack.c.bf16 %v2229, %v2229
        %s2231 = scalar_lea.vmem [#allocation3], 24
        %v2232 = vld [vmem:[%s2231] sm:$0xf]
        %v2233 = vld [vmem:[%s2231 + $0x4] sm:$0xf]
        %v2234 = vld [vmem:[%s2231 + $0x8] sm:$0xf]
        %v2238 = vunpack.c.l.b16 %v2232
        %v2239 = vunpack.c.l.b16 %v2233
        %v2240 = vunpack.c.l.b16 %v2234
        %v2241 = vpack.c.b16 %v2239, %v2238
        %v2242 = vpack.c.b16 %v2240, %v2240
        %v2245 = vsel %vm1723, %v2230, 0
        %v2248 = vsel %vm1751, %v2242, 0
        %2250 = vmatprep.subr.bf16.mxu0 0
        %2251 = vmatpush1.bf16.msra.mxu0 0
        %2252 = vmatprep.subr.bf16.mxu0 0
        %2253 = vmatpush1.bf16.msra.mxu0 0
        %2254 = vmatprep.subr.bf16.mxu0 0
        %2255 = vmatpush1.bf16.msra.mxu0 0
        %2256 = vmatprep.subr.bf16.mxu0 0
        %2257 = vmatpush1.bf16.msra.mxu0 0
        %2258 = vmatprep.subr.bf16.mxu0 0
        %2259 = vmatpush1.bf16.msra.mxu0 0
        %2260 = vmatprep.subr.bf16.mxu0 0
        %2261 = vmatpush1.bf16.msra.mxu0 0
        %2262 = vmatprep.subr.bf16.mxu0 0
        %2263 = vmatpush1.bf16.msra.mxu0 %v2248
        %2264 = vmatprep.subr.bf16.mxu0 0
        %2265 = vmatpush1.bf16.msra.mxu0 %v2241
        %2266 = vmatprep.subr.bf16.mxu0 0
        %2267 = vmatpush2.bf16.msra.mxu0 0
        %2268 = vmatprep.subr.bf16.mxu0 0
        %2269 = vmatpush2.bf16.msra.mxu0 0
        %2270 = vmatprep.subr.bf16.mxu0 0
        %2271 = vmatpush2.bf16.msra.mxu0 0
        %2272 = vmatprep.subr.bf16.mxu0 0
        %2273 = vmatpush2.bf16.msra.mxu0 0
        %2274 = vmatprep.subr.bf16.mxu0 0
        %2275 = vmatpush2.bf16.msra.mxu0 0
        %2276 = vmatprep.subr.bf16.mxu0 0
        %2277 = vmatpush2.bf16.msra.mxu0 0
        %2278 = vmatprep.subr.bf16.mxu0 0
        %2279 = vmatpush2.bf16.msra.mxu0 0
        %2280 = vmatprep.subr.bf16.mxu0 0
        %2281 = vmatpush2.bf16.msra.mxu0 0
        %2282 = vmatprep.mubr.bf16.mxu0 0
        %2283 = vmatmul.mubr.bf16.gmra.mxu0 %v2245
        %v2284 = vpop.f32.mrf.mxu0
        %v2285 = vadd.f32 0.0, %v2284
        %v2286 = vpop.f32.mrf.mxu0
        %v2287 = vpop.f32.mrf.mxu0
        %v2288 = vpop.f32.mrf.mxu0
        %2289 = vdwg.mxu0
        %v2290 = vpack.c.bf16 %v2285, %v2285
        %s2291 = scalar_lea.vmem %s10, 8
        %v2292 = vld [vmem:[%s2291] sm:$0xf]
        %v2294 = vsel %vm1673, %v2290, 0
        %v2297 = vsel %vm1751, %v2292, 0
        %2299 = vmatprep.subr.bf16.mxu0 0
        %2300 = vmatpush1.bf16.msra.mxu0 0
        %2301 = vmatprep.subr.bf16.mxu0 0
        %2302 = vmatpush1.bf16.msra.mxu0 0
        %2303 = vmatprep.subr.bf16.mxu0 0
        %2304 = vmatpush1.bf16.msra.mxu0 0
        %2305 = vmatprep.subr.bf16.mxu0 0
        %2306 = vmatpush1.bf16.msra.mxu0 0
        %2307 = vmatprep.subr.bf16.mxu0 0
        %2308 = vmatpush1.bf16.msra.mxu0 0
        %2309 = vmatprep.subr.bf16.mxu0 0
        %2310 = vmatpush1.bf16.msra.mxu0 0
        %2311 = vmatprep.subr.bf16.mxu0 0
        %2312 = vmatpush1.bf16.msra.mxu0 0
        %2313 = vmatprep.subr.bf16.mxu0 0
        %2314 = vmatpush1.bf16.msra.mxu0 %v2297
        %2315 = vmatprep.subr.bf16.mxu0 0
        %2316 = vmatpush2.bf16.msra.mxu0 0
        %2317 = vmatprep.subr.bf16.mxu0 0
        %2318 = vmatpush2.bf16.msra.mxu0 0
        %2319 = vmatprep.subr.bf16.mxu0 0
        %2320 = vmatpush2.bf16.msra.mxu0 0
        %2321 = vmatprep.subr.bf16.mxu0 0
        %2322 = vmatpush2.bf16.msra.mxu0 0
        %2323 = vmatprep.subr.bf16.mxu0 0
        %2324 = vmatpush2.bf16.msra.mxu0 0
        %2325 = vmatprep.subr.bf16.mxu0 0
        %2326 = vmatpush2.bf16.msra.mxu0 0
        %2327 = vmatprep.subr.bf16.mxu0 0
        %2328 = vmatpush2.bf16.msra.mxu0 0
        %2329 = vmatprep.subr.bf16.mxu0 0
        %2330 = vmatpush2.bf16.msra.mxu0 0
        %2331 = vmatprep.mubr.bf16.mxu0 0
        %2332 = vmatmul.mubr.bf16.gmra.mxu0 %v2294
        %v2333 = vpop.f32.mrf.mxu0
        %v2334 = vadd.f32 0.0, %v2333
        %v2335 = vpop.f32.mrf.mxu0
        %v2336 = vpop.f32.mrf.mxu0
        %v2337 = vpop.f32.mrf.mxu0
        %2338 = vdwg.mxu0
        %v2339 = vadd.f32 %v2086, %v2334
        %s2340 = scalar_lea.vmem %s4, 48
        %v2341 = vld [vmem:[%s2340] sm:$0xf]
        %v2342 = vld [vmem:[%s2340 + $0x4] sm:$0xf]
        %v2343 = vld [vmem:[%s2340 + $0x8] sm:$0xf]
        %v2344 = vld [vmem:[%s2340 + $0xc] sm:$0xf]
        %s2345 = scalar_lea.vmem %s5, 3
        %v2346 = vld [vmem:[%s2345] sm:$0x1]
        %v2348 = vlaneseq
        %v2349 = vshrl.u32 %v2348, 7
        %v2350 = vsub.s32 0, %v2349
        %v2351 = vrot.slane %v2346, %v2350
        %v2357 = vunpack.c.l.b16 %v2341
        %v2358 = vunpack.c.l.b16 %v2342
        %v2359 = vunpack.c.l.b16 %v2343
        %v2360 = vunpack.c.l.b16 %v2344
        %v2361 = vpack.c.b16 %v2358, %v2357
        %v2362 = vpack.c.b16 %v2360, %v2359
        %2365 = vmatprep.subr.bf16.mxu0 0
        %2366 = vmatpush1.bf16.msra.mxu0 0
        %2367 = vmatprep.subr.bf16.mxu0 0
        %2368 = vmatpush1.bf16.msra.mxu0 0
        %2369 = vmatprep.subr.bf16.mxu0 0
        %2370 = vmatpush1.bf16.msra.mxu0 0
        %2371 = vmatprep.subr.bf16.mxu0 0
        %2372 = vmatpush1.bf16.msra.mxu0 0
        %2373 = vmatprep.subr.bf16.mxu0 0
        %2374 = vmatpush1.bf16.msra.mxu0 0
        %2375 = vmatprep.subr.bf16.mxu0 0
        %2376 = vmatpush1.bf16.msra.mxu0 0
        %2377 = vmatprep.subr.bf16.mxu0 0
        %2378 = vmatpush1.bf16.msra.mxu0 %v2362
        %2379 = vmatprep.subr.bf16.mxu0 0
        %2380 = vmatpush1.bf16.msra.mxu0 %v2361
        %2381 = vmatprep.subr.bf16.mxu0 0
        %2382 = vmatpush2.bf16.msra.mxu0 0
        %2383 = vmatprep.subr.bf16.mxu0 0
        %2384 = vmatpush2.bf16.msra.mxu0 0
        %2385 = vmatprep.subr.bf16.mxu0 0
        %2386 = vmatpush2.bf16.msra.mxu0 0
        %2387 = vmatprep.subr.bf16.mxu0 0
        %2388 = vmatpush2.bf16.msra.mxu0 0
        %2389 = vmatprep.subr.bf16.mxu0 0
        %2390 = vmatpush2.bf16.msra.mxu0 0
        %2391 = vmatprep.subr.bf16.mxu0 0
        %2392 = vmatpush2.bf16.msra.mxu0 0
        %2393 = vmatprep.subr.bf16.mxu0 0
        %2394 = vmatpush2.bf16.msra.mxu0 0
        %2395 = vmatprep.subr.bf16.mxu0 0
        %2396 = vmatpush2.bf16.msra.mxu0 0
        %2397 = vmatprep.mubr.bf16.mxu0 0
        %2398 = vmatmul.mubr.bf16.gmra.mxu0 %v1618
        %v2399 = vpop.f32.mrf.mxu0
        %v2400 = vadd.f32 %v2351, %v2399
        %v2401 = vpop.f32.mrf.mxu0
        %v2402 = vpop.f32.mrf.mxu0
        %v2403 = vpop.f32.mrf.mxu0
        %2404 = vdwg.mxu0
        %v2405 = vmul.f32 %v2400, 0.35355338
        %v2406 = vpack.c.bf16 %v2405, %v2405
        %s2407 = scalar_lea.vmem [#allocation2], 36
        %v2408 = vld [vmem:[%s2407] sm:$0xf]
        %v2409 = vld [vmem:[%s2407 + $0x4] sm:$0xf]
        %v2410 = vld [vmem:[%s2407 + $0x8] sm:$0xf]
        %v2414 = vunpack.c.l.b16 %v2408
        %v2415 = vunpack.c.l.b16 %v2409
        %v2416 = vunpack.c.l.b16 %v2410
        %v2417 = vpack.c.b16 %v2415, %v2414
        %v2418 = vpack.c.b16 %v2416, %v2416
        %v2420 = vsel %vm1673, %v2406, 0
        %v2423 = vsel %vm1673, %v2417, 0
        %v2426 = vsel %vm1673, %v2418, 0
        %2428 = vmatprep.subr.bf16.mxu0 0
        %2429 = vmatpush1.bf16.xpose.msra.mxu0 0
        %2430 = vmatprep.subr.bf16.mxu0 0
        %2431 = vmatpush1.bf16.xpose.msra.mxu0 0
        %2432 = vmatprep.subr.bf16.mxu0 0
        %2433 = vmatpush1.bf16.xpose.msra.mxu0 0
        %2434 = vmatprep.subr.bf16.mxu0 0
        %2435 = vmatpush1.bf16.xpose.msra.mxu0 0
        %2436 = vmatprep.subr.bf16.mxu0 0
        %2437 = vmatpush1.bf16.xpose.msra.mxu0 0
        %2438 = vmatprep.subr.bf16.mxu0 0
        %2439 = vmatpush1.bf16.xpose.msra.mxu0 0
        %2440 = vmatprep.subr.bf16.mxu0 0
        %2441 = vmatpush1.bf16.xpose.msra.mxu0 %v2426
        %2442 = vmatprep.subr.bf16.mxu0 0
        %2443 = vmatpush1.bf16.xpose.msra.mxu0 %v2423
        %2444 = vmatprep.subr.bf16.mxu0 0
        %2445 = vmatpush2.bf16.xpose.msra.mxu0 0
        %2446 = vmatprep.subr.bf16.mxu0 0
        %2447 = vmatpush2.bf16.xpose.msra.mxu0 0
        %2448 = vmatprep.subr.bf16.mxu0 0
        %2449 = vmatpush2.bf16.xpose.msra.mxu0 0
        %2450 = vmatprep.subr.bf16.mxu0 0
        %2451 = vmatpush2.bf16.xpose.msra.mxu0 0
        %2452 = vmatprep.subr.bf16.mxu0 0
        %2453 = vmatpush2.bf16.xpose.msra.mxu0 0
        %2454 = vmatprep.subr.bf16.mxu0 0
        %2455 = vmatpush2.bf16.xpose.msra.mxu0 0
        %2456 = vmatprep.subr.bf16.mxu0 0
        %2457 = vmatpush2.bf16.xpose.msra.mxu0 0
        %2458 = vmatprep.subr.bf16.mxu0 0
        %2459 = vmatpush2.bf16.xpose.msra.mxu0 0
        %2460 = vmatprep.mubr.bf16.mxu0 0
        %2461 = vmatmul.mubr.bf16.gmra.mxu0 %v2420
        %v2462 = vpop.f32.mrf.mxu0
        %v2463 = vadd.f32 %v1593, %v2462
        %v2464 = vpop.f32.mrf.mxu0
        %v2465 = vpop.f32.mrf.mxu0
        %v2466 = vpop.f32.mrf.mxu0
        %2467 = vdwg.mxu0
        %v2468 = vsel %vm1723, %v2463, -inf
        %2469 = vmax.xlane.f32.xlu0 %v2468
        %v2470 = vpop.xlane.xlu0 %2469
        %v2471 = vsub.f32 %v2463, %v2470
        %v2472 = vmul.f32 %v2471, 1.442695
        %v2473 = vpow.pop %v2472
        %v2474 = vsel %vm1723, %v2473, 0.0
        %2475 = vadd.xlane.f32.xlu0 %v2474
        %v2476 = vpop.xlane.xlu0 %2475
        %v2477 = vrcp.pop %v2476
        %v2478 = vmul.f32 %v2473, %v2477
        %v2479 = vpack.c.bf16 %v2478, %v2478
        %s2480 = scalar_lea.vmem [#allocation3], 36
        %v2481 = vld [vmem:[%s2480] sm:$0xf]
        %v2482 = vld [vmem:[%s2480 + $0x4] sm:$0xf]
        %v2483 = vld [vmem:[%s2480 + $0x8] sm:$0xf]
        %v2487 = vunpack.c.l.b16 %v2481
        %v2488 = vunpack.c.l.b16 %v2482
        %v2489 = vunpack.c.l.b16 %v2483
        %v2490 = vpack.c.b16 %v2488, %v2487
        %v2491 = vpack.c.b16 %v2489, %v2489
        %v2494 = vsel %vm1723, %v2479, 0
        %v2497 = vsel %vm1751, %v2491, 0
        %2499 = vmatprep.subr.bf16.mxu0 0
        %2500 = vmatpush1.bf16.msra.mxu0 0
        %2501 = vmatprep.subr.bf16.mxu0 0
        %2502 = vmatpush1.bf16.msra.mxu0 0
        %2503 = vmatprep.subr.bf16.mxu0 0
        %2504 = vmatpush1.bf16.msra.mxu0 0
        %2505 = vmatprep.subr.bf16.mxu0 0
        %2506 = vmatpush1.bf16.msra.mxu0 0
        %2507 = vmatprep.subr.bf16.mxu0 0
        %2508 = vmatpush1.bf16.msra.mxu0 0
        %2509 = vmatprep.subr.bf16.mxu0 0
        %2510 = vmatpush1.bf16.msra.mxu0 0
        %2511 = vmatprep.subr.bf16.mxu0 0
        %2512 = vmatpush1.bf16.msra.mxu0 %v2497
        %2513 = vmatprep.subr.bf16.mxu0 0
        %2514 = vmatpush1.bf16.msra.mxu0 %v2490
        %2515 = vmatprep.subr.bf16.mxu0 0
        %2516 = vmatpush2.bf16.msra.mxu0 0
        %2517 = vmatprep.subr.bf16.mxu0 0
        %2518 = vmatpush2.bf16.msra.mxu0 0
        %2519 = vmatprep.subr.bf16.mxu0 0
        %2520 = vmatpush2.bf16.msra.mxu0 0
        %2521 = vmatprep.subr.bf16.mxu0 0
        %2522 = vmatpush2.bf16.msra.mxu0 0
        %2523 = vmatprep.subr.bf16.mxu0 0
        %2524 = vmatpush2.bf16.msra.mxu0 0
        %2525 = vmatprep.subr.bf16.mxu0 0
        %2526 = vmatpush2.bf16.msra.mxu0 0
        %2527 = vmatprep.subr.bf16.mxu0 0
        %2528 = vmatpush2.bf16.msra.mxu0 0
        %2529 = vmatprep.subr.bf16.mxu0 0
        %2530 = vmatpush2.bf16.msra.mxu0 0
        %2531 = vmatprep.mubr.bf16.mxu0 0
        %2532 = vmatmul.mubr.bf16.gmra.mxu0 %v2494
        %v2533 = vpop.f32.mrf.mxu0
        %v2534 = vadd.f32 0.0, %v2533
        %v2535 = vpop.f32.mrf.mxu0
        %v2536 = vpop.f32.mrf.mxu0
        %v2537 = vpop.f32.mrf.mxu0
        %2538 = vdwg.mxu0
        %v2539 = vpack.c.bf16 %v2534, %v2534
        %s2540 = scalar_lea.vmem %s10, 12
        %v2541 = vld [vmem:[%s2540] sm:$0xf]
        %v2543 = vsel %vm1673, %v2539, 0
        %v2546 = vsel %vm1751, %v2541, 0
        %2548 = vmatprep.subr.bf16.mxu0 0
        %2549 = vmatpush1.bf16.msra.mxu0 0
        %2550 = vmatprep.subr.bf16.mxu0 0
        %2551 = vmatpush1.bf16.msra.mxu0 0
        %2552 = vmatprep.subr.bf16.mxu0 0
        %2553 = vmatpush1.bf16.msra.mxu0 0
        %2554 = vmatprep.subr.bf16.mxu0 0
        %2555 = vmatpush1.bf16.msra.mxu0 0
        %2556 = vmatprep.subr.bf16.mxu0 0
        %2557 = vmatpush1.bf16.msra.mxu0 0
        %2558 = vmatprep.subr.bf16.mxu0 0
        %2559 = vmatpush1.bf16.msra.mxu0 0
        %2560 = vmatprep.subr.bf16.mxu0 0
        %2561 = vmatpush1.bf16.msra.mxu0 0
        %2562 = vmatprep.subr.bf16.mxu0 0
        %2563 = vmatpush1.bf16.msra.mxu0 %v2546
        %2564 = vmatprep.subr.bf16.mxu0 0
        %2565 = vmatpush2.bf16.msra.mxu0 0
        %2566 = vmatprep.subr.bf16.mxu0 0
        %2567 = vmatpush2.bf16.msra.mxu0 0
        %2568 = vmatprep.subr.bf16.mxu0 0
        %2569 = vmatpush2.bf16.msra.mxu0 0
        %2570 = vmatprep.subr.bf16.mxu0 0
        %2571 = vmatpush2.bf16.msra.mxu0 0
        %2572 = vmatprep.subr.bf16.mxu0 0
        %2573 = vmatpush2.bf16.msra.mxu0 0
        %2574 = vmatprep.subr.bf16.mxu0 0
        %2575 = vmatpush2.bf16.msra.mxu0 0
        %2576 = vmatprep.subr.bf16.mxu0 0
        %2577 = vmatpush2.bf16.msra.mxu0 0
        %2578 = vmatprep.subr.bf16.mxu0 0
        %2579 = vmatpush2.bf16.msra.mxu0 0
        %2580 = vmatprep.mubr.bf16.mxu0 0
        %2581 = vmatmul.mubr.bf16.gmra.mxu0 %v2543
        %v2582 = vpop.f32.mrf.mxu0
        %v2583 = vadd.f32 0.0, %v2582
        %v2584 = vpop.f32.mrf.mxu0
        %v2585 = vpop.f32.mrf.mxu0
        %v2586 = vpop.f32.mrf.mxu0
        %2587 = vdwg.mxu0
        %v2588 = vadd.f32 %v2339, %v2583
        %v2589 = vld [vmem:[%s12] sm:$0x1]
        %v2590 = vld [vmem:[%s11] sm:$0x1]
        %v2592 = vlaneseq
        %v2593 = vshrl.u32 %v2592, 7
        %v2594 = vsub.s32 0, %v2593
        %v2595 = vrot.slane %v2590, %v2594
        %v2597 = vadd.f32 %v2588, %v2595
        %v2599 = vlaneseq
        %v2600 = vshrl.u32 %v2599, 7
        %v2601 = vsub.s32 0, %v2600
        %v2602 = vrot.slane %v2589, %v2601
        %v2604 = vmul.f32 %v2602, %v2597
        %v2605 = vadd.f32 %v1559, %v2604
        %v2606 = vld [vmem:[%s13] sm:$0x1]
        %v2607 = vld [vmem:[%s14] sm:$0x1]
        %v2608 = vsel %vm1560, %v2605, 0.0
        %2609 = vadd.xlane.f32.xlu0 %v2608
        %v2610 = vpop.xlane.xlu0 %2609
        %v2611 = vmul.f32 %v2610, %v1564
        %v2612 = vsub.f32 %v2605, %v2611
        %v2613 = vmul.f32 %v2612, %v2612
        %v2614 = vsel %vm1560, %v2613, 0.0
        %2615 = vadd.xlane.f32.xlu0 %v2614
        %v2616 = vpop.xlane.xlu0 %2615
        %v2617 = vmul.f32 %v2616, %v1564
        %v2618 = vadd.f32 %v2617, 1e-06
        %v2619 = vrsqrt.pop %v2618
        %v2620 = vmul.f32 %v2612, %v2619
        %v2622 = vlaneseq
        %v2623 = vshrl.u32 %v2622, 7
        %v2624 = vsub.s32 0, %v2623
        %v2625 = vrot.slane %v2606, %v2624
        %v2627 = vmul.f32 %v2620, %v2625
        %v2629 = vlaneseq
        %v2630 = vshrl.u32 %v2629, 7
        %v2631 = vsub.s32 0, %v2630
        %v2632 = vrot.slane %v2607, %v2631
        %v2634 = vadd.f32 %v2627, %v2632
        %v2635 = vpack.c.bf16 %v2634, %v2634
        %v2636 = vld [vmem:[%s15] sm:$0xf]
        %v2637 = vld [vmem:[%s15 + $0x4] sm:$0xf]
        %v2638 = vld [vmem:[%s15 + $0x8] sm:$0xf]
        %v2639 = vld [vmem:[%s15 + $0xc] sm:$0xf]
        %v2640 = vld [vmem:[%s16] sm:$0x1]
        %v2642 = vlaneseq
        %v2643 = vshrl.u32 %v2642, 7
        %v2644 = vsub.s32 0, %v2643
        %v2645 = vrot.slane %v2640, %v2644
        %v2651 = vunpack.c.l.b16 %v2636
        %v2652 = vunpack.c.l.b16 %v2637
        %v2653 = vunpack.c.l.b16 %v2638
        %v2654 = vunpack.c.l.b16 %v2639
        %v2655 = vpack.c.b16 %v2652, %v2651
        %v2656 = vpack.c.b16 %v2654, %v2653
        %v2660 = vsel %vm1560, %v2635, 0
        %2662 = vmatprep.subr.bf16.mxu0 0
        %2663 = vmatpush1.bf16.msra.mxu0 0
        %2664 = vmatprep.subr.bf16.mxu0 0
        %2665 = vmatpush1.bf16.msra.mxu0 0
        %2666 = vmatprep.subr.bf16.mxu0 0
        %2667 = vmatpush1.bf16.msra.mxu0 0
        %2668 = vmatprep.subr.bf16.mxu0 0
        %2669 = vmatpush1.bf16.msra.mxu0 0
        %2670 = vmatprep.subr.bf16.mxu0 0
        %2671 = vmatpush1.bf16.msra.mxu0 0
        %2672 = vmatprep.subr.bf16.mxu0 0
        %2673 = vmatpush1.bf16.msra.mxu0 0
        %2674 = vmatprep.subr.bf16.mxu0 0
        %2675 = vmatpush1.bf16.msra.mxu0 %v2656
        %2676 = vmatprep.subr.bf16.mxu0 0
        %2677 = vmatpush1.bf16.msra.mxu0 %v2655
        %2678 = vmatprep.subr.bf16.mxu0 0
        %2679 = vmatpush2.bf16.msra.mxu0 0
        %2680 = vmatprep.subr.bf16.mxu0 0
        %2681 = vmatpush2.bf16.msra.mxu0 0
        %2682 = vmatprep.subr.bf16.mxu0 0
        %2683 = vmatpush2.bf16.msra.mxu0 0
        %2684 = vmatprep.subr.bf16.mxu0 0
        %2685 = vmatpush2.bf16.msra.mxu0 0
        %2686 = vmatprep.subr.bf16.mxu0 0
        %2687 = vmatpush2.bf16.msra.mxu0 0
        %2688 = vmatprep.subr.bf16.mxu0 0
        %2689 = vmatpush2.bf16.msra.mxu0 0
        %2690 = vmatprep.subr.bf16.mxu0 0
        %2691 = vmatpush2.bf16.msra.mxu0 0
        %2692 = vmatprep.subr.bf16.mxu0 0
        %2693 = vmatpush2.bf16.msra.mxu0 0
        %2694 = vmatprep.mubr.bf16.mxu0 0
        %2695 = vmatmul.mubr.bf16.gmra.mxu0 %v2660
        %v2696 = vpop.f32.mrf.mxu0
        %v2697 = vadd.f32 %v2645, %v2696
        %v2698 = vpop.f32.mrf.mxu0
        %v2699 = vpop.f32.mrf.mxu0
        %v2700 = vpop.f32.mrf.mxu0
        %2701 = vdwg.mxu0
        %v2702 = vmul.f32 %v2697, %v2697
        %v2703 = vmul.f32 %v2697, %v2702
        %v2704 = vmul.f32 %v2703, 0.044715
        %v2705 = vadd.f32 %v2697, %v2704
        %v2706 = vmul.f32 %v2705, 0.7978846
        %v2707 = vtanh.pop %v2706
        %v2708 = vadd.f32 %v2707, 1.0
        %v2709 = vmul.f32 %v2708, 0.5
        %v2710 = vmul.f32 %v2697, %v2709
        %v2711 = vpack.c.bf16 %v2710, %v2710
        %v2712 = vld [vmem:[%s17] sm:$0xf]
        %v2713 = vld [vmem:[%s17 + $0x4] sm:$0xf]
        %v2714 = vld [vmem:[%s17 + $0x8] sm:$0xf]
        %v2715 = vld [vmem:[%s17 + $0xc] sm:$0xf]
        %v2716 = vld [vmem:[%s17 + $0x10] sm:$0xf]
        %v2717 = vld [vmem:[%s17 + $0x14] sm:$0xf]
        %v2718 = vld [vmem:[%s17 + $0x18] sm:$0xf]
        %v2719 = vld [vmem:[%s17 + $0x1c] sm:$0xf]
        %v2720 = vld [vmem:[%s17 + $0x20] sm:$0xf]
        %v2721 = vld [vmem:[%s17 + $0x24] sm:$0xf]
        %v2722 = vld [vmem:[%s17 + $0x28] sm:$0xf]
        %v2723 = vld [vmem:[%s17 + $0x2c] sm:$0xf]
        %v2724 = vld [vmem:[%s17 + $0x30] sm:$0xf]
        %v2725 = vld [vmem:[%s17 + $0x34] sm:$0xf]
        %v2726 = vld [vmem:[%s17 + $0x38] sm:$0xf]
        %v2727 = vld [vmem:[%s17 + $0x3c] sm:$0xf]
        %v2728 = vld [vmem:[%s18] sm:$0x1]
        %v2730 = vlaneseq
        %v2731 = vshrl.u32 %v2730, 7
        %v2732 = vsub.s32 0, %v2731
        %v2733 = vrot.slane %v2728, %v2732
        %v2751 = vunpack.c.l.b16 %v2712
        %v2752 = vunpack.c.l.b16 %v2713
        %v2753 = vunpack.c.l.b16 %v2714
        %v2754 = vunpack.c.l.b16 %v2715
        %v2755 = vunpack.c.l.b16 %v2716
        %v2756 = vunpack.c.l.b16 %v2717
        %v2757 = vunpack.c.l.b16 %v2718
        %v2758 = vunpack.c.l.b16 %v2719
        %v2759 = vunpack.c.l.b16 %v2720
        %v2760 = vunpack.c.l.b16 %v2721
        %v2761 = vunpack.c.l.b16 %v2722
        %v2762 = vunpack.c.l.b16 %v2723
        %v2763 = vunpack.c.l.b16 %v2724
        %v2764 = vunpack.c.l.b16 %v2725
        %v2765 = vunpack.c.l.b16 %v2726
        %v2766 = vunpack.c.l.b16 %v2727
        %v2767 = vpack.c.b16 %v2752, %v2751
        %v2768 = vpack.c.b16 %v2754, %v2753
        %v2769 = vpack.c.b16 %v2756, %v2755
        %v2770 = vpack.c.b16 %v2758, %v2757
        %v2771 = vpack.c.b16 %v2760, %v2759
        %v2772 = vpack.c.b16 %v2762, %v2761
        %v2773 = vpack.c.b16 %v2764, %v2763
        %v2774 = vpack.c.b16 %v2766, %v2765
        %2783 = vmatprep.subr.bf16.mxu0 0
        %2784 = vmatpush1.bf16.msra.mxu0 %v2774
        %2785 = vmatprep.subr.bf16.mxu0 0
        %2786 = vmatpush1.bf16.msra.mxu0 %v2773
        %2787 = vmatprep.subr.bf16.mxu0 0
        %2788 = vmatpush1.bf16.msra.mxu0 %v2772
        %2789 = vmatprep.subr.bf16.mxu0 0
        %2790 = vmatpush1.bf16.msra.mxu0 %v2771
        %2791 = vmatprep.subr.bf16.mxu0 0
        %2792 = vmatpush1.bf16.msra.mxu0 %v2770
        %2793 = vmatprep.subr.bf16.mxu0 0
        %2794 = vmatpush1.bf16.msra.mxu0 %v2769
        %2795 = vmatprep.subr.bf16.mxu0 0
        %2796 = vmatpush1.bf16.msra.mxu0 %v2768
        %2797 = vmatprep.subr.bf16.mxu0 0
        %2798 = vmatpush1.bf16.msra.mxu0 %v2767
        %2799 = vmatprep.subr.bf16.mxu0 0
        %2800 = vmatpush2.bf16.msra.mxu0 0
        %2801 = vmatprep.subr.bf16.mxu0 0
        %2802 = vmatpush2.bf16.msra.mxu0 0
        %2803 = vmatprep.subr.bf16.mxu0 0
        %2804 = vmatpush2.bf16.msra.mxu0 0
        %2805 = vmatprep.subr.bf16.mxu0 0
        %2806 = vmatpush2.bf16.msra.mxu0 0
        %2807 = vmatprep.subr.bf16.mxu0 0
        %2808 = vmatpush2.bf16.msra.mxu0 0
        %2809 = vmatprep.subr.bf16.mxu0 0
        %2810 = vmatpush2.bf16.msra.mxu0 0
        %2811 = vmatprep.subr.bf16.mxu0 0
        %2812 = vmatpush2.bf16.msra.mxu0 0
        %2813 = vmatprep.subr.bf16.mxu0 0
        %2814 = vmatpush2.bf16.msra.mxu0 0
        %2815 = vmatprep.mubr.bf16.mxu0 0
        %2816 = vmatmul.mubr.bf16.gmra.mxu0 %v2711
        %v2817 = vpop.f32.mrf.mxu0
        %v2818 = vadd.f32 %v2733, %v2817
        %v2819 = vpop.f32.mrf.mxu0
        %v2820 = vpop.f32.mrf.mxu0
        %v2821 = vpop.f32.mrf.mxu0
        %2822 = vdwg.mxu0
        %v2823 = vld [vmem:[%s19] sm:$0x1]
        %v2825 = vlaneseq
        %v2826 = vshrl.u32 %v2825, 7
        %v2827 = vsub.s32 0, %v2826
        %v2828 = vrot.slane %v2823, %v2827
        %v2830 = vmul.f32 %v2828, %v2818
        %v2831 = vadd.f32 %v2605, %v2830
        %2832 = vst.msk [vmem:[%s746] sm:$0xff] %vm1560, %v2831
        %v2833 = vld [vmem:[%s20] sm:$0x1]
        %v2834 = vld [vmem:[%s21] sm:$0x1]
        %v2835 = vsel %vm1560, %v2831, 0.0
        %2836 = vadd.xlane.f32.xlu0 %v2835
        %v2837 = vpop.xlane.xlu0 %2836
        %v2838 = vmul.f32 %v2837, %v1564
        %v2839 = vsub.f32 %v2831, %v2838
        %v2840 = vmul.f32 %v2839, %v2839
        %v2841 = vsel %vm1560, %v2840, 0.0
        %2842 = vadd.xlane.f32.xlu0 %v2841
        %v2843 = vpop.xlane.xlu0 %2842
        %v2844 = vmul.f32 %v2843, %v1564
        %v2845 = vadd.f32 %v2844, 1e-06
        %v2846 = vrsqrt.pop %v2845
        %v2847 = vmul.f32 %v2839, %v2846
        %v2849 = vlaneseq
        %v2850 = vshrl.u32 %v2849, 7
        %v2851 = vsub.s32 0, %v2850
        %v2852 = vrot.slane %v2833, %v2851
        %v2854 = vmul.f32 %v2847, %v2852
        %v2856 = vlaneseq
        %v2857 = vshrl.u32 %v2856, 7
        %v2858 = vsub.s32 0, %v2857
        %v2859 = vrot.slane %v2834, %v2858
        %v2861 = vadd.f32 %v2854, %v2859
        %2862 = vst.msk [vmem:[%s753] sm:$0xff] %vm1560, %v2861
        %s2863 = sand.u32 %s537, 1
        %s2864 = scalar_lea.sflag [#allocation5], %s2863
        %s2865 = sand.u32 %s537, 1
        %s2866 = smul.addr %s2865, 8
        %s2867 = scalar_lea.vmem [#allocation4], %s2866
        %s2868 = sand.u32 %s565, 1
        %s2869 = scalar_lea.sflag [#allocation7], %s2868
        %s2870 = sand.u32 %s565, 1
        %s2871 = smul.addr %s2870, 8
        %s2872 = scalar_lea.vmem [#allocation6], %s2871
        // Predicated region
        $region113: #{tpu_custom_call.1} parent=107 // pred_check
          %p2873 = pneg %p547
        $region114: #{tpu_custom_call.1} parent=107 // pred_check_branch
          %2875 = sbr.rel (%p2873) target = $region116
        $region115: #{tpu_custom_call.1} parent=107 // pred_region
          %s2877 = ssub.s32 128, 128
          %2878 = vsyncadd %s2864, %s2877
          %s2879 = smul.addr %s45, 3
          %s2880 = sadd.s32 %s46, %s2879
          %s2881 = smul.addr %s2880, 128
          %s2882 = scalar_lea.hbm %s22, %s2881
          %s2884 = sshll.u32 %s2867, 4
          %s2885 = int_to_ptr.vmem [resolvable:$true] %s2884
          %2887 = dma.vmem_to_hbm [thread:$0]  %s2885, 128, %s2882, %s2864
        $region116: #{tpu_custom_call.1} parent=107 // pred_fallthru
          _
        // Predicated region
        $region117: #{tpu_custom_call.1} parent=107 // pred_check
          %p2888 = pneg %p575
        $region118: #{tpu_custom_call.1} parent=107 // pred_check_branch
          %2890 = sbr.rel (%p2888) target = $region120
        $region119: #{tpu_custom_call.1} parent=107 // pred_region
          %s2892 = ssub.s32 128, 128
          %2893 = vsyncadd %s2869, %s2892
          %s2894 = smul.addr %s45, 3
          %s2895 = sadd.s32 %s46, %s2894
          %s2896 = smul.addr %s2895, 128
          %s2897 = scalar_lea.hbm %s23, %s2896
          %s2899 = sshll.u32 %s2872, 4
          %s2900 = int_to_ptr.vmem [resolvable:$true] %s2899
          %2902 = dma.vmem_to_hbm [thread:$0]  %s2900, 128, %s2897, %s2869
        $region120: #{tpu_custom_call.1} parent=107 // pred_fallthru
          _
      $region108: #{tpu_custom_call.1} parent=5 // pred_fallthru
        _
      %p2903 = scmp.le.s32.totalorder 2, %s36
      // Predicated region
      $region121: #{tpu_custom_call.1} parent=5 // pred_check
        %p2904 = pneg %p2903
      $region122: #{tpu_custom_call.1} parent=5 // pred_check_branch
        %2906 = sbr.rel (%p2904) target = $region124
      $region123: #{tpu_custom_call.1} parent=5 // pred_region
        %s2907 = ssub.s32 %s36, 2
        // Predicated region
        $region125: #{tpu_custom_call.1} parent=123 // pred_check
          %p2908 = pneg %p553
        $region126: #{tpu_custom_call.1} parent=123 // pred_check_branch
          %2910 = sbr.rel (%p2908) target = $region128
        $region127: #{tpu_custom_call.1} parent=123 // pred_region
          %s2911 = sand.u32 %s538, 1
          %s2912 = scalar_lea.sflag [#allocation5], %s2911
          %s2913 = sand.u32 %s538, 1
          %s2914 = smul.addr %s2913, 8
          %s2915 = scalar_lea.vmem [#allocation4], %s2914
          %2916 = dma.done %s2912, 128
        $region128: #{tpu_custom_call.1} parent=123 // pred_fallthru
          _
        // Predicated region
        $region129: #{tpu_custom_call.1} parent=123 // pred_check
          %p2917 = pneg %p581
        $region130: #{tpu_custom_call.1} parent=123 // pred_check_branch
          %2919 = sbr.rel (%p2917) target = $region132
        $region131: #{tpu_custom_call.1} parent=123 // pred_region
          %s2920 = sand.u32 %s566, 1
          %s2921 = scalar_lea.sflag [#allocation7], %s2920
          %s2922 = sand.u32 %s566, 1
          %s2923 = smul.addr %s2922, 8
          %s2924 = scalar_lea.vmem [#allocation6], %s2923
          %2925 = dma.done %s2921, 128
        $region132: #{tpu_custom_call.1} parent=123 // pred_fallthru
          _
      $region124: #{tpu_custom_call.1} parent=5 // pred_fallthru
        _
    $region6: #{tpu_custom_call.1} parent=1 // loop_footer
      %s40 = sadd.s32 1, %s36
    $region7: #{tpu_custom_call.1} parent=1 // loop_footer_branch
      %35 = sbr.rel target = $region3
    $region8: #{tpu_custom_call.1} parent=1 // loop_exit
      _
    %2926 = vsyncpa [#allocation5], 1
    %s2927 = scalar_lea.sflag [#allocation5], 1
    %2928 = vsyncpa %s2927, 1
    %2929 = vsyncpa [#allocation7], 1
    %s2930 = scalar_lea.sflag [#allocation7], 1
    %2931 = vsyncpa %s2930, 1

</llo_original>
